<compile_context>
chip_gen: v7x
topology: tpu7x:2x2x1
jax: 0.10.0
libtpu: 0.0.40
codegen_flags: <defaults>
</compile_context>

<pallas_src>
import functools

import jax
import jax.numpy as jnp
from jax.experimental import pallas as pl
from jax.experimental.pallas import tpu as pltpu


# -----------------------------------------------------------------------------
# 1. PFN: Linear(16->64) + bias + ReLU + mask + max over points.
#    The 9 augmented features are lane-padded to 16 in the wrapper so the kernel
#    does a single MXU matmul instead of several K=3/4 partial dots.
# -----------------------------------------------------------------------------
def pfn_kernel(feat_ref, mask_ref, w_ref, b_ref, out_ref):
    # feat_ref : (TN, P, 16) f32   masked, zero-padded pillar point features
    # mask_ref : (TN, P)     f32   1.0 for real points, 0.0 for padding
    # w_ref    : (16, 64)    f32
    # b_ref    : (1, 64)     f32
    # out_ref  : (TN, 64)    f32
    TN, P, F = feat_ref.shape
    Cout = out_ref.shape[-1]
    h = jnp.dot(feat_ref[...].reshape(TN * P, F), w_ref[...],
                preferred_element_type=jnp.float32)
    h = jnp.maximum(h + b_ref[...], 0.0).reshape(TN, P, Cout)
    # Re-mask AFTER bias+ReLU so padded points (which would otherwise contribute
    # relu(bias)) cannot win the max (reviewer fix; canonical PFN behaviour).
    h = h * mask_ref[...][:, :, None]
    out_ref[...] = jnp.max(h, axis=1)


# -----------------------------------------------------------------------------
# 2. PointPillarsScatter.
#    Canvas lives in HBM (pl.ANY), channels-last (rows = (nx+8)*(ny+2), C=64) with
#    the conv halo built in.  The kernel zero-fills it with chunked DMAs and then
#    DMAs each pillar's 64-wide feature row to row flat_idx[i].  This is O(N*64)
#    work instead of the previous O(64*N*HW) one-hot matmul.
# -----------------------------------------------------------------------------
def scatter_kernel(idx_ref, feat_ref, canvas_ref, zbuf_ref, sem_ref):
    # idx_ref    : SMEM (N,)            int32  flat (padded) canvas row per pillar
    # feat_ref   : VMEM (N, C)          f32
    # canvas_ref : ANY  (Hp*Wp, C)      f32    output (HBM)
    # zbuf_ref   : VMEM (Wp, C)         f32    zero chunk
    # sem_ref    : DMA semaphore
    wp = zbuf_ref.shape[0]
    n_chunks = canvas_ref.shape[0] // wp
    n_pillars = feat_ref.shape[0]

    zbuf_ref[...] = jnp.zeros_like(zbuf_ref)

    @pl.loop(0, n_chunks)
    def _zero(r):
        cp = pltpu.make_async_copy(zbuf_ref, canvas_ref.at[pl.ds(r * wp, wp)], sem_ref)
        cp.start()
        cp.wait()

    # Per-pillar 256-byte row DMA.  Duplicate coords overwrite (last writer wins)
    # just like the torch indexed assignment; PointPillars coords are unique anyway.
    @pl.loop(0, n_pillars)
    def _scatter(i):
        cp = pltpu.make_async_copy(feat_ref.at[i], canvas_ref.at[idx_ref[i]], sem_ref)
        cp.start()
        cp.wait()


# -----------------------------------------------------------------------------
# 3+4. Synthetic RPN (3x3 conv, 64->64, ReLU) with the three SharedHead 1x1 convs
#      fused into the epilogue.  Row-tiled: each grid step consumes TH canvas rows
#      plus a 2-row halo taken from a second Blocked view of the same canvas
#      (first 2 rows of the next 8-row block), so everything auto-pipelines and is
#      safe to shard across TensorCores.
# -----------------------------------------------------------------------------
def rpn_heads_kernel(xa_ref, xb_ref, wc_ref, bc_ref, wh_ref, bh_ref, out_ref):
    # xa_ref : (TH, Wp, C)  f32   canvas rows [i*TH, i*TH+TH)
    # xb_ref : (8,  Wp, C)  f32   canvas rows [i*TH+TH, i*TH+TH+8)   (first 2 rows used)
    # wc_ref : (9, C, C)    bf16  3x3 conv taps, row-major (dy, dx)
    # bc_ref : (1, C)       f32
    # wh_ref : (C, Ctot)    bf16  concatenated [cls | box | dir] 1x1 weights
    # bh_ref : (1, Ctot)    f32
    # out_ref: (TH*W, Ctot) f32
    TH, Wp, C = xa_ref.shape
    W = Wp - 2
    window = jnp.concatenate([xa_ref[...], xb_ref[0:2]], axis=0)       # (TH+2, Wp, C)

    acc = jnp.zeros((TH * W, C), jnp.float32)
    k = 0
    for dy in range(3):
        for dx in range(3):
            patch = window[dy:dy + TH, dx:dx + W, :].reshape(TH * W, C)
            acc = acc + jnp.dot(patch.astype(jnp.bfloat16), wc_ref[k],
                                preferred_element_type=jnp.float32)
            k += 1
    rpn = jnp.maximum(acc + bc_ref[...], 0.0)                          # (TH*W, C) f32

    # Fused heads: one lane-denser (TH*W, Ctot) output instead of three 2/14/4-wide ones,
    # and the RPN activation never round-trips through HBM.
    out_ref[...] = jnp.dot(rpn.astype(jnp.bfloat16), wh_ref[...],
                           preferred_element_type=jnp.float32) + bh_ref[...]


# -----------------------------------------------------------------------------
# Wrapper
# -----------------------------------------------------------------------------
def _pick_row_tile(h, target=64):
    # Largest multiple-of-8 divisor of h that keeps the per-step VMEM footprint
    # modest (<= `target` rows); demo h=16 -> 8 (grid of 2 steps).
    if h % 8 != 0:
        raise ValueError("grid_size[0] must be a multiple of 8 for the tiled conv")
    cap = max(8, min(target, h // 2 if h > 8 else 8))
    best = 8
    for t in range(8, cap + 1, 8):
        if h % t == 0:
            best = t
    return best


def pointpillars_forward(voxels, num_points_per_voxel, coords, params, *,
                         grid_size, voxel_size, offset):
    nx, ny = grid_size
    vx, vy = voxel_size
    x_offset = vx / 2.0 + offset[0]
    y_offset = vy / 2.0 + offset[1]
    N, P, _ = voxels.shape
    C = 64
    Hp, Wp = nx + 8, ny + 2          # halo rows: 1 top + 7 bottom (8-row alignment), 1 col each side
    HW = nx * ny

    # --- pillar feature augmentation (framework-level, exactly as the PyTorch forward) ---
    npv = num_points_per_voxel.astype(jnp.float32).reshape(N, 1, 1)
    npv_safe = jnp.maximum(npv, 1.0)                                    # guard empty pillars
    xyz = voxels[:, :, :3]
    points_mean = jnp.sum(xyz, axis=1, keepdims=True) / npv_safe
    f_cluster = xyz - points_mean
    cx = voxels[:, :, 0] - (coords[:, 0:1].astype(jnp.float32) * vx + x_offset)
    cy = voxels[:, :, 1] - (coords[:, 1:2].astype(jnp.float32) * vy + y_offset)
    f_center = jnp.stack([cx, cy], axis=-1)
    feats = jnp.concatenate([voxels, f_cluster, f_center], axis=-1)     # (N, P, 9)
    point_ids = jnp.arange(P, dtype=jnp.int32)[None, :]
    mask = (num_points_per_voxel.astype(jnp.int32)[:, None] > point_ids).astype(jnp.float32)
    feats = feats * mask[:, :, None]
    feats = jnp.pad(feats, ((0, 0), (0, 0), (0, 16 - 9)))               # lane-pad K: 9 -> 16
    pfn_w = jnp.pad(params["pfn_w"], ((0, 16 - 9), (0, 0)))             # (16, 64)

    # --- PFN ---
    TN = 512 if (N > 512 and N % 512 == 0) else N
    pfn_out = pl.pallas_call(
        pfn_kernel,
        out_shape=jax.ShapeDtypeStruct((N, C), jnp.float32),
        grid=(N // TN,),
        in_specs=[pl.BlockSpec((TN, P, 16), lambda i: (i, 0, 0)),
                  pl.BlockSpec((TN, P), lambda i: (i, 0)),
                  pl.BlockSpec((16, C), lambda i: (0, 0)),
                  pl.BlockSpec((1, C), lambda i: (0, 0))],
        out_specs=pl.BlockSpec((TN, C), lambda i: (i, 0)),
        compiler_params=pltpu.CompilerParams(dimension_semantics=("parallel",)),
    )(feats, mask, pfn_w, params["pfn_b"])

    # --- Scatter into the halo-padded, channels-last canvas (rows, C) in HBM ---
    flat_idx = ((coords[:, 0].astype(jnp.int32) + 1) * Wp
                + (coords[:, 1].astype(jnp.int32) + 1))                 # (N,) padded row index
    canvas = pl.pallas_call(
        scatter_kernel,
        out_shape=jax.ShapeDtypeStruct((Hp * Wp, C), jnp.float32),
        in_specs=[pl.BlockSpec(memory_space=pltpu.MemorySpace.SMEM),
                  pl.BlockSpec(memory_space=pltpu.MemorySpace.VMEM)],
        out_specs=pl.BlockSpec(memory_space=pl.ANY),
        scratch_shapes=[pltpu.VMEM((Wp, C), jnp.float32),
                        pltpu.SemaphoreType.DMA],
    )(flat_idx, pfn_out)
    canvas3d = canvas.reshape(Hp, Wp, C)                                # free reshape

    # --- RPN 3x3 conv + ReLU with fused heads, row-tiled ---
    TH = _pick_row_tile(nx)
    c_cls = params["cls_w"].shape[1]
    c_box = params["box_w"].shape[1]
    c_dir = params["dir_w"].shape[1]
    Ctot = c_cls + c_box + c_dir
    w_conv = params["rpn_w"].astype(jnp.bfloat16)
    w_head = jnp.concatenate(
        [params["cls_w"], params["box_w"], params["dir_w"]], axis=1).astype(jnp.bfloat16)
    b_head = jnp.concatenate([params["cls_b"], params["box_b"], params["dir_b"]], axis=1)

    fused = pl.pallas_call(
        rpn_heads_kernel,
        out_shape=jax.ShapeDtypeStruct((HW, Ctot), jnp.float32),
        grid=(nx // TH,),
        in_specs=[pl.BlockSpec((TH, Wp, C), lambda i: (i, 0, 0)),
                  pl.BlockSpec((8, Wp, C), lambda i: (i * (TH // 8) + TH // 8, 0, 0)),
                  pl.BlockSpec((9, C, C), lambda i: (0, 0, 0)),
                  pl.BlockSpec((1, C), lambda i: (0, 0)),
                  pl.BlockSpec((C, Ctot), lambda i: (0, 0)),
                  pl.BlockSpec((1, Ctot), lambda i: (0, 0))],
        out_specs=pl.BlockSpec((TH * ny, Ctot), lambda i: (i, 0)),
        compiler_params=pltpu.CompilerParams(
            dimension_semantics=("parallel",),
            vmem_limit_bytes=64 * 1024 * 1024),
    )(canvas3d, canvas3d, w_conv, params["rpn_b"], w_head, b_head)

    cls_f = fused[:, :c_cls]
    box_f = fused[:, c_cls:c_cls + c_box]
    dir_f = fused[:, c_cls + c_box:]

    def to_nchw(flat):
        # (H*W, c) channels-last -> NCHW (1, c, H, W), matching the PyTorch heads output.
        return flat.reshape(nx, ny, -1).transpose(2, 0, 1)[None]

    return {"cls_preds": to_nchw(cls_f),
            "box_preds": to_nchw(box_f),
            "dir_preds": to_nchw(dir_f)}


def init_params(key, num_anchors=2, num_classes=1):
    ks = jax.random.split(key, 8)
    s = 0.1
    return {
        "pfn_w": s * jax.random.normal(ks[0], (9, 64), jnp.float32),
        "pfn_b": s * jax.random.normal(ks[1], (1, 64), jnp.float32),
        "rpn_w": s * jax.random.normal(ks[2], (9, 64, 64), jnp.float32),
        "rpn_b": s * jax.random.normal(ks[3], (1, 64), jnp.float32),
        "cls_w": s * jax.random.normal(ks[4], (64, num_anchors * num_classes), jnp.float32),
        "cls_b": jnp.zeros((1, num_anchors * num_classes), jnp.float32),
        "box_w": s * jax.random.normal(ks[5], (64, num_anchors * 7), jnp.float32),
        "box_b": jnp.zeros((1, num_anchors * 7), jnp.float32),
        "dir_w": s * jax.random.normal(ks[6], (64, num_anchors * 2), jnp.float32),
        "dir_b": jnp.zeros((1, num_anchors * 2), jnp.float32),
    }


if __name__ == "__main__":
    key = jax.random.PRNGKey(0)
    N, P = 32, 8                # pillars, max points per pillar (small demo shapes)
    nx = ny = 16                # grid_size
    voxel_size = (0.16, 0.16)
    offset = (0.0, -1.28)

    k1, k2, k3, k4 = jax.random.split(key, 4)
    voxels = jax.random.normal(k1, (N, P, 4), jnp.float32)
    num_points = jax.random.randint(k2, (N,), 1, P + 1, dtype=jnp.int32)
    lin_idx = jax.random.permutation(k3, nx * ny)[:N]           # unique pillar slots
    coords = jnp.stack([lin_idx // ny, lin_idx % ny], axis=-1).astype(jnp.int32)

    params = init_params(k4)

    fwd = jax.jit(functools.partial(pointpillars_forward,
                                    grid_size=(nx, ny),
                                    voxel_size=voxel_size,
                                    offset=offset))
    preds = fwd(voxels, num_points, coords, params)
    jax.block_until_ready(preds)

    assert preds["cls_preds"].shape == (1, 2, nx, ny)
    assert preds["box_preds"].shape == (1, 14, nx, ny)
    assert preds["dir_preds"].shape == (1, 4, nx, ny)
    print("KERNEL_OK")
</pallas_src>

<mosaic_0001>
module attributes {stable_mosaic.version = 11 : i64} {
  func.func @pfn_kernel(%arg0: i32, %arg1: memref<32x8x16xf32, #tpu.memory_space<vmem>>, %arg2: memref<32x8xf32, #tpu.memory_space<vmem>>, %arg3: memref<16x64xf32, #tpu.memory_space<vmem>>, %arg4: memref<1x64xf32, #tpu.memory_space<vmem>>, %arg5: memref<32x64xf32, #tpu.memory_space<vmem>>) attributes {dimension_semantics = [#tpu.dimension_semantics<parallel>], iteration_bounds = array<i64: 1>, scalar_prefetch = 0 : i64, scratch_operands = 0 : i64, tpu.core_type = #tpu.core_type<tc>, window_params = [{transform_indices = @transform_0, window_bounds = array<i64: 32, 8, 16>}, {transform_indices = @transform_1, window_bounds = array<i64: 32, 8>}, {pipeline_mode = #tpu.pipeline_mode<synchronous>, transform_indices = @transform_2, window_bounds = array<i64: 16, 64>}, {pipeline_mode = #tpu.pipeline_mode<synchronous>, transform_indices = @transform_3, window_bounds = array<i64: 1, 64>}, {transform_indices = @transform_4, window_bounds = array<i64: 32, 64>}]} {
    %c0 = arith.constant 0 : index
    %c0_0 = arith.constant 0 : index
    %c0_1 = arith.constant 0 : index
    %0 = vector.load %arg1[%c0, %c0_0, %c0_1] : memref<32x8x16xf32, #tpu.memory_space<vmem>>, vector<32x8x16xf32>
    %1 = vector.shape_cast %0 : vector<32x8x16xf32> to vector<256x16xf32>
    %c0_2 = arith.constant 0 : index
    %c0_3 = arith.constant 0 : index
    %2 = vector.load %arg3[%c0_2, %c0_3] : memref<16x64xf32, #tpu.memory_space<vmem>>, vector<16x64xf32>
    %cst = arith.constant dense<0.000000e+00> : vector<256x64xf32>
    %3 = tpu.matmul %1, %2, %cst {dimension_numbers = #tpu.dot_dimension_numbers<[1], [0], [0], [1], [0, 0, 1, 1], [], []>} : vector<256x16xf32>, vector<16x64xf32>, vector<256x64xf32> -> vector<256x64xf32>
    %c0_4 = arith.constant 0 : index
    %c0_5 = arith.constant 0 : index
    %4 = vector.load %arg4[%c0_4, %c0_5] : memref<1x64xf32, #tpu.memory_space<vmem>>, vector<1x64xf32>
    %5 = vector.broadcast %4 : vector<1x64xf32> to vector<256x64xf32>
    %6 = arith.addf %3, %5 : vector<256x64xf32>
    %cst_6 = arith.constant 0.000000e+00 : f32
    %7 = vector.broadcast %cst_6 : f32 to vector<256x64xf32>
    %8 = arith.maximumf %6, %7 : vector<256x64xf32>
    %9 = vector.shape_cast %8 : vector<256x64xf32> to vector<32x8x64xf32>
    %c0_7 = arith.constant 0 : index
    %c0_8 = arith.constant 0 : index
    %10 = vector.load %arg2[%c0_7, %c0_8] : memref<32x8xf32, #tpu.memory_space<vmem>>, vector<32x8xf32>
    %11 = vector.shape_cast %10 : vector<32x8xf32> to vector<32x8x1xf32>
    %12 = vector.broadcast %11 : vector<32x8x1xf32> to vector<32x8x64xf32>
    %13 = arith.mulf %9, %12 : vector<32x8x64xf32>
    %cst_9 = arith.constant dense<0xFF800000> : vector<32x64xf32>
    %14 = vector.multi_reduction <maximumf>, %13, %cst_9 [1] : vector<32x8x64xf32> to vector<32x64xf32>
    %c0_10 = arith.constant 0 : index
    %c0_11 = arith.constant 0 : index
    %15 = vector.load %arg5[%c0_10, %c0_11] : memref<32x64xf32, #tpu.memory_space<vmem>>, vector<32x64xf32>
    tpu.vector_store %arg5[%c0_10, %c0_11], %14 {strides = array<i32>} : memref<32x64xf32, #tpu.memory_space<vmem>>, vector<32x64xf32>,
    return
  }
  func.func @transform_0(%arg0: i32) -> (i32, i32, i32) {
    %c0_i32 = arith.constant 0 : i32
    %c0_i32_0 = arith.constant 0 : i32
    %c0_i32_1 = arith.constant 0 : i32
    return %arg0, %c0_i32, %c0_i32_0 : i32, i32, i32
  }
  func.func @transform_1(%arg0: i32) -> (i32, i32) {
    %c0_i32 = arith.constant 0 : i32
    %c0_i32_0 = arith.constant 0 : i32
    return %arg0, %c0_i32 : i32, i32
  }
  func.func @transform_2(%arg0: i32) -> (i32, i32) {
    %c0_i32 = arith.constant 0 : i32
    %c0_i32_0 = arith.constant 0 : i32
    %c0_i32_1 = arith.constant 0 : i32
    return %c0_i32, %c0_i32_0 : i32, i32
  }
  func.func @transform_3(%arg0: i32) -> (i32, i32) {
    %c0_i32 = arith.constant 0 : i32
    %c0_i32_0 = arith.constant 0 : i32
    %c0_i32_1 = arith.constant 0 : i32
    return %c0_i32, %c0_i32_0 : i32, i32
  }
  func.func @transform_4(%arg0: i32) -> (i32, i32) {
    %c0_i32 = arith.constant 0 : i32
    %c0_i32_0 = arith.constant 0 : i32
    return %arg0, %c0_i32 : i32, i32
  }
}

module attributes {stable_mosaic.version = 11 : i64} {
  func.func @scatter_kernel(%arg0: memref<32xi32, #tpu.memory_space<smem>>, %arg1: memref<32x64xf32, #tpu.memory_space<vmem>>, %arg2: memref<432x64xf32, #tpu.memory_space<any>>, %arg3: memref<18x64xf32, #tpu.memory_space<vmem>>, %arg4: memref<!tpu.dma_semaphore, #tpu.memory_space<semaphore_mem>>) attributes {dimension_semantics = [], scalar_prefetch = 0 : i64, scratch_operands = 2 : i64, tpu.core_type = #tpu.core_type<tc>} {
    %cst = arith.constant 0.000000e+00 : f32
    %0 = vector.broadcast %cst : f32 to vector<18x64xf32>
    %c0 = arith.constant 0 : index
    %c0_0 = arith.constant 0 : index
    %1 = vector.load %arg3[%c0, %c0_0] : memref<18x64xf32, #tpu.memory_space<vmem>>, vector<18x64xf32>
    tpu.vector_store %arg3[%c0, %c0_0], %0 {strides = array<i32>} : memref<18x64xf32, #tpu.memory_space<vmem>>, vector<18x64xf32>,
    %c0_i32 = arith.constant 0 : i32
    %c24_i32 = arith.constant 24 : i32
    %2 = arith.addi %c0_i32, %c24_i32 : i32
    %c1_i32 = arith.constant 1 : i32
    scf.for %arg5 = %c0_i32 to %2 step %c1_i32  : i32 {
      %c1_i32_5 = arith.constant 1 : i32
      %4 = arith.muli %arg5, %c1_i32_5 : i32
      %c0_i32_6 = arith.constant 0 : i32
      %5 = arith.addi %c0_i32_6, %4 : i32
      %c18_i32 = arith.constant 18 : i32
      %6 = arith.muli %5, %c18_i32 : i32
      %c0_i32_7 = arith.constant 0 : i32
      %7 = tpu.memref_slice %arg2[%6, %c0_i32_7] : memref<432x64xf32, #tpu.memory_space<any>> -> memref<18x64xf32, #tpu.memory_space<any>>
      tpu.enqueue_dma source(%arg3 : memref<18x64xf32, #tpu.memory_space<vmem>>) target(%7 : memref<18x64xf32, #tpu.memory_space<any>>) target_semaphore(%arg4 : memref<!tpu.dma_semaphore, #tpu.memory_space<semaphore_mem>>)
      %c0_i32_8 = arith.constant 0 : i32
      %8 = tpu.memref_slice %arg2[%6, %c0_i32_8] : memref<432x64xf32, #tpu.memory_space<any>> -> memref<18x64xf32, #tpu.memory_space<any>>
      tpu.wait_dma2 semaphore(%arg4 : memref<!tpu.dma_semaphore, #tpu.memory_space<semaphore_mem>>) src(%arg3 : memref<18x64xf32, #tpu.memory_space<vmem>>) dst(%8 : memref<18x64xf32, #tpu.memory_space<any>>)
    }
    %c24_i32_1 = arith.constant 24 : i32
    %c0_i32_2 = arith.constant 0 : i32
    %c32_i32 = arith.constant 32 : i32
    %3 = arith.addi %c0_i32_2, %c32_i32 : i32
    %c1_i32_3 = arith.constant 1 : i32
    scf.for %arg5 = %c0_i32_2 to %3 step %c1_i32_3  : i32 {
      %c1_i32_5 = arith.constant 1 : i32
      %4 = arith.muli %arg5, %c1_i32_5 : i32
      %c0_i32_6 = arith.constant 0 : i32
      %5 = arith.addi %c0_i32_6, %4 : i32
      %6 = arith.index_cast %5 : i32 to index
      %7 = memref.load %arg0[%6] : memref<32xi32, #tpu.memory_space<smem>>
      %c0_i32_7 = arith.constant 0 : i32
      %8 = tpu.memref_slice %arg1[%5, %c0_i32_7] : memref<32x64xf32, #tpu.memory_space<vmem>> -> memref<1x64xf32, #tpu.memory_space<vmem>>
      %9 = tpu.memref_squeeze %8 : memref<1x64xf32, #tpu.memory_space<vmem>> -> memref<64xf32, #tpu.memory_space<vmem>>
      %c0_i32_8 = arith.constant 0 : i32
      %10 = tpu.memref_slice %arg2[%7, %c0_i32_8] : memref<432x64xf32, #tpu.memory_space<any>> -> memref<1x64xf32, #tpu.memory_space<any>>
      %11 = tpu.memref_squeeze %10 : memref<1x64xf32, #tpu.memory_space<any>> -> memref<64xf32, #tpu.memory_space<any>>
      tpu.enqueue_dma source(%9 : memref<64xf32, #tpu.memory_space<vmem>>) target(%11 : memref<64xf32, #tpu.memory_space<any>>) target_semaphore(%arg4 : memref<!tpu.dma_semaphore, #tpu.memory_space<semaphore_mem>>)
      %c0_i32_9 = arith.constant 0 : i32
      %12 = tpu.memref_slice %arg1[%5, %c0_i32_9] : memref<32x64xf32, #tpu.memory_space<vmem>> -> memref<1x64xf32, #tpu.memory_space<vmem>>
      %13 = tpu.memref_squeeze %12 : memref<1x64xf32, #tpu.memory_space<vmem>> -> memref<64xf32, #tpu.memory_space<vmem>>
      %c0_i32_10 = arith.constant 0 : i32
      %14 = tpu.memref_slice %arg2[%7, %c0_i32_10] : memref<432x64xf32, #tpu.memory_space<any>> -> memref<1x64xf32, #tpu.memory_space<any>>
      %15 = tpu.memref_squeeze %14 : memref<1x64xf32, #tpu.memory_space<any>> -> memref<64xf32, #tpu.memory_space<any>>
      tpu.wait_dma2 semaphore(%arg4 : memref<!tpu.dma_semaphore, #tpu.memory_space<semaphore_mem>>) src(%13 : memref<64xf32, #tpu.memory_space<vmem>>) dst(%15 : memref<64xf32, #tpu.memory_space<any>>)
    }
    %c32_i32_4 = arith.constant 32 : i32
    return
  }
}

module attributes {stable_mosaic.version = 11 : i64} {
  func.func @rpn_heads_kernel(%arg0: i32, %arg1: memref<8x18x64xf32, #tpu.memory_space<vmem>>, %arg2: memref<8x18x64xf32, #tpu.memory_space<vmem>>, %arg3: memref<9x64x64xbf16, #tpu.memory_space<vmem>>, %arg4: memref<1x64xf32, #tpu.memory_space<vmem>>, %arg5: memref<64x20xbf16, #tpu.memory_space<vmem>>, %arg6: memref<1x20xf32, #tpu.memory_space<vmem>>, %arg7: memref<128x20xf32, #tpu.memory_space<vmem>>) attributes {dimension_semantics = [#tpu.dimension_semantics<parallel>], iteration_bounds = array<i64: 2>, scalar_prefetch = 0 : i64, scratch_operands = 0 : i64, tpu.core_type = #tpu.core_type<tc>, window_params = [{transform_indices = @transform_0, window_bounds = array<i64: 8, 18, 64>}, {transform_indices = @transform_1, window_bounds = array<i64: 8, 18, 64>}, {pipeline_mode = #tpu.pipeline_mode<synchronous>, transform_indices = @transform_2, window_bounds = array<i64: 9, 64, 64>}, {pipeline_mode = #tpu.pipeline_mode<synchronous>, transform_indices = @transform_3, window_bounds = array<i64: 1, 64>}, {pipeline_mode = #tpu.pipeline_mode<synchronous>, transform_indices = @transform_4, window_bounds = array<i64: 64, 20>}, {pipeline_mode = #tpu.pipeline_mode<synchronous>, transform_indices = @transform_5, window_bounds = array<i64: 1, 20>}, {transform_indices = @transform_6, window_bounds = array<i64: 128, 20>}]} {
    %c0 = arith.constant 0 : index
    %c0_0 = arith.constant 0 : index
    %c0_1 = arith.constant 0 : index
    %0 = vector.load %arg1[%c0, %c0_0, %c0_1] : memref<8x18x64xf32, #tpu.memory_space<vmem>>, vector<8x18x64xf32>
    %c0_2 = arith.constant 0 : index
    %c0_3 = arith.constant 0 : index
    %c0_4 = arith.constant 0 : index
    %1 = vector.load %arg2[%c0_2, %c0_3, %c0_4] : memref<8x18x64xf32, #tpu.memory_space<vmem>>, vector<2x18x64xf32>
    %2 = tpu.concatenate %0, %1 in 0 : vector<8x18x64xf32>, vector<2x18x64xf32> -> vector<10x18x64xf32>
    %cst = arith.constant 0.000000e+00 : f32
    %3 = vector.broadcast %cst : f32 to vector<128x64xf32>
    %4 = vector.extract_strided_slice %2 {offsets = [0, 0, 0], sizes = [8, 16, 64], strides = [1, 1, 1]} : vector<10x18x64xf32> to vector<8x16x64xf32>
    %5 = vector.shape_cast %4 : vector<8x16x64xf32> to vector<128x64xf32>
    %6 = arith.truncf %5 : vector<128x64xf32> to vector<128x64xbf16>
    %c0_5 = arith.constant 0 : index
    %c0_6 = arith.constant 0 : index
    %c0_7 = arith.constant 0 : index
    %7 = vector.load %arg3[%c0_5, %c0_6, %c0_7] : memref<9x64x64xbf16, #tpu.memory_space<vmem>>, vector<1x64x64xbf16>
    %8 = vector.shape_cast %7 : vector<1x64x64xbf16> to vector<64x64xbf16>
    %cst_8 = arith.constant dense<0.000000e+00> : vector<128x64xf32>
    %9 = tpu.matmul %6, %8, %cst_8 {dimension_numbers = #tpu.dot_dimension_numbers<[1], [0], [0], [1], [0, 0, 1, 1], [], []>} : vector<128x64xbf16>, vector<64x64xbf16>, vector<128x64xf32> -> vector<128x64xf32>
    %10 = arith.addf %3, %9 : vector<128x64xf32>
    %11 = vector.extract_strided_slice %2 {offsets = [0, 1, 0], sizes = [8, 16, 64], strides = [1, 1, 1]} : vector<10x18x64xf32> to vector<8x16x64xf32>
    %12 = vector.shape_cast %11 : vector<8x16x64xf32> to vector<128x64xf32>
    %13 = arith.truncf %12 : vector<128x64xf32> to vector<128x64xbf16>
    %c1 = arith.constant 1 : index
    %c0_9 = arith.constant 0 : index
    %c0_10 = arith.constant 0 : index
    %14 = vector.load %arg3[%c1, %c0_9, %c0_10] : memref<9x64x64xbf16, #tpu.memory_space<vmem>>, vector<1x64x64xbf16>
    %15 = vector.shape_cast %14 : vector<1x64x64xbf16> to vector<64x64xbf16>
    %cst_11 = arith.constant dense<0.000000e+00> : vector<128x64xf32>
    %16 = tpu.matmul %13, %15, %cst_11 {dimension_numbers = #tpu.dot_dimension_numbers<[1], [0], [0], [1], [0, 0, 1, 1], [], []>} : vector<128x64xbf16>, vector<64x64xbf16>, vector<128x64xf32> -> vector<128x64xf32>
    %17 = arith.addf %10, %16 : vector<128x64xf32>
    %18 = vector.extract_strided_slice %2 {offsets = [0, 2, 0], sizes = [8, 16, 64], strides = [1, 1, 1]} : vector<10x18x64xf32> to vector<8x16x64xf32>
    %19 = vector.shape_cast %18 : vector<8x16x64xf32> to vector<128x64xf32>
    %20 = arith.truncf %19 : vector<128x64xf32> to vector<128x64xbf16>
    %c2 = arith.constant 2 : index
    %c0_12 = arith.constant 0 : index
    %c0_13 = arith.constant 0 : index
    %21 = vector.load %arg3[%c2, %c0_12, %c0_13] : memref<9x64x64xbf16, #tpu.memory_space<vmem>>, vector<1x64x64xbf16>
    %22 = vector.shape_cast %21 : vector<1x64x64xbf16> to vector<64x64xbf16>
    %cst_14 = arith.constant dense<0.000000e+00> : vector<128x64xf32>
    %23 = tpu.matmul %20, %22, %cst_14 {dimension_numbers = #tpu.dot_dimension_numbers<[1], [0], [0], [1], [0, 0, 1, 1], [], []>} : vector<128x64xbf16>, vector<64x64xbf16>, vector<128x64xf32> -> vector<128x64xf32>
    %24 = arith.addf %17, %23 : vector<128x64xf32>
    %25 = vector.extract_strided_slice %2 {offsets = [1, 0, 0], sizes = [8, 16, 64], strides = [1, 1, 1]} : vector<10x18x64xf32> to vector<8x16x64xf32>
    %26 = vector.shape_cast %25 : vector<8x16x64xf32> to vector<128x64xf32>
    %27 = arith.truncf %26 : vector<128x64xf32> to vector<128x64xbf16>
    %c3 = arith.constant 3 : index
    %c0_15 = arith.constant 0 : index
    %c0_16 = arith.constant 0 : index
    %28 = vector.load %arg3[%c3, %c0_15, %c0_16] : memref<9x64x64xbf16, #tpu.memory_space<vmem>>, vector<1x64x64xbf16>
    %29 = vector.shape_cast %28 : vector<1x64x64xbf16> to vector<64x64xbf16>
    %cst_17 = arith.constant dense<0.000000e+00> : vector<128x64xf32>
    %30 = tpu.matmul %27, %29, %cst_17 {dimension_numbers = #tpu.dot_dimension_numbers<[1], [0], [0], [1], [0, 0, 1, 1], [], []>} : vector<128x64xbf16>, vector<64x64xbf16>, vector<128x64xf32> -> vector<128x64xf32>
    %31 = arith.addf %24, %30 : vector<128x64xf32>
    %32 = vector.extract_strided_slice %2 {offsets = [1, 1, 0], sizes = [8, 16, 64], strides = [1, 1, 1]} : vector<10x18x64xf32> to vector<8x16x64xf32>
    %33 = vector.shape_cast %32 : vector<8x16x64xf32> to vector<128x64xf32>
    %34 = arith.truncf %33 : vector<128x64xf32> to vector<128x64xbf16>
    %c4 = arith.constant 4 : index
    %c0_18 = arith.constant 0 : index
    %c0_19 = arith.constant 0 : index
    %35 = vector.load %arg3[%c4, %c0_18, %c0_19] : memref<9x64x64xbf16, #tpu.memory_space<vmem>>, vector<1x64x64xbf16>
    %36 = vector.shape_cast %35 : vector<1x64x64xbf16> to vector<64x64xbf16>
    %cst_20 = arith.constant dense<0.000000e+00> : vector<128x64xf32>
    %37 = tpu.matmul %34, %36, %cst_20 {dimension_numbers = #tpu.dot_dimension_numbers<[1], [0], [0], [1], [0, 0, 1, 1], [], []>} : vector<128x64xbf16>, vector<64x64xbf16>, vector<128x64xf32> -> vector<128x64xf32>
    %38 = arith.addf %31, %37 : vector<128x64xf32>
    %39 = vector.extract_strided_slice %2 {offsets = [1, 2, 0], sizes = [8, 16, 64], strides = [1, 1, 1]} : vector<10x18x64xf32> to vector<8x16x64xf32>
    %40 = vector.shape_cast %39 : vector<8x16x64xf32> to vector<128x64xf32>
    %41 = arith.truncf %40 : vector<128x64xf32> to vector<128x64xbf16>
    %c5 = arith.constant 5 : index
    %c0_21 = arith.constant 0 : index
    %c0_22 = arith.constant 0 : index
    %42 = vector.load %arg3[%c5, %c0_21, %c0_22] : memref<9x64x64xbf16, #tpu.memory_space<vmem>>, vector<1x64x64xbf16>
    %43 = vector.shape_cast %42 : vector<1x64x64xbf16> to vector<64x64xbf16>
    %cst_23 = arith.constant dense<0.000000e+00> : vector<128x64xf32>
    %44 = tpu.matmul %41, %43, %cst_23 {dimension_numbers = #tpu.dot_dimension_numbers<[1], [0], [0], [1], [0, 0, 1, 1], [], []>} : vector<128x64xbf16>, vector<64x64xbf16>, vector<128x64xf32> -> vector<128x64xf32>
    %45 = arith.addf %38, %44 : vector<128x64xf32>
    %46 = vector.extract_strided_slice %2 {offsets = [2, 0, 0], sizes = [8, 16, 64], strides = [1, 1, 1]} : vector<10x18x64xf32> to vector<8x16x64xf32>
    %47 = vector.shape_cast %46 : vector<8x16x64xf32> to vector<128x64xf32>
    %48 = arith.truncf %47 : vector<128x64xf32> to vector<128x64xbf16>
    %c6 = arith.constant 6 : index
    %c0_24 = arith.constant 0 : index
    %c0_25 = arith.constant 0 : index
    %49 = vector.load %arg3[%c6, %c0_24, %c0_25] : memref<9x64x64xbf16, #tpu.memory_space<vmem>>, vector<1x64x64xbf16>
    %50 = vector.shape_cast %49 : vector<1x64x64xbf16> to vector<64x64xbf16>
    %cst_26 = arith.constant dense<0.000000e+00> : vector<128x64xf32>
    %51 = tpu.matmul %48, %50, %cst_26 {dimension_numbers = #tpu.dot_dimension_numbers<[1], [0], [0], [1], [0, 0, 1, 1], [], []>} : vector<128x64xbf16>, vector<64x64xbf16>, vector<128x64xf32> -> vector<128x64xf32>
    %52 = arith.addf %45, %51 : vector<128x64xf32>
    %53 = vector.extract_strided_slice %2 {offsets = [2, 1, 0], sizes = [8, 16, 64], strides = [1, 1, 1]} : vector<10x18x64xf32> to vector<8x16x64xf32>
    %54 = vector.shape_cast %53 : vector<8x16x64xf32> to vector<128x64xf32>
    %55 = arith.truncf %54 : vector<128x64xf32> to vector<128x64xbf16>
    %c7 = arith.constant 7 : index
    %c0_27 = arith.constant 0 : index
    %c0_28 = arith.constant 0 : index
    %56 = vector.load %arg3[%c7, %c0_27, %c0_28] : memref<9x64x64xbf16, #tpu.memory_space<vmem>>, vector<1x64x64xbf16>
    %57 = vector.shape_cast %56 : vector<1x64x64xbf16> to vector<64x64xbf16>
    %cst_29 = arith.constant dense<0.000000e+00> : vector<128x64xf32>
    %58 = tpu.matmul %55, %57, %cst_29 {dimension_numbers = #tpu.dot_dimension_numbers<[1], [0], [0], [1], [0, 0, 1, 1], [], []>} : vector<128x64xbf16>, vector<64x64xbf16>, vector<128x64xf32> -> vector<128x64xf32>
    %59 = arith.addf %52, %58 : vector<128x64xf32>
    %60 = vector.extract_strided_slice %2 {offsets = [2, 2, 0], sizes = [8, 16, 64], strides = [1, 1, 1]} : vector<10x18x64xf32> to vector<8x16x64xf32>
    %61 = vector.shape_cast %60 : vector<8x16x64xf32> to vector<128x64xf32>
    %62 = arith.truncf %61 : vector<128x64xf32> to vector<128x64xbf16>
    %c8 = arith.constant 8 : index
    %c0_30 = arith.constant 0 : index
    %c0_31 = arith.constant 0 : index
    %63 = vector.load %arg3[%c8, %c0_30, %c0_31] : memref<9x64x64xbf16, #tpu.memory_space<vmem>>, vector<1x64x64xbf16>
    %64 = vector.shape_cast %63 : vector<1x64x64xbf16> to vector<64x64xbf16>
    %cst_32 = arith.constant dense<0.000000e+00> : vector<128x64xf32>
    %65 = tpu.matmul %62, %64, %cst_32 {dimension_numbers = #tpu.dot_dimension_numbers<[1], [0], [0], [1], [0, 0, 1, 1], [], []>} : vector<128x64xbf16>, vector<64x64xbf16>, vector<128x64xf32> -> vector<128x64xf32>
    %66 = arith.addf %59, %65 : vector<128x64xf32>
    %c0_33 = arith.constant 0 : index
    %c0_34 = arith.constant 0 : index
    %67 = vector.load %arg4[%c0_33, %c0_34] : memref<1x64xf32, #tpu.memory_space<vmem>>, vector<1x64xf32>
    %68 = vector.broadcast %67 : vector<1x64xf32> to vector<128x64xf32>
    %69 = arith.addf %66, %68 : vector<128x64xf32>
    %cst_35 = arith.constant 0.000000e+00 : f32
    %70 = vector.broadcast %cst_35 : f32 to vector<128x64xf32>
    %71 = arith.maximumf %69, %70 : vector<128x64xf32>
    %72 = arith.truncf %71 : vector<128x64xf32> to vector<128x64xbf16>
    %c0_36 = arith.constant 0 : index
    %c0_37 = arith.constant 0 : index
    %73 = vector.load %arg5[%c0_36, %c0_37] : memref<64x20xbf16, #tpu.memory_space<vmem>>, vector<64x20xbf16>
    %cst_38 = arith.constant dense<0.000000e+00> : vector<128x20xf32>
    %74 = tpu.matmul %72, %73, %cst_38 {dimension_numbers = #tpu.dot_dimension_numbers<[1], [0], [0], [1], [0, 0, 1, 1], [], []>} : vector<128x64xbf16>, vector<64x20xbf16>, vector<128x20xf32> -> vector<128x20xf32>
    %c0_39 = arith.constant 0 : index
    %c0_40 = arith.constant 0 : index
    %75 = vector.load %arg6[%c0_39, %c0_40] : memref<1x20xf32, #tpu.memory_space<vmem>>, vector<1x20xf32>
    %76 = vector.broadcast %75 : vector<1x20xf32> to vector<128x20xf32>
    %77 = arith.addf %74, %76 : vector<128x20xf32>
    %c0_41 = arith.constant 0 : index
    %c0_42 = arith.constant 0 : index
    %78 = vector.load %arg7[%c0_41, %c0_42] : memref<128x20xf32, #tpu.memory_space<vmem>>, vector<128x20xf32>
    tpu.vector_store %arg7[%c0_41, %c0_42], %77 {strides = array<i32>} : memref<128x20xf32, #tpu.memory_space<vmem>>, vector<128x20xf32>,
    return
  }
  func.func @transform_0(%arg0: i32) -> (i32, i32, i32) {
    %c0_i32 = arith.constant 0 : i32
    %c0_i32_0 = arith.constant 0 : i32
    %c0_i32_1 = arith.constant 0 : i32
    return %arg0, %c0_i32, %c0_i32_0 : i32, i32, i32
  }
  func.func @transform_1(%arg0: i32) -> (i32, i32, i32) {
    %c1_i32 = arith.constant 1 : i32
    %0 = arith.muli %arg0, %c1_i32 : i32
    %c1_i32_0 = arith.constant 1 : i32
    %1 = arith.addi %0, %c1_i32_0 : i32
    %c0_i32 = arith.constant 0 : i32
    %c0_i32_1 = arith.constant 0 : i32
    %c0_i32_2 = arith.constant 0 : i32
    return %1, %c0_i32, %c0_i32_1 : i32, i32, i32
  }
  func.func @transform_2(%arg0: i32) -> (i32, i32, i32) {
    %c0_i32 = arith.constant 0 : i32
    %c0_i32_0 = arith.constant 0 : i32
    %c0_i32_1 = arith.constant 0 : i32
    %c0_i32_2 = arith.constant 0 : i32
    return %c0_i32, %c0_i32_0, %c0_i32_1 : i32, i32, i32
  }
  func.func @transform_3(%arg0: i32) -> (i32, i32) {
    %c0_i32 = arith.constant 0 : i32
    %c0_i32_0 = arith.constant 0 : i32
    %c0_i32_1 = arith.constant 0 : i32
    return %c0_i32, %c0_i32_0 : i32, i32
  }
  func.func @transform_4(%arg0: i32) -> (i32, i32) {
    %c0_i32 = arith.constant 0 : i32
    %c0_i32_0 = arith.constant 0 : i32
    %c0_i32_1 = arith.constant 0 : i32
    return %c0_i32, %c0_i32_0 : i32, i32
  }
  func.func @transform_5(%arg0: i32) -> (i32, i32) {
    %c0_i32 = arith.constant 0 : i32
    %c0_i32_0 = arith.constant 0 : i32
    %c0_i32_1 = arith.constant 0 : i32
    return %c0_i32, %c0_i32_0 : i32, i32
  }
  func.func @transform_6(%arg0: i32) -> (i32, i32) {
    %c0_i32 = arith.constant 0 : i32
    %c0_i32_0 = arith.constant 0 : i32
    return %arg0, %c0_i32 : i32, i32
  }
}

</mosaic_0001>

<llo_original>
// kernel: pointpillars_forward.4
$region0: #{pointpillars_forward.4}
  #allocation0 [shape = 'u32[]', space=smem, size = 0x4, offset = 0x4, fixed_abs, tag = 'smem constant byte address 0x4 - core index']
  #allocation1 [shape = 'u32[144,128]{1,0:T(1,128)}', space=vmem, size = 0x12000, scoped, tag = 'internal scratch']
  #allocation2 [shape = 'f32[18,64]{1,0:T(8,128)}', space=vmem, size = 0x3000, scoped, tag = 'scratch operand']
  #allocation3 [shape = 's32[1]{0}', space=sflag, size = 0x4, scoped, tag = 'scratch operand']
  #allocation6 [shape = 's32[]', space=sflag, size = 0x4, offset = 0, fixed_abs, tag = 'sflag constant byte address 0x0 - dummy sync flag']
  #allocation7 [shape = 's32[]', space=sflag, size = 0x4, offset = 0, fixed_abs, tag = 'sflag constant byte address 0x0 - dummy sync flag']
  %s0 = inlined_call_operand.vmem [shape: s32[32], index: 0, kind: input, shape index: {}]
  %s1 = inlined_call_operand.vmem [shape: f32[32,64], index: 1, kind: input, shape index: {}]
  %s2 = inlined_call_operand.vmem [shape: f32[432,64], index: 2, kind: output, shape index: {}]
  %s3 = sld [smem:[#allocation0]]
  $region95: #{pointpillars_forward.4} parent=0
    _
  %s5 = ssub.s32 1, %s3
  %s6 = scalar_select 0, %s5, %s3
  $region1: #{pointpillars_forward.4} parent=0
    #allocation4 [shape = 'u8[512]{0}', space=smem, size = 0x200, scoped, tag = 'input window, operand 0, single buffered']
    #allocation5 [shape = 's32[1]{0}', space=sflag, size = 0x4, scoped, tag = 'scoped memory for pointpillars_forward.4']
    %7 = vsyncpa [#allocation5], 0
    // Predicated region
    $region2: #{pointpillars_forward.4} parent=1 // pred_check
      _
    $region3: #{pointpillars_forward.4} parent=1 // pred_check_branch
      %9 = sbr.rel (0) target = $region5
    $region4: #{pointpillars_forward.4} parent=1 // pred_region
      %s11 = ssub.s32 16, 16
      %12 = vsyncadd [#allocation5], %s11
      %s14 = sshll.u32 %s0, 4
      %s15 = int_to_ptr.vmem [resolvable:$true] %s14
      %17 = dma.vmem_to_smem %s15, 16, [#allocation4], [#allocation5]
    $region5: #{pointpillars_forward.4} parent=1 // pred_fallthru
      _
    // Predicated region
    $region6: #{pointpillars_forward.4} parent=1 // pred_check
      _
    $region7: #{pointpillars_forward.4} parent=1 // pred_check_branch
      %19 = sbr.rel (0) target = $region9
    $region8: #{pointpillars_forward.4} parent=1 // pred_region
      _
    $region9: #{pointpillars_forward.4} parent=1 // pred_fallthru
      _
    // Predicated region
    $region10: #{pointpillars_forward.4} parent=1 // pred_check
      _
    $region11: #{pointpillars_forward.4} parent=1 // pred_check_branch
      %21 = sbr.rel (0) target = $region13
    $region12: #{pointpillars_forward.4} parent=1 // pred_region
      %22 = dma.done [#allocation5], 16
    $region13: #{pointpillars_forward.4} parent=1 // pred_fallthru
      _
    %23 = sfence
    %vm24 = vcmask 523264
    %25 = vst.msk [vmem:[#allocation2] sm:$0xff] %vm24, 0.0
    %26 = vst.msk [vmem:[#allocation2 + $0x8] sm:$0xff] %vm24, 0.0
    %vm27 = vcmask 517120
    %28 = vst.msk [vmem:[#allocation2 + $0x10] sm:$0x3] %vm27, 0.0
    loop: start=0, step=1, limit=24
    $region14: #{pointpillars_forward.4} parent=1 // loop_pre_header
      _
    $region15: #{pointpillars_forward.4} parent=1 // loop_header
      %s30 = sphi 0, %s34
      %p31 = scmp.ge.s32.totalorder %s30, 24
    $region16: #{pointpillars_forward.4} parent=1 // loop_header_branch
      %33 = sbr.rel (%p31) target = $region20
    $region17: #{pointpillars_forward.4} parent=1 // loop_body
      %s35 = smul.u32 %s30, 18
      %s36 = scalar_lea.vmem %s2, %s35
      %p38 = scmp.lt.u32.totalorder 18, 8
      %p39 = pneg %p38
      // Predicated region
      $region21: #{pointpillars_forward.4} parent=17 // pred_check
        _
      $region22: #{pointpillars_forward.4} parent=17 // pred_check_branch
        %41 = sbr.rel (%p38) target = $region24
      $region23: #{pointpillars_forward.4} parent=17 // pred_region
        %s56 = sand.u32 18, 7
        %p57 = scmp.eq.s32.totalorder %s56, 0
        %p58 = pneg %p57
        // Predicated region
        $region36: #{pointpillars_forward.4} parent=23 // pred_check
          _
        $region37: #{pointpillars_forward.4} parent=23 // pred_check_branch
          %60 = sbr.rel (%p57) target = $region39
        $region38: #{pointpillars_forward.4} parent=23 // pred_region
          %s61 = sand.u32 18, 7
          %s62 = ssub.s32 18, %s61
          %s63 = scalar_lea.vmem [#allocation2], %s62
          %s64 = ssub.s32 18, %s61
          %s65 = scalar_lea.vmem %s36, %s64
          loop: start=0, step=1, limit=1
          $region40: #{pointpillars_forward.4} parent=38 // loop_pre_header
            _
          $region41: #{pointpillars_forward.4} parent=38 // loop_header
            %s67 = sphi 0, %s71
            %p68 = scmp.ge.s32.totalorder %s67, 1
            %s72 = sphi [#allocation2], [#allocation2]
            %s73 = sphi %s36, %s36
          $region42: #{pointpillars_forward.4} parent=38 // loop_header_branch
            %70 = sbr.rel (%p68) target = $region46
          $region43: #{pointpillars_forward.4} parent=38 // loop_body
            %v74 = vld [vmem:[%s72] sm:$0xff]
            %75 = vst [vmem:[%s73] sm:$0xff] %v74
            %v76 = vld [vmem:[%s72 + $0x8] sm:$0xff]
            %77 = vst [vmem:[%s73 + $0x8] sm:$0xff] %v76
          $region44: #{pointpillars_forward.4} parent=38 // loop_footer
            %s71 = sadd.s32 1, %s67
          $region45: #{pointpillars_forward.4} parent=38 // loop_footer_branch
            %66 = sbr.rel target = $region41
          $region46: #{pointpillars_forward.4} parent=38 // loop_exit
            _
          %s78 = sshllo.u32 0, %s61
          loop: start=0, step=1, limit=1
          $region47: #{pointpillars_forward.4} parent=38 // loop_pre_header
            _
          $region48: #{pointpillars_forward.4} parent=38 // loop_header
            %s80 = sphi 0, %s84
            %p81 = scmp.ge.s32.totalorder %s80, 1
            %s85 = sphi %s63, %s63
            %s86 = sphi %s65, %s65
          $region49: #{pointpillars_forward.4} parent=38 // loop_header_branch
            %83 = sbr.rel (%p81) target = $region53
          $region50: #{pointpillars_forward.4} parent=38 // loop_body
            %v87 = vld [vmem:[%s85] sm:%s78]
            %88 = vst [vmem:[%s86] sm:%s78] %v87
          $region51: #{pointpillars_forward.4} parent=38 // loop_footer
            %s84 = sadd.s32 1, %s80
          $region52: #{pointpillars_forward.4} parent=38 // loop_footer_branch
            %79 = sbr.rel target = $region48
          $region53: #{pointpillars_forward.4} parent=38 // loop_exit
            _
        $region39: #{pointpillars_forward.4} parent=23 // pred_fallthru
          _
      $region24: #{pointpillars_forward.4} parent=17 // pred_fallthru
        _
      // Predicated region
      $region25: #{pointpillars_forward.4} parent=17 // pred_check
        %p42 = pneg %p38
      $region26: #{pointpillars_forward.4} parent=17 // pred_check_branch
        %44 = sbr.rel (%p42) target = $region28
      $region27: #{pointpillars_forward.4} parent=17 // pred_region
        %s45 = sshllo.u32 0, 18
        loop: start=0, step=1, limit=1
        $region29: #{pointpillars_forward.4} parent=27 // loop_pre_header
          _
        $region30: #{pointpillars_forward.4} parent=27 // loop_header
          %s47 = sphi 0, %s51
          %p48 = scmp.ge.s32.totalorder %s47, 1
          %s52 = sphi [#allocation2], [#allocation2]
          %s53 = sphi %s36, %s36
        $region31: #{pointpillars_forward.4} parent=27 // loop_header_branch
          %50 = sbr.rel (%p48) target = $region35
        $region32: #{pointpillars_forward.4} parent=27 // loop_body
          %v54 = vld [vmem:[%s52] sm:%s45]
          %55 = vst [vmem:[%s53] sm:%s45] %v54
        $region33: #{pointpillars_forward.4} parent=27 // loop_footer
          %s51 = sadd.s32 1, %s47
        $region34: #{pointpillars_forward.4} parent=27 // loop_footer_branch
          %46 = sbr.rel target = $region30
        $region35: #{pointpillars_forward.4} parent=27 // loop_exit
          _
      $region28: #{pointpillars_forward.4} parent=17 // pred_fallthru
        _
      // Predicated region
      $region54: #{pointpillars_forward.4} parent=17 // pred_check
        _
      $region55: #{pointpillars_forward.4} parent=17 // pred_check_branch
        %91 = sbr.rel (0) target = $region57
      $region56: #{pointpillars_forward.4} parent=17 // pred_region
        %92 = vsyncadd [#allocation3], 288
      $region57: #{pointpillars_forward.4} parent=17 // pred_fallthru
        _
      %s93 = smul.u32 18, 1
      %s94 = sshll.u32 %s93, 4
      %95 = dma.done [#allocation3], %s94
    $region18: #{pointpillars_forward.4} parent=1 // loop_footer
      %s34 = sadd.s32 1, %s30
    $region19: #{pointpillars_forward.4} parent=1 // loop_footer_branch
      %29 = sbr.rel target = $region15
    $region20: #{pointpillars_forward.4} parent=1 // loop_exit
      _
    loop: start=0, step=1, limit=32
    $region58: #{pointpillars_forward.4} parent=1 // loop_pre_header
      _
    $region59: #{pointpillars_forward.4} parent=1 // loop_header
      %s97 = sphi 0, %s101
      %p98 = scmp.ge.s32.totalorder %s97, 32
    $region60: #{pointpillars_forward.4} parent=1 // loop_header_branch
      %100 = sbr.rel (%p98) target = $region64
    $region61: #{pointpillars_forward.4} parent=1 // loop_body
      %s102 = sld [smem:[#allocation4 + %s97]]
      %s103 = scalar_lea.vmem %s1, %s97
      %s104 = scalar_lea.vmem %s2, %s102
      %p106 = scmp.lt.u32.totalorder 1, 8
      %p107 = pneg %p106
      // Predicated region
      $region65: #{pointpillars_forward.4} parent=61 // pred_check
        _
      $region66: #{pointpillars_forward.4} parent=61 // pred_check_branch
        %109 = sbr.rel (%p106) target = $region68
      $region67: #{pointpillars_forward.4} parent=61 // pred_region
        %s124 = sand.u32 1, 7
        %p125 = scmp.eq.s32.totalorder %s124, 0
        %p126 = pneg %p125
        // Predicated region
        $region80: #{pointpillars_forward.4} parent=67 // pred_check
          _
        $region81: #{pointpillars_forward.4} parent=67 // pred_check_branch
          %128 = sbr.rel (%p125) target = $region83
        $region82: #{pointpillars_forward.4} parent=67 // pred_region
          %s129 = sand.u32 1, 7
          %s130 = ssub.s32 1, %s129
          %s131 = scalar_lea.vmem %s103, %s130
          %s132 = ssub.s32 1, %s129
          %s133 = scalar_lea.vmem %s104, %s132
          %s134 = sshllo.u32 0, %s129
          loop: start=0, step=1, limit=1
          $region84: #{pointpillars_forward.4} parent=82 // loop_pre_header
            _
          $region85: #{pointpillars_forward.4} parent=82 // loop_header
            %s136 = sphi 0, %s140
            %p137 = scmp.ge.s32.totalorder %s136, 1
            %s141 = sphi %s131, %s131
            %s142 = sphi %s133, %s133
          $region86: #{pointpillars_forward.4} parent=82 // loop_header_branch
            %139 = sbr.rel (%p137) target = $region90
          $region87: #{pointpillars_forward.4} parent=82 // loop_body
            %v143 = vld [vmem:[%s141] sm:%s134]
            %144 = vst [vmem:[%s142] sm:%s134] %v143
          $region88: #{pointpillars_forward.4} parent=82 // loop_footer
            %s140 = sadd.s32 1, %s136
          $region89: #{pointpillars_forward.4} parent=82 // loop_footer_branch
            %135 = sbr.rel target = $region85
          $region90: #{pointpillars_forward.4} parent=82 // loop_exit
            _
        $region83: #{pointpillars_forward.4} parent=67 // pred_fallthru
          _
      $region68: #{pointpillars_forward.4} parent=61 // pred_fallthru
        _
      // Predicated region
      $region69: #{pointpillars_forward.4} parent=61 // pred_check
        %p110 = pneg %p106
      $region70: #{pointpillars_forward.4} parent=61 // pred_check_branch
        %112 = sbr.rel (%p110) target = $region72
      $region71: #{pointpillars_forward.4} parent=61 // pred_region
        %s113 = sshllo.u32 0, 1
        loop: start=0, step=1, limit=1
        $region73: #{pointpillars_forward.4} parent=71 // loop_pre_header
          _
        $region74: #{pointpillars_forward.4} parent=71 // loop_header
          %s115 = sphi 0, %s119
          %p116 = scmp.ge.s32.totalorder %s115, 1
          %s120 = sphi %s103, %s103
          %s121 = sphi %s104, %s104
        $region75: #{pointpillars_forward.4} parent=71 // loop_header_branch
          %118 = sbr.rel (%p116) target = $region79
        $region76: #{pointpillars_forward.4} parent=71 // loop_body
          %v122 = vld [vmem:[%s120] sm:%s113]
          %123 = vst [vmem:[%s121] sm:%s113] %v122
        $region77: #{pointpillars_forward.4} parent=71 // loop_footer
          %s119 = sadd.s32 1, %s115
        $region78: #{pointpillars_forward.4} parent=71 // loop_footer_branch
          %114 = sbr.rel target = $region74
        $region79: #{pointpillars_forward.4} parent=71 // loop_exit
          _
      $region72: #{pointpillars_forward.4} parent=61 // pred_fallthru
        _
      // Predicated region
      $region91: #{pointpillars_forward.4} parent=61 // pred_check
        _
      $region92: #{pointpillars_forward.4} parent=61 // pred_check_branch
        %147 = sbr.rel (0) target = $region94
      $region93: #{pointpillars_forward.4} parent=61 // pred_region
        %148 = vsyncadd [#allocation3], 16
      $region94: #{pointpillars_forward.4} parent=61 // pred_fallthru
        _
      %150 = dma.done [#allocation3], 16
    $region62: #{pointpillars_forward.4} parent=1 // loop_footer
      %s101 = sadd.s32 1, %s97
    $region63: #{pointpillars_forward.4} parent=1 // loop_footer_branch
      %96 = sbr.rel target = $region59
    $region64: #{pointpillars_forward.4} parent=1 // loop_exit
      _
    %151 = vsyncpa [#allocation5], 1
  %152 = vsyncmov [#allocation3]
  %s153 = vpop.sfrf %152
  %p154 = scmp.eq.s32.totalorder %s153, 0
  %p155 = pneg %p154
  %157 = shalt.err (%p155)

// kernel: pointpillars_forward.3
$region0: #{pointpillars_forward.3}
  #allocation0 [shape = 'u32[]', space=smem, size = 0x4, offset = 0x4, fixed_abs, tag = 'smem constant byte address 0x4 - core index']
  #allocation1 [shape = 'u32[144,128]{1,0:T(1,128)}', space=vmem, size = 0x12000, scoped, tag = 'internal scratch']
  %s0 = inlined_call_operand.vmem [shape: f32[32,8,16], index: 0, kind: input, shape index: {}]
  %s1 = inlined_call_operand.vmem [shape: f32[32,8], index: 1, kind: input, shape index: {}]
  %s2 = inlined_call_operand.vmem [shape: f32[16,64], index: 2, kind: input, shape index: {}]
  %s3 = inlined_call_operand.vmem [shape: f32[1,64], index: 3, kind: input, shape index: {}]
  %s4 = inlined_call_operand.vmem [shape: f32[32,64], index: 4, kind: output, shape index: {}]
  %s5 = sld [smem:[#allocation0]]
  $region26: #{pointpillars_forward.3} parent=0
    _
  %s7 = ssub.s32 1, %s5
  %s8 = scalar_select 0, %s7, %s5
  // Predicated region
  $region2: #{pointpillars_forward.3} parent=0 // pred_check
    _
  $region3: #{pointpillars_forward.3} parent=0 // pred_check_branch
    %10 = sbr.rel (0) target = $region5
  $region4: #{pointpillars_forward.3} parent=0 // pred_region
    _
  $region5: #{pointpillars_forward.3} parent=0 // pred_fallthru
    _
  // Predicated region
  $region6: #{pointpillars_forward.3} parent=0 // pred_check
    _
  $region7: #{pointpillars_forward.3} parent=0 // pred_check_branch
    %12 = sbr.rel (0) target = $region9
  $region8: #{pointpillars_forward.3} parent=0 // pred_region
    _
  $region9: #{pointpillars_forward.3} parent=0 // pred_fallthru
    _
  // Predicated region
  $region10: #{pointpillars_forward.3} parent=0 // pred_check
    _
  $region11: #{pointpillars_forward.3} parent=0 // pred_check_branch
    %14 = sbr.rel (0) target = $region13
  $region12: #{pointpillars_forward.3} parent=0 // pred_region
    _
  $region13: #{pointpillars_forward.3} parent=0 // pred_fallthru
    _
  // Predicated region
  $region14: #{pointpillars_forward.3} parent=0 // pred_check
    _
  $region15: #{pointpillars_forward.3} parent=0 // pred_check_branch
    %16 = sbr.rel (0) target = $region17
  $region16: #{pointpillars_forward.3} parent=0 // pred_region
    _
  $region17: #{pointpillars_forward.3} parent=0 // pred_fallthru
    _
  %v17 = vld [vmem:[%s0] sm:$0xff]
  %v18 = vld [vmem:[%s0 + $0x8] sm:$0xff]
  %v19 = vld [vmem:[%s0 + $0x10] sm:$0xff]
  %v20 = vld [vmem:[%s0 + $0x18] sm:$0xff]
  %v21 = vld [vmem:[%s0 + $0x20] sm:$0xff]
  %v22 = vld [vmem:[%s0 + $0x28] sm:$0xff]
  %v23 = vld [vmem:[%s0 + $0x30] sm:$0xff]
  %v24 = vld [vmem:[%s0 + $0x38] sm:$0xff]
  %v25 = vld [vmem:[%s0 + $0x40] sm:$0xff]
  %v26 = vld [vmem:[%s0 + $0x48] sm:$0xff]
  %v27 = vld [vmem:[%s0 + $0x50] sm:$0xff]
  %v28 = vld [vmem:[%s0 + $0x58] sm:$0xff]
  %v29 = vld [vmem:[%s0 + $0x60] sm:$0xff]
  %v30 = vld [vmem:[%s0 + $0x68] sm:$0xff]
  %v31 = vld [vmem:[%s0 + $0x70] sm:$0xff]
  %v32 = vld [vmem:[%s0 + $0x78] sm:$0xff]
  %v33 = vld [vmem:[%s0 + $0x80] sm:$0xff]
  %v34 = vld [vmem:[%s0 + $0x88] sm:$0xff]
  %v35 = vld [vmem:[%s0 + $0x90] sm:$0xff]
  %v36 = vld [vmem:[%s0 + $0x98] sm:$0xff]
  %v37 = vld [vmem:[%s0 + $0xa0] sm:$0xff]
  %v38 = vld [vmem:[%s0 + $0xa8] sm:$0xff]
  %v39 = vld [vmem:[%s0 + $0xb0] sm:$0xff]
  %v40 = vld [vmem:[%s0 + $0xb8] sm:$0xff]
  %v41 = vld [vmem:[%s0 + $0xc0] sm:$0xff]
  %v42 = vld [vmem:[%s0 + $0xc8] sm:$0xff]
  %v43 = vld [vmem:[%s0 + $0xd0] sm:$0xff]
  %v44 = vld [vmem:[%s0 + $0xd8] sm:$0xff]
  %v45 = vld [vmem:[%s0 + $0xe0] sm:$0xff]
  %v46 = vld [vmem:[%s0 + $0xe8] sm:$0xff]
  %v47 = vld [vmem:[%s0 + $0xf0] sm:$0xff]
  %v48 = vld [vmem:[%s0 + $0xf8] sm:$0xff]
  %v49 = vld [vmem:[%s2] sm:$0xff]
  %v50 = vld [vmem:[%s2 + $0x8] sm:$0xff]
  %v51 = vld [vmem:[%s3] sm:$0x1]
  %v53 = vlaneseq
  %v54 = vshrl.u32 %v53, 7
  %v55 = vsub.s32 0, %v54
  %v56 = vrot.slane %v51, %v55
  %vm58 = vcmask 130048
  %v60 = vsel %vm58, %v17, 0
  %v63 = vsel %vm58, %v18, 0
  %v66 = vsel %vm58, %v19, 0
  %v69 = vsel %vm58, %v20, 0
  %v72 = vsel %vm58, %v21, 0
  %v75 = vsel %vm58, %v22, 0
  %v78 = vsel %vm58, %v23, 0
  %v81 = vsel %vm58, %v24, 0
  %v84 = vsel %vm58, %v25, 0
  %v87 = vsel %vm58, %v26, 0
  %v90 = vsel %vm58, %v27, 0
  %v93 = vsel %vm58, %v28, 0
  %v96 = vsel %vm58, %v29, 0
  %v99 = vsel %vm58, %v30, 0
  %v102 = vsel %vm58, %v31, 0
  %v105 = vsel %vm58, %v32, 0
  %v108 = vsel %vm58, %v33, 0
  %v111 = vsel %vm58, %v34, 0
  %v114 = vsel %vm58, %v35, 0
  %v117 = vsel %vm58, %v36, 0
  %v120 = vsel %vm58, %v37, 0
  %v123 = vsel %vm58, %v38, 0
  %v126 = vsel %vm58, %v39, 0
  %v129 = vsel %vm58, %v40, 0
  %v132 = vsel %vm58, %v41, 0
  %v135 = vsel %vm58, %v42, 0
  %v138 = vsel %vm58, %v43, 0
  %v141 = vsel %vm58, %v44, 0
  %v144 = vsel %vm58, %v45, 0
  %v147 = vsel %vm58, %v46, 0
  %v150 = vsel %vm58, %v47, 0
  %v153 = vsel %vm58, %v48, 0
  %155 = vmatprep.subr.mxu0 0.0
  %156 = vmatpush1.msra.mxu0 %v49
  %157 = vmatprep.subr.mxu0 0.0
  %158 = vmatpush1.msra.mxu0 %v50
  %159 = vmatprep.subr.mxu0 0.0
  %160 = vmatpush1.msra.mxu0 0.0
  %161 = vmatprep.subr.mxu0 0.0
  %162 = vmatpush1.msra.mxu0 0.0
  %163 = vmatprep.subr.mxu0 0.0
  %164 = vmatpush1.msra.mxu0 0.0
  %165 = vmatprep.subr.mxu0 0.0
  %166 = vmatpush1.msra.mxu0 0.0
  %167 = vmatprep.subr.mxu0 0.0
  %168 = vmatpush1.msra.mxu0 0.0
  %169 = vmatprep.subr.mxu0 0.0
  %170 = vmatpush1.msra.mxu0 0.0
  %171 = vmatprep.subr.mxu0 0.0
  %172 = vmatpush1.msra.mxu0 0.0
  %173 = vmatprep.subr.mxu0 0.0
  %174 = vmatpush1.msra.mxu0 0.0
  %175 = vmatprep.subr.mxu0 0.0
  %176 = vmatpush1.msra.mxu0 0.0
  %177 = vmatprep.subr.mxu0 0.0
  %178 = vmatpush1.msra.mxu0 0.0
  %179 = vmatprep.subr.mxu0 0.0
  %180 = vmatpush1.msra.mxu0 0.0
  %181 = vmatprep.subr.mxu0 0.0
  %182 = vmatpush1.msra.mxu0 0.0
  %183 = vmatprep.subr.mxu0 0.0
  %184 = vmatpush1.msra.mxu0 0.0
  %185 = vmatprep.subr.mxu0 0.0
  %186 = vmatpush1.msra.mxu0 0.0
  %187 = vmatprep.subr.mxu0 0.0
  %188 = vmatpush1.msra.mxu0 0.0
  %189 = vmatprep.subr.mxu0 0.0
  %190 = vmatpush1.msra.mxu0 0.0
  %191 = vmatprep.subr.mxu0 0.0
  %192 = vmatpush1.msra.mxu0 0.0
  %193 = vmatprep.subr.mxu0 0.0
  %194 = vmatpush1.msra.mxu0 0.0
  %195 = vmatprep.subr.mxu0 0.0
  %196 = vmatpush1.msra.mxu0 0.0
  %197 = vmatprep.subr.mxu0 0.0
  %198 = vmatpush1.msra.mxu0 0.0
  %199 = vmatprep.subr.mxu0 0.0
  %200 = vmatpush1.msra.mxu0 0.0
  %201 = vmatprep.subr.mxu0 0.0
  %202 = vmatpush1.msra.mxu0 0.0
  %203 = vmatprep.subr.mxu0 0.0
  %204 = vmatpush1.msra.mxu0 0.0
  %205 = vmatprep.subr.mxu0 0.0
  %206 = vmatpush1.msra.mxu0 0.0
  %207 = vmatprep.subr.mxu0 0.0
  %208 = vmatpush1.msra.mxu0 0.0
  %209 = vmatprep.subr.mxu0 0.0
  %210 = vmatpush1.msra.mxu0 0.0
  %211 = vmatprep.subr.mxu0 0.0
  %212 = vmatpush1.msra.mxu0 0.0
  %213 = vmatprep.subr.mxu0 0.0
  %214 = vmatpush1.msra.mxu0 0.0
  %215 = vmatprep.subr.mxu0 0.0
  %216 = vmatpush1.msra.mxu0 0.0
  %217 = vmatprep.subr.mxu0 0.0
  %218 = vmatpush1.msra.mxu0 0.0
  %219 = vmatprep.mubr.f32.mxu0 0.0
  %220 = vmatmul.mubr.f32.gmra.mrb[0].mxu0 %v60
  %v221 = vpop.f32.mrb[0].mxu0
  %v222 = vadd.f32 %v56, %v221
  %v223 = vpop.f32.mrb[0].mxu0
  %224 = vmatprep.mubr.f32.mxu0 0.0
  %225 = vmatmul.mubr.f32.gmra.mrb[0].mxu0 %v63
  %v226 = vpop.f32.mrb[0].mxu0
  %v227 = vadd.f32 %v56, %v226
  %v228 = vpop.f32.mrb[0].mxu0
  %229 = vmatprep.mubr.f32.mxu0 0.0
  %230 = vmatmul.mubr.f32.gmra.mrb[0].mxu0 %v66
  %v231 = vpop.f32.mrb[0].mxu0
  %v232 = vadd.f32 %v56, %v231
  %v233 = vpop.f32.mrb[0].mxu0
  %234 = vmatprep.mubr.f32.mxu0 0.0
  %235 = vmatmul.mubr.f32.gmra.mrb[0].mxu0 %v69
  %v236 = vpop.f32.mrb[0].mxu0
  %v237 = vadd.f32 %v56, %v236
  %v238 = vpop.f32.mrb[0].mxu0
  %239 = vmatprep.mubr.f32.mxu0 0.0
  %240 = vmatmul.mubr.f32.gmra.mrb[0].mxu0 %v72
  %v241 = vpop.f32.mrb[0].mxu0
  %v242 = vadd.f32 %v56, %v241
  %v243 = vpop.f32.mrb[0].mxu0
  %244 = vmatprep.mubr.f32.mxu0 0.0
  %245 = vmatmul.mubr.f32.gmra.mrb[0].mxu0 %v75
  %v246 = vpop.f32.mrb[0].mxu0
  %v247 = vadd.f32 %v56, %v246
  %v248 = vpop.f32.mrb[0].mxu0
  %249 = vmatprep.mubr.f32.mxu0 0.0
  %250 = vmatmul.mubr.f32.gmra.mrb[0].mxu0 %v78
  %v251 = vpop.f32.mrb[0].mxu0
  %v252 = vadd.f32 %v56, %v251
  %v253 = vpop.f32.mrb[0].mxu0
  %254 = vmatprep.mubr.f32.mxu0 0.0
  %255 = vmatmul.mubr.f32.gmra.mrb[0].mxu0 %v81
  %v256 = vpop.f32.mrb[0].mxu0
  %v257 = vadd.f32 %v56, %v256
  %v258 = vpop.f32.mrb[0].mxu0
  %259 = vmatprep.mubr.f32.mxu0 0.0
  %260 = vmatmul.mubr.f32.gmra.mrb[0].mxu0 %v84
  %v261 = vpop.f32.mrb[0].mxu0
  %v262 = vadd.f32 %v56, %v261
  %v263 = vpop.f32.mrb[0].mxu0
  %264 = vmatprep.mubr.f32.mxu0 0.0
  %265 = vmatmul.mubr.f32.gmra.mrb[0].mxu0 %v87
  %v266 = vpop.f32.mrb[0].mxu0
  %v267 = vadd.f32 %v56, %v266
  %v268 = vpop.f32.mrb[0].mxu0
  %269 = vmatprep.mubr.f32.mxu0 0.0
  %270 = vmatmul.mubr.f32.gmra.mrb[0].mxu0 %v90
  %v271 = vpop.f32.mrb[0].mxu0
  %v272 = vadd.f32 %v56, %v271
  %v273 = vpop.f32.mrb[0].mxu0
  %274 = vmatprep.mubr.f32.mxu0 0.0
  %275 = vmatmul.mubr.f32.gmra.mrb[0].mxu0 %v93
  %v276 = vpop.f32.mrb[0].mxu0
  %v277 = vadd.f32 %v56, %v276
  %v278 = vpop.f32.mrb[0].mxu0
  %279 = vmatprep.mubr.f32.mxu0 0.0
  %280 = vmatmul.mubr.f32.gmra.mrb[0].mxu0 %v96
  %v281 = vpop.f32.mrb[0].mxu0
  %v282 = vadd.f32 %v56, %v281
  %v283 = vpop.f32.mrb[0].mxu0
  %284 = vmatprep.mubr.f32.mxu0 0.0
  %285 = vmatmul.mubr.f32.gmra.mrb[0].mxu0 %v99
  %v286 = vpop.f32.mrb[0].mxu0
  %v287 = vadd.f32 %v56, %v286
  %v288 = vpop.f32.mrb[0].mxu0
  %289 = vmatprep.mubr.f32.mxu0 0.0
  %290 = vmatmul.mubr.f32.gmra.mrb[0].mxu0 %v102
  %v291 = vpop.f32.mrb[0].mxu0
  %v292 = vadd.f32 %v56, %v291
  %v293 = vpop.f32.mrb[0].mxu0
  %294 = vmatprep.mubr.f32.mxu0 0.0
  %295 = vmatmul.mubr.f32.gmra.mrb[0].mxu0 %v105
  %v296 = vpop.f32.mrb[0].mxu0
  %v297 = vadd.f32 %v56, %v296
  %v298 = vpop.f32.mrb[0].mxu0
  %299 = vmatprep.mubr.f32.mxu0 0.0
  %300 = vmatmul.mubr.f32.gmra.mrb[0].mxu0 %v108
  %v301 = vpop.f32.mrb[0].mxu0
  %v302 = vadd.f32 %v56, %v301
  %v303 = vpop.f32.mrb[0].mxu0
  %304 = vmatprep.mubr.f32.mxu0 0.0
  %305 = vmatmul.mubr.f32.gmra.mrb[0].mxu0 %v111
  %v306 = vpop.f32.mrb[0].mxu0
  %v307 = vadd.f32 %v56, %v306
  %v308 = vpop.f32.mrb[0].mxu0
  %309 = vmatprep.mubr.f32.mxu0 0.0
  %310 = vmatmul.mubr.f32.gmra.mrb[0].mxu0 %v114
  %v311 = vpop.f32.mrb[0].mxu0
  %v312 = vadd.f32 %v56, %v311
  %v313 = vpop.f32.mrb[0].mxu0
  %314 = vmatprep.mubr.f32.mxu0 0.0
  %315 = vmatmul.mubr.f32.gmra.mrb[0].mxu0 %v117
  %v316 = vpop.f32.mrb[0].mxu0
  %v317 = vadd.f32 %v56, %v316
  %v318 = vpop.f32.mrb[0].mxu0
  %319 = vmatprep.mubr.f32.mxu0 0.0
  %320 = vmatmul.mubr.f32.gmra.mrb[0].mxu0 %v120
  %v321 = vpop.f32.mrb[0].mxu0
  %v322 = vadd.f32 %v56, %v321
  %v323 = vpop.f32.mrb[0].mxu0
  %324 = vmatprep.mubr.f32.mxu0 0.0
  %325 = vmatmul.mubr.f32.gmra.mrb[0].mxu0 %v123
  %v326 = vpop.f32.mrb[0].mxu0
  %v327 = vadd.f32 %v56, %v326
  %v328 = vpop.f32.mrb[0].mxu0
  %329 = vmatprep.mubr.f32.mxu0 0.0
  %330 = vmatmul.mubr.f32.gmra.mrb[0].mxu0 %v126
  %v331 = vpop.f32.mrb[0].mxu0
  %v332 = vadd.f32 %v56, %v331
  %v333 = vpop.f32.mrb[0].mxu0
  %334 = vmatprep.mubr.f32.mxu0 0.0
  %335 = vmatmul.mubr.f32.gmra.mrb[0].mxu0 %v129
  %v336 = vpop.f32.mrb[0].mxu0
  %v337 = vadd.f32 %v56, %v336
  %v338 = vpop.f32.mrb[0].mxu0
  %339 = vmatprep.mubr.f32.mxu0 0.0
  %340 = vmatmul.mubr.f32.gmra.mrb[0].mxu0 %v132
  %v341 = vpop.f32.mrb[0].mxu0
  %v342 = vadd.f32 %v56, %v341
  %v343 = vpop.f32.mrb[0].mxu0
  %344 = vmatprep.mubr.f32.mxu0 0.0
  %345 = vmatmul.mubr.f32.gmra.mrb[0].mxu0 %v135
  %v346 = vpop.f32.mrb[0].mxu0
  %v347 = vadd.f32 %v56, %v346
  %v348 = vpop.f32.mrb[0].mxu0
  %349 = vmatprep.mubr.f32.mxu0 0.0
  %350 = vmatmul.mubr.f32.gmra.mrb[0].mxu0 %v138
  %v351 = vpop.f32.mrb[0].mxu0
  %v352 = vadd.f32 %v56, %v351
  %v353 = vpop.f32.mrb[0].mxu0
  %354 = vmatprep.mubr.f32.mxu0 0.0
  %355 = vmatmul.mubr.f32.gmra.mrb[0].mxu0 %v141
  %v356 = vpop.f32.mrb[0].mxu0
  %v357 = vadd.f32 %v56, %v356
  %v358 = vpop.f32.mrb[0].mxu0
  %359 = vmatprep.mubr.f32.mxu0 0.0
  %360 = vmatmul.mubr.f32.gmra.mrb[0].mxu0 %v144
  %v361 = vpop.f32.mrb[0].mxu0
  %v362 = vadd.f32 %v56, %v361
  %v363 = vpop.f32.mrb[0].mxu0
  %364 = vmatprep.mubr.f32.mxu0 0.0
  %365 = vmatmul.mubr.f32.gmra.mrb[0].mxu0 %v147
  %v366 = vpop.f32.mrb[0].mxu0
  %v367 = vadd.f32 %v56, %v366
  %v368 = vpop.f32.mrb[0].mxu0
  %369 = vmatprep.mubr.f32.mxu0 0.0
  %370 = vmatmul.mubr.f32.gmra.mrb[0].mxu0 %v150
  %v371 = vpop.f32.mrb[0].mxu0
  %v372 = vadd.f32 %v56, %v371
  %v373 = vpop.f32.mrb[0].mxu0
  %374 = vmatprep.mubr.f32.mxu0 0.0
  %375 = vmatmul.mubr.f32.gmra.mrb[0].mxu0 %v153
  %v376 = vpop.f32.mrb[0].mxu0
  %v377 = vadd.f32 %v56, %v376
  %v378 = vpop.f32.mrb[0].mxu0
  %379 = vdwg.mxu0
  %v380 = vmax.f32 %v222, 0.0
  %v381 = vmax.f32 %v227, 0.0
  %v382 = vmax.f32 %v232, 0.0
  %v383 = vmax.f32 %v237, 0.0
  %v384 = vmax.f32 %v242, 0.0
  %v385 = vmax.f32 %v247, 0.0
  %v386 = vmax.f32 %v252, 0.0
  %v387 = vmax.f32 %v257, 0.0
  %v388 = vmax.f32 %v262, 0.0
  %v389 = vmax.f32 %v267, 0.0
  %v390 = vmax.f32 %v272, 0.0
  %v391 = vmax.f32 %v277, 0.0
  %v392 = vmax.f32 %v282, 0.0
  %v393 = vmax.f32 %v287, 0.0
  %v394 = vmax.f32 %v292, 0.0
  %v395 = vmax.f32 %v297, 0.0
  %v396 = vmax.f32 %v302, 0.0
  %v397 = vmax.f32 %v307, 0.0
  %v398 = vmax.f32 %v312, 0.0
  %v399 = vmax.f32 %v317, 0.0
  %v400 = vmax.f32 %v322, 0.0
  %v401 = vmax.f32 %v327, 0.0
  %v402 = vmax.f32 %v332, 0.0
  %v403 = vmax.f32 %v337, 0.0
  %v404 = vmax.f32 %v342, 0.0
  %v405 = vmax.f32 %v347, 0.0
  %v406 = vmax.f32 %v352, 0.0
  %v407 = vmax.f32 %v357, 0.0
  %v408 = vmax.f32 %v362, 0.0
  %v409 = vmax.f32 %v367, 0.0
  %v410 = vmax.f32 %v372, 0.0
  %v411 = vmax.f32 %v377, 0.0
  %v412 = vld [vmem:[%s1] sm:$0xff]
  %v413 = vld [vmem:[%s1 + $0x8] sm:$0xff]
  %v414 = vld [vmem:[%s1 + $0x10] sm:$0xff]
  %v415 = vld [vmem:[%s1 + $0x18] sm:$0xff]
  %v416 = vlaneseq
  %v417 = vshrl.u32 %v416, 7
  %v418 = vsub.s32 0, %v417
  %v419 = vrot.slane %v412, %v418
  %421 = vbcast.lane.b32.xlu0 %v419, 256
  %v422 = vpop.permute.xlu0 %421
  %v423 = vlaneseq
  %v424 = vshrl.u32 %v423, 7
  %v425 = vsub.s32 1, %v424
  %v426 = vrot.slane %v412, %v425
  %428 = vbcast.lane.b32.xlu0 %v426, 256
  %v429 = vpop.permute.xlu0 %428
  %v430 = vlaneseq
  %v431 = vshrl.u32 %v430, 7
  %v432 = vsub.s32 2, %v431
  %v433 = vrot.slane %v412, %v432
  %435 = vbcast.lane.b32.xlu0 %v433, 256
  %v436 = vpop.permute.xlu0 %435
  %v437 = vlaneseq
  %v438 = vshrl.u32 %v437, 7
  %v439 = vsub.s32 3, %v438
  %v440 = vrot.slane %v412, %v439
  %442 = vbcast.lane.b32.xlu0 %v440, 256
  %v443 = vpop.permute.xlu0 %442
  %v444 = vlaneseq
  %v445 = vshrl.u32 %v444, 7
  %v446 = vsub.s32 4, %v445
  %v447 = vrot.slane %v412, %v446
  %449 = vbcast.lane.b32.xlu0 %v447, 256
  %v450 = vpop.permute.xlu0 %449
  %v451 = vlaneseq
  %v452 = vshrl.u32 %v451, 7
  %v453 = vsub.s32 5, %v452
  %v454 = vrot.slane %v412, %v453
  %456 = vbcast.lane.b32.xlu0 %v454, 256
  %v457 = vpop.permute.xlu0 %456
  %v458 = vlaneseq
  %v459 = vshrl.u32 %v458, 7
  %v460 = vsub.s32 6, %v459
  %v461 = vrot.slane %v412, %v460
  %463 = vbcast.lane.b32.xlu0 %v461, 256
  %v464 = vpop.permute.xlu0 %463
  %v465 = vlaneseq
  %v466 = vshrl.u32 %v465, 7
  %v467 = vsub.s32 7, %v466
  %v468 = vrot.slane %v412, %v467
  %470 = vbcast.lane.b32.xlu0 %v468, 256
  %v471 = vpop.permute.xlu0 %470
  %v472 = vlaneseq
  %v473 = vshrl.u32 %v472, 7
  %v474 = vsub.s32 0, %v473
  %v475 = vrot.slane %v413, %v474
  %477 = vbcast.lane.b32.xlu0 %v475, 256
  %v478 = vpop.permute.xlu0 %477
  %v479 = vlaneseq
  %v480 = vshrl.u32 %v479, 7
  %v481 = vsub.s32 1, %v480
  %v482 = vrot.slane %v413, %v481
  %484 = vbcast.lane.b32.xlu0 %v482, 256
  %v485 = vpop.permute.xlu0 %484
  %v486 = vlaneseq
  %v487 = vshrl.u32 %v486, 7
  %v488 = vsub.s32 2, %v487
  %v489 = vrot.slane %v413, %v488
  %491 = vbcast.lane.b32.xlu0 %v489, 256
  %v492 = vpop.permute.xlu0 %491
  %v493 = vlaneseq
  %v494 = vshrl.u32 %v493, 7
  %v495 = vsub.s32 3, %v494
  %v496 = vrot.slane %v413, %v495
  %498 = vbcast.lane.b32.xlu0 %v496, 256
  %v499 = vpop.permute.xlu0 %498
  %v500 = vlaneseq
  %v501 = vshrl.u32 %v500, 7
  %v502 = vsub.s32 4, %v501
  %v503 = vrot.slane %v413, %v502
  %505 = vbcast.lane.b32.xlu0 %v503, 256
  %v506 = vpop.permute.xlu0 %505
  %v507 = vlaneseq
  %v508 = vshrl.u32 %v507, 7
  %v509 = vsub.s32 5, %v508
  %v510 = vrot.slane %v413, %v509
  %512 = vbcast.lane.b32.xlu0 %v510, 256
  %v513 = vpop.permute.xlu0 %512
  %v514 = vlaneseq
  %v515 = vshrl.u32 %v514, 7
  %v516 = vsub.s32 6, %v515
  %v517 = vrot.slane %v413, %v516
  %519 = vbcast.lane.b32.xlu0 %v517, 256
  %v520 = vpop.permute.xlu0 %519
  %v521 = vlaneseq
  %v522 = vshrl.u32 %v521, 7
  %v523 = vsub.s32 7, %v522
  %v524 = vrot.slane %v413, %v523
  %526 = vbcast.lane.b32.xlu0 %v524, 256
  %v527 = vpop.permute.xlu0 %526
  %v528 = vlaneseq
  %v529 = vshrl.u32 %v528, 7
  %v530 = vsub.s32 0, %v529
  %v531 = vrot.slane %v414, %v530
  %533 = vbcast.lane.b32.xlu0 %v531, 256
  %v534 = vpop.permute.xlu0 %533
  %v535 = vlaneseq
  %v536 = vshrl.u32 %v535, 7
  %v537 = vsub.s32 1, %v536
  %v538 = vrot.slane %v414, %v537
  %540 = vbcast.lane.b32.xlu0 %v538, 256
  %v541 = vpop.permute.xlu0 %540
  %v542 = vlaneseq
  %v543 = vshrl.u32 %v542, 7
  %v544 = vsub.s32 2, %v543
  %v545 = vrot.slane %v414, %v544
  %547 = vbcast.lane.b32.xlu0 %v545, 256
  %v548 = vpop.permute.xlu0 %547
  %v549 = vlaneseq
  %v550 = vshrl.u32 %v549, 7
  %v551 = vsub.s32 3, %v550
  %v552 = vrot.slane %v414, %v551
  %554 = vbcast.lane.b32.xlu0 %v552, 256
  %v555 = vpop.permute.xlu0 %554
  %v556 = vlaneseq
  %v557 = vshrl.u32 %v556, 7
  %v558 = vsub.s32 4, %v557
  %v559 = vrot.slane %v414, %v558
  %561 = vbcast.lane.b32.xlu0 %v559, 256
  %v562 = vpop.permute.xlu0 %561
  %v563 = vlaneseq
  %v564 = vshrl.u32 %v563, 7
  %v565 = vsub.s32 5, %v564
  %v566 = vrot.slane %v414, %v565
  %568 = vbcast.lane.b32.xlu0 %v566, 256
  %v569 = vpop.permute.xlu0 %568
  %v570 = vlaneseq
  %v571 = vshrl.u32 %v570, 7
  %v572 = vsub.s32 6, %v571
  %v573 = vrot.slane %v414, %v572
  %575 = vbcast.lane.b32.xlu0 %v573, 256
  %v576 = vpop.permute.xlu0 %575
  %v577 = vlaneseq
  %v578 = vshrl.u32 %v577, 7
  %v579 = vsub.s32 7, %v578
  %v580 = vrot.slane %v414, %v579
  %582 = vbcast.lane.b32.xlu0 %v580, 256
  %v583 = vpop.permute.xlu0 %582
  %v584 = vlaneseq
  %v585 = vshrl.u32 %v584, 7
  %v586 = vsub.s32 0, %v585
  %v587 = vrot.slane %v415, %v586
  %589 = vbcast.lane.b32.xlu0 %v587, 256
  %v590 = vpop.permute.xlu0 %589
  %v591 = vlaneseq
  %v592 = vshrl.u32 %v591, 7
  %v593 = vsub.s32 1, %v592
  %v594 = vrot.slane %v415, %v593
  %596 = vbcast.lane.b32.xlu0 %v594, 256
  %v597 = vpop.permute.xlu0 %596
  %v598 = vlaneseq
  %v599 = vshrl.u32 %v598, 7
  %v600 = vsub.s32 2, %v599
  %v601 = vrot.slane %v415, %v600
  %603 = vbcast.lane.b32.xlu0 %v601, 256
  %v604 = vpop.permute.xlu0 %603
  %v605 = vlaneseq
  %v606 = vshrl.u32 %v605, 7
  %v607 = vsub.s32 3, %v606
  %v608 = vrot.slane %v415, %v607
  %610 = vbcast.lane.b32.xlu0 %v608, 256
  %v611 = vpop.permute.xlu0 %610
  %v612 = vlaneseq
  %v613 = vshrl.u32 %v612, 7
  %v614 = vsub.s32 4, %v613
  %v615 = vrot.slane %v415, %v614
  %617 = vbcast.lane.b32.xlu0 %v615, 256
  %v618 = vpop.permute.xlu0 %617
  %v619 = vlaneseq
  %v620 = vshrl.u32 %v619, 7
  %v621 = vsub.s32 5, %v620
  %v622 = vrot.slane %v415, %v621
  %624 = vbcast.lane.b32.xlu0 %v622, 256
  %v625 = vpop.permute.xlu0 %624
  %v626 = vlaneseq
  %v627 = vshrl.u32 %v626, 7
  %v628 = vsub.s32 6, %v627
  %v629 = vrot.slane %v415, %v628
  %631 = vbcast.lane.b32.xlu0 %v629, 256
  %v632 = vpop.permute.xlu0 %631
  %v633 = vlaneseq
  %v634 = vshrl.u32 %v633, 7
  %v635 = vsub.s32 7, %v634
  %v636 = vrot.slane %v415, %v635
  %638 = vbcast.lane.b32.xlu0 %v636, 256
  %v639 = vpop.permute.xlu0 %638
  %v640 = vmul.f32 %v380, %v422
  %v641 = vmul.f32 %v381, %v429
  %v642 = vmul.f32 %v382, %v436
  %v643 = vmul.f32 %v383, %v443
  %v644 = vmul.f32 %v384, %v450
  %v645 = vmul.f32 %v385, %v457
  %v646 = vmul.f32 %v386, %v464
  %v647 = vmul.f32 %v387, %v471
  %v648 = vmul.f32 %v388, %v478
  %v649 = vmul.f32 %v389, %v485
  %v650 = vmul.f32 %v390, %v492
  %v651 = vmul.f32 %v391, %v499
  %v652 = vmul.f32 %v392, %v506
  %v653 = vmul.f32 %v393, %v513
  %v654 = vmul.f32 %v394, %v520
  %v655 = vmul.f32 %v395, %v527
  %v656 = vmul.f32 %v396, %v534
  %v657 = vmul.f32 %v397, %v541
  %v658 = vmul.f32 %v398, %v548
  %v659 = vmul.f32 %v399, %v555
  %v660 = vmul.f32 %v400, %v562
  %v661 = vmul.f32 %v401, %v569
  %v662 = vmul.f32 %v402, %v576
  %v663 = vmul.f32 %v403, %v583
  %v664 = vmul.f32 %v404, %v590
  %v665 = vmul.f32 %v405, %v597
  %v666 = vmul.f32 %v406, %v604
  %v667 = vmul.f32 %v407, %v611
  %v668 = vmul.f32 %v408, %v618
  %v669 = vmul.f32 %v409, %v625
  %v670 = vmul.f32 %v410, %v632
  %v671 = vmul.f32 %v411, %v639
  %vm672 = vcmask 523264
  %v673 = vsel %vm672, %v640, -inf
  %v674 = vrot.slane %v673, 4
  %v675 = vmax.f32 %v673, %v674
  %v676 = vrot.slane %v675, 2
  %v677 = vmax.f32 %v675, %v676
  %v678 = vrot.slane %v677, 1
  %v679 = vmax.f32 %v677, %v678
  %v680 = vsel %vm672, %v641, -inf
  %v681 = vrot.slane %v680, 4
  %v682 = vmax.f32 %v680, %v681
  %v683 = vrot.slane %v682, 2
  %v684 = vmax.f32 %v682, %v683
  %v685 = vrot.slane %v684, 1
  %v686 = vmax.f32 %v684, %v685
  %v687 = vsel %vm672, %v642, -inf
  %v688 = vrot.slane %v687, 4
  %v689 = vmax.f32 %v687, %v688
  %v690 = vrot.slane %v689, 2
  %v691 = vmax.f32 %v689, %v690
  %v692 = vrot.slane %v691, 1
  %v693 = vmax.f32 %v691, %v692
  %v694 = vsel %vm672, %v643, -inf
  %v695 = vrot.slane %v694, 4
  %v696 = vmax.f32 %v694, %v695
  %v697 = vrot.slane %v696, 2
  %v698 = vmax.f32 %v696, %v697
  %v699 = vrot.slane %v698, 1
  %v700 = vmax.f32 %v698, %v699
  %v701 = vsel %vm672, %v644, -inf
  %v702 = vrot.slane %v701, 4
  %v703 = vmax.f32 %v701, %v702
  %v704 = vrot.slane %v703, 2
  %v705 = vmax.f32 %v703, %v704
  %v706 = vrot.slane %v705, 1
  %v707 = vmax.f32 %v705, %v706
  %v708 = vsel %vm672, %v645, -inf
  %v709 = vrot.slane %v708, 4
  %v710 = vmax.f32 %v708, %v709
  %v711 = vrot.slane %v710, 2
  %v712 = vmax.f32 %v710, %v711
  %v713 = vrot.slane %v712, 1
  %v714 = vmax.f32 %v712, %v713
  %v715 = vsel %vm672, %v646, -inf
  %v716 = vrot.slane %v715, 4
  %v717 = vmax.f32 %v715, %v716
  %v718 = vrot.slane %v717, 2
  %v719 = vmax.f32 %v717, %v718
  %v720 = vrot.slane %v719, 1
  %v721 = vmax.f32 %v719, %v720
  %v722 = vsel %vm672, %v647, -inf
  %v723 = vrot.slane %v722, 4
  %v724 = vmax.f32 %v722, %v723
  %v725 = vrot.slane %v724, 2
  %v726 = vmax.f32 %v724, %v725
  %v727 = vrot.slane %v726, 1
  %v728 = vmax.f32 %v726, %v727
  %v729 = vsel %vm672, %v648, -inf
  %v730 = vrot.slane %v729, 4
  %v731 = vmax.f32 %v729, %v730
  %v732 = vrot.slane %v731, 2
  %v733 = vmax.f32 %v731, %v732
  %v734 = vrot.slane %v733, 1
  %v735 = vmax.f32 %v733, %v734
  %v736 = vsel %vm672, %v649, -inf
  %v737 = vrot.slane %v736, 4
  %v738 = vmax.f32 %v736, %v737
  %v739 = vrot.slane %v738, 2
  %v740 = vmax.f32 %v738, %v739
  %v741 = vrot.slane %v740, 1
  %v742 = vmax.f32 %v740, %v741
  %v743 = vsel %vm672, %v650, -inf
  %v744 = vrot.slane %v743, 4
  %v745 = vmax.f32 %v743, %v744
  %v746 = vrot.slane %v745, 2
  %v747 = vmax.f32 %v745, %v746
  %v748 = vrot.slane %v747, 1
  %v749 = vmax.f32 %v747, %v748
  %v750 = vsel %vm672, %v651, -inf
  %v751 = vrot.slane %v750, 4
  %v752 = vmax.f32 %v750, %v751
  %v753 = vrot.slane %v752, 2
  %v754 = vmax.f32 %v752, %v753
  %v755 = vrot.slane %v754, 1
  %v756 = vmax.f32 %v754, %v755
  %v757 = vsel %vm672, %v652, -inf
  %v758 = vrot.slane %v757, 4
  %v759 = vmax.f32 %v757, %v758
  %v760 = vrot.slane %v759, 2
  %v761 = vmax.f32 %v759, %v760
  %v762 = vrot.slane %v761, 1
  %v763 = vmax.f32 %v761, %v762
  %v764 = vsel %vm672, %v653, -inf
  %v765 = vrot.slane %v764, 4
  %v766 = vmax.f32 %v764, %v765
  %v767 = vrot.slane %v766, 2
  %v768 = vmax.f32 %v766, %v767
  %v769 = vrot.slane %v768, 1
  %v770 = vmax.f32 %v768, %v769
  %v771 = vsel %vm672, %v654, -inf
  %v772 = vrot.slane %v771, 4
  %v773 = vmax.f32 %v771, %v772
  %v774 = vrot.slane %v773, 2
  %v775 = vmax.f32 %v773, %v774
  %v776 = vrot.slane %v775, 1
  %v777 = vmax.f32 %v775, %v776
  %v778 = vsel %vm672, %v655, -inf
  %v779 = vrot.slane %v778, 4
  %v780 = vmax.f32 %v778, %v779
  %v781 = vrot.slane %v780, 2
  %v782 = vmax.f32 %v780, %v781
  %v783 = vrot.slane %v782, 1
  %v784 = vmax.f32 %v782, %v783
  %v785 = vsel %vm672, %v656, -inf
  %v786 = vrot.slane %v785, 4
  %v787 = vmax.f32 %v785, %v786
  %v788 = vrot.slane %v787, 2
  %v789 = vmax.f32 %v787, %v788
  %v790 = vrot.slane %v789, 1
  %v791 = vmax.f32 %v789, %v790
  %v792 = vsel %vm672, %v657, -inf
  %v793 = vrot.slane %v792, 4
  %v794 = vmax.f32 %v792, %v793
  %v795 = vrot.slane %v794, 2
  %v796 = vmax.f32 %v794, %v795
  %v797 = vrot.slane %v796, 1
  %v798 = vmax.f32 %v796, %v797
  %v799 = vsel %vm672, %v658, -inf
  %v800 = vrot.slane %v799, 4
  %v801 = vmax.f32 %v799, %v800
  %v802 = vrot.slane %v801, 2
  %v803 = vmax.f32 %v801, %v802
  %v804 = vrot.slane %v803, 1
  %v805 = vmax.f32 %v803, %v804
  %v806 = vsel %vm672, %v659, -inf
  %v807 = vrot.slane %v806, 4
  %v808 = vmax.f32 %v806, %v807
  %v809 = vrot.slane %v808, 2
  %v810 = vmax.f32 %v808, %v809
  %v811 = vrot.slane %v810, 1
  %v812 = vmax.f32 %v810, %v811
  %v813 = vsel %vm672, %v660, -inf
  %v814 = vrot.slane %v813, 4
  %v815 = vmax.f32 %v813, %v814
  %v816 = vrot.slane %v815, 2
  %v817 = vmax.f32 %v815, %v816
  %v818 = vrot.slane %v817, 1
  %v819 = vmax.f32 %v817, %v818
  %v820 = vsel %vm672, %v661, -inf
  %v821 = vrot.slane %v820, 4
  %v822 = vmax.f32 %v820, %v821
  %v823 = vrot.slane %v822, 2
  %v824 = vmax.f32 %v822, %v823
  %v825 = vrot.slane %v824, 1
  %v826 = vmax.f32 %v824, %v825
  %v827 = vsel %vm672, %v662, -inf
  %v828 = vrot.slane %v827, 4
  %v829 = vmax.f32 %v827, %v828
  %v830 = vrot.slane %v829, 2
  %v831 = vmax.f32 %v829, %v830
  %v832 = vrot.slane %v831, 1
  %v833 = vmax.f32 %v831, %v832
  %v834 = vsel %vm672, %v663, -inf
  %v835 = vrot.slane %v834, 4
  %v836 = vmax.f32 %v834, %v835
  %v837 = vrot.slane %v836, 2
  %v838 = vmax.f32 %v836, %v837
  %v839 = vrot.slane %v838, 1
  %v840 = vmax.f32 %v838, %v839
  %v841 = vsel %vm672, %v664, -inf
  %v842 = vrot.slane %v841, 4
  %v843 = vmax.f32 %v841, %v842
  %v844 = vrot.slane %v843, 2
  %v845 = vmax.f32 %v843, %v844
  %v846 = vrot.slane %v845, 1
  %v847 = vmax.f32 %v845, %v846
  %v848 = vsel %vm672, %v665, -inf
  %v849 = vrot.slane %v848, 4
  %v850 = vmax.f32 %v848, %v849
  %v851 = vrot.slane %v850, 2
  %v852 = vmax.f32 %v850, %v851
  %v853 = vrot.slane %v852, 1
  %v854 = vmax.f32 %v852, %v853
  %v855 = vsel %vm672, %v666, -inf
  %v856 = vrot.slane %v855, 4
  %v857 = vmax.f32 %v855, %v856
  %v858 = vrot.slane %v857, 2
  %v859 = vmax.f32 %v857, %v858
  %v860 = vrot.slane %v859, 1
  %v861 = vmax.f32 %v859, %v860
  %v862 = vsel %vm672, %v667, -inf
  %v863 = vrot.slane %v862, 4
  %v864 = vmax.f32 %v862, %v863
  %v865 = vrot.slane %v864, 2
  %v866 = vmax.f32 %v864, %v865
  %v867 = vrot.slane %v866, 1
  %v868 = vmax.f32 %v866, %v867
  %v869 = vsel %vm672, %v668, -inf
  %v870 = vrot.slane %v869, 4
  %v871 = vmax.f32 %v869, %v870
  %v872 = vrot.slane %v871, 2
  %v873 = vmax.f32 %v871, %v872
  %v874 = vrot.slane %v873, 1
  %v875 = vmax.f32 %v873, %v874
  %v876 = vsel %vm672, %v669, -inf
  %v877 = vrot.slane %v876, 4
  %v878 = vmax.f32 %v876, %v877
  %v879 = vrot.slane %v878, 2
  %v880 = vmax.f32 %v878, %v879
  %v881 = vrot.slane %v880, 1
  %v882 = vmax.f32 %v880, %v881
  %v883 = vsel %vm672, %v670, -inf
  %v884 = vrot.slane %v883, 4
  %v885 = vmax.f32 %v883, %v884
  %v886 = vrot.slane %v885, 2
  %v887 = vmax.f32 %v885, %v886
  %v888 = vrot.slane %v887, 1
  %v889 = vmax.f32 %v887, %v888
  %v890 = vsel %vm672, %v671, -inf
  %v891 = vrot.slane %v890, 4
  %v892 = vmax.f32 %v890, %v891
  %v893 = vrot.slane %v892, 2
  %v894 = vmax.f32 %v892, %v893
  %v895 = vrot.slane %v894, 1
  %v896 = vmax.f32 %v894, %v895
  %vm929 = vcmask 1041409
  %v930 = vsel %vm929, %v686, %v679
  %vm931 = vcmask 1042434
  %v932 = vsel %vm931, %v693, %v930
  %vm933 = vcmask 1043459
  %v934 = vsel %vm933, %v700, %v932
  %vm935 = vcmask 1044484
  %v936 = vsel %vm935, %v707, %v934
  %vm937 = vcmask 1045509
  %v938 = vsel %vm937, %v714, %v936
  %vm939 = vcmask 1046534
  %v940 = vsel %vm939, %v721, %v938
  %vm941 = vcmask 1047559
  %v942 = vsel %vm941, %v728, %v940
  %v943 = vsel %vm929, %v742, %v735
  %v944 = vsel %vm931, %v749, %v943
  %v945 = vsel %vm933, %v756, %v944
  %v946 = vsel %vm935, %v763, %v945
  %v947 = vsel %vm937, %v770, %v946
  %v948 = vsel %vm939, %v777, %v947
  %v949 = vsel %vm941, %v784, %v948
  %v950 = vsel %vm929, %v798, %v791
  %v951 = vsel %vm931, %v805, %v950
  %v952 = vsel %vm933, %v812, %v951
  %v953 = vsel %vm935, %v819, %v952
  %v954 = vsel %vm937, %v826, %v953
  %v955 = vsel %vm939, %v833, %v954
  %v956 = vsel %vm941, %v840, %v955
  %v957 = vsel %vm929, %v854, %v847
  %v958 = vsel %vm931, %v861, %v957
  %v959 = vsel %vm933, %v868, %v958
  %v960 = vsel %vm935, %v875, %v959
  %v961 = vsel %vm937, %v882, %v960
  %v962 = vsel %vm939, %v889, %v961
  %v963 = vsel %vm941, %v896, %v962
  %968 = vst.msk [vmem:[%s4] sm:$0xff] %vm672, %v942
  %969 = vst.msk [vmem:[%s4 + $0x8] sm:$0xff] %vm672, %v949
  %970 = vst.msk [vmem:[%s4 + $0x10] sm:$0xff] %vm672, %v956
  %971 = vst.msk [vmem:[%s4 + $0x18] sm:$0xff] %vm672, %v963
  // Predicated region
  $region18: #{pointpillars_forward.3} parent=0 // pred_check
    _
  $region19: #{pointpillars_forward.3} parent=0 // pred_check_branch
    %973 = sbr.rel (0) target = $region21
  $region20: #{pointpillars_forward.3} parent=0 // pred_region
    _
  $region21: #{pointpillars_forward.3} parent=0 // pred_fallthru
    _
  // Predicated region
  $region22: #{pointpillars_forward.3} parent=0 // pred_check
    _
  $region23: #{pointpillars_forward.3} parent=0 // pred_check_branch
    %975 = sbr.rel (0) target = $region25
  $region24: #{pointpillars_forward.3} parent=0 // pred_region
    _
  $region25: #{pointpillars_forward.3} parent=0 // pred_fallthru
    _

// kernel: pointpillars_forward.5
$region0: #{pointpillars_forward.5}
  #allocation0 [shape = 'u32[]', space=smem, size = 0x4, offset = 0x4, fixed_abs, tag = 'smem constant byte address 0x4 - core index']
  #allocation1 [shape = 'u32[144,128]{1,0:T(1,128)}', space=vmem, size = 0x12000, scoped, tag = 'internal scratch']
  %s0 = inlined_call_operand.hbm [shape: f32[24,18,64], index: 0, kind: input, shape index: {}, may-alias: {0,1}]
  %s1 = inlined_call_operand.hbm [shape: f32[24,18,64], index: 1, kind: input, shape index: {}, may-alias: {0,1}]
  %s2 = inlined_call_operand.hbm [shape: bf16[9,64,64], index: 2, kind: input, shape index: {}]
  %s3 = inlined_call_operand.hbm [shape: f32[1,64], index: 3, kind: input, shape index: {}]
  %s4 = inlined_call_operand.hbm [shape: bf16[64,20], index: 4, kind: input, shape index: {}]
  %s5 = inlined_call_operand.hbm [shape: f32[1,20], index: 5, kind: input, shape index: {}]
  %s6 = inlined_call_operand.hbm [shape: f32[256,20], index: 6, kind: output, shape index: {}]
  %s7 = sld [smem:[#allocation0]]
  $region81: #{pointpillars_forward.5} parent=0
    _
  %s9 = ssub.s32 1, %s7
  %s10 = scalar_select 0, %s9, %s7
  $region1: #{pointpillars_forward.5} parent=0
    #allocation2 [shape = 'u8[196608]{0}', space=vmem, size = 0x30000, scoped, tag = 'input window, operand 0']
    #allocation3 [shape = 's32[2]{0}', space=sflag, size = 0x8, scoped, tag = 'scoped memory for pointpillars_forward.5']
    #allocation4 [shape = 's32[2]{0}', space=sflag, size = 0x8, scoped, tag = 'scoped memory for pointpillars_forward.5']
    #allocation5 [shape = 'u8[196608]{0}', space=vmem, size = 0x30000, scoped, tag = 'input window, operand 1']
    #allocation6 [shape = 's32[2]{0}', space=sflag, size = 0x8, scoped, tag = 'scoped memory for pointpillars_forward.5']
    #allocation7 [shape = 'u8[147456]{0}', space=vmem, size = 0x24000, scoped, tag = 'input window, operand 2, single buffered']
    #allocation8 [shape = 'u8[512]{0}', space=vmem, size = 0x400, scoped, tag = 'input window, operand 3, single buffered']
    #allocation9 [shape = 's32[1]{0}', space=sflag, size = 0x4, scoped, tag = 'scoped memory for pointpillars_forward.5']
    #allocation10 [shape = 'u8[16384]{0}', space=vmem, size = 0x4000, scoped, tag = 'input window, operand 4, single buffered']
    #allocation11 [shape = 'u8[512]{0}', space=vmem, size = 0x400, scoped, tag = 'input window, operand 5, single buffered']
    #allocation12 [shape = 's32[1]{0}', space=sflag, size = 0x4, scoped, tag = 'scoped memory for pointpillars_forward.5']
    #allocation13 [shape = 'u8[131072]{0}', space=vmem, size = 0x20000, scoped, tag = 'output window, operand 0']
    %11 = vsyncpa [#allocation3], 0
    %s12 = scalar_lea.sflag [#allocation3], 1
    %13 = vsyncpa %s12, 0
    %14 = vsyncpa [#allocation6], 0
    %s15 = scalar_lea.sflag [#allocation6], 1
    %16 = vsyncpa %s15, 0
    %17 = vsyncpa [#allocation9], 0
    %18 = vsyncpa [#allocation12], 0
    %19 = vsyncpa [#allocation4], 0
    %s20 = scalar_lea.sflag [#allocation4], 1
    %21 = vsyncpa %s20, 0
    loop: start=0, step=1, limit=4
    $region2: #{pointpillars_forward.5} parent=1 // loop_pre_header
      _
    $region3: #{pointpillars_forward.5} parent=1 // loop_header
      %s23 = sphi 0, %s27
      %p24 = scmp.ge.s32.totalorder %s23, 4
      %s33 = sphi 0, %s35
      %s36 = sphi 0, %s33
      %s37 = sphi 0, %s36
      %s53 = sphi 0, %s37
      %s61 = sphi 0, %s63
      %s64 = sphi 0, %s61
      %s65 = sphi 0, %s64
      %s81 = sphi 0, %s65
      %s85 = sphi 0, %s85
      %s87 = sphi 0, %s85
      %s88 = sphi 0, %s87
      %s102 = sphi 0, %s88
      %s106 = sphi 0, %s106
      %s108 = sphi 0, %s106
      %s109 = sphi 0, %s108
      %s123 = sphi 0, %s109
      %s127 = sphi 0, %s127
      %s129 = sphi 0, %s127
      %s130 = sphi 0, %s129
      %s144 = sphi 0, %s130
      %s148 = sphi 0, %s148
      %s150 = sphi 0, %s148
      %s151 = sphi 0, %s150
      %s165 = sphi 0, %s151
      %s171 = sphi 0, %s173
      %s174 = sphi 0, %s171
      %s175 = sphi 0, %s174
      %s191 = sphi 0, %s175
    $region4: #{pointpillars_forward.5} parent=1 // loop_header_branch
      %26 = sbr.rel (%p24) target = $region8
    $region5: #{pointpillars_forward.5} parent=1 // loop_body
      %s28 = ssub.s32 %s23, 1
      %s29 = ssub.s32 %s23, 2
      %s30 = sadd.s32 %s23, 1
      %s31 = ssub.s32 %s23, %s30
      %p32 = scmp.eq.s32.totalorder %s31, 0
      %s34 = sadd.s32 %s33, 1
      %s35 = scalar_select %p32, %s33, %s34
      %p38 = pneg %p32
      %p39 = scmp.eq.s32.totalorder %s23, 1
      %p40 = por %p38, %p39
      %p41 = scmp.ne.s32.totalorder %s33, %s36
      %p42 = scmp.eq.s32.totalorder %s23, 0
      %p43 = por %p41, %p42
      %p44 = scmp.ne.s32.totalorder %s33, %s36
      %p45 = scmp.eq.s32.totalorder %s28, 1
      %p46 = por %p44, %p45
      %p47 = scmp.ne.s32.totalorder %s36, %s37
      %p48 = scmp.eq.s32.totalorder %s28, 0
      %p49 = por %p47, %p48
      %p50 = scmp.ne.s32.totalorder %s36, %s37
      %p51 = scmp.eq.s32.totalorder %s29, 1
      %p52 = por %p50, %p51
      %p54 = scmp.ne.s32.totalorder %s37, %s53
      %p55 = scmp.eq.s32.totalorder %s29, 0
      %p56 = por %p54, %p55
      %s57 = sadd.s32 %s23, 1
      %s58 = sadd.s32 %s30, 1
      %s59 = ssub.s32 %s57, %s58
      %p60 = scmp.eq.s32.totalorder %s59, 0
      %s62 = sadd.s32 %s61, 1
      %s63 = scalar_select %p60, %s61, %s62
      %p66 = pneg %p60
      %p67 = scmp.eq.s32.totalorder %s23, 1
      %p68 = por %p66, %p67
      %p69 = scmp.ne.s32.totalorder %s61, %s64
      %p70 = scmp.eq.s32.totalorder %s23, 0
      %p71 = por %p69, %p70
      %p72 = scmp.ne.s32.totalorder %s61, %s64
      %p73 = scmp.eq.s32.totalorder %s28, 1
      %p74 = por %p72, %p73
      %p75 = scmp.ne.s32.totalorder %s64, %s65
      %p76 = scmp.eq.s32.totalorder %s28, 0
      %p77 = por %p75, %p76
      %p78 = scmp.ne.s32.totalorder %s64, %s65
      %p79 = scmp.eq.s32.totalorder %s29, 1
      %p80 = por %p78, %p79
      %p82 = scmp.ne.s32.totalorder %s65, %s81
      %p83 = scmp.eq.s32.totalorder %s29, 0
      %p84 = por %p82, %p83
      %s86 = sadd.s32 %s85, 1
      %p89 = scmp.eq.s32.totalorder %s23, 1
      %p90 = scmp.ne.s32.totalorder %s85, %s87
      %p91 = scmp.eq.s32.totalorder %s23, 0
      %p92 = por %p90, %p91
      %p93 = scmp.ne.s32.totalorder %s85, %s87
      %p94 = scmp.eq.s32.totalorder %s28, 1
      %p95 = por %p93, %p94
      %p96 = scmp.ne.s32.totalorder %s87, %s88
      %p97 = scmp.eq.s32.totalorder %s28, 0
      %p98 = por %p96, %p97
      %p99 = scmp.ne.s32.totalorder %s87, %s88
      %p100 = scmp.eq.s32.totalorder %s29, 1
      %p101 = por %p99, %p100
      %p103 = scmp.ne.s32.totalorder %s88, %s102
      %p104 = scmp.eq.s32.totalorder %s29, 0
      %p105 = por %p103, %p104
      %s107 = sadd.s32 %s106, 1
      %p110 = scmp.eq.s32.totalorder %s23, 1
      %p111 = scmp.ne.s32.totalorder %s106, %s108
      %p112 = scmp.eq.s32.totalorder %s23, 0
      %p113 = por %p111, %p112
      %p114 = scmp.ne.s32.totalorder %s106, %s108
      %p115 = scmp.eq.s32.totalorder %s28, 1
      %p116 = por %p114, %p115
      %p117 = scmp.ne.s32.totalorder %s108, %s109
      %p118 = scmp.eq.s32.totalorder %s28, 0
      %p119 = por %p117, %p118
      %p120 = scmp.ne.s32.totalorder %s108, %s109
      %p121 = scmp.eq.s32.totalorder %s29, 1
      %p122 = por %p120, %p121
      %p124 = scmp.ne.s32.totalorder %s109, %s123
      %p125 = scmp.eq.s32.totalorder %s29, 0
      %p126 = por %p124, %p125
      %s128 = sadd.s32 %s127, 1
      %p131 = scmp.eq.s32.totalorder %s23, 1
      %p132 = scmp.ne.s32.totalorder %s127, %s129
      %p133 = scmp.eq.s32.totalorder %s23, 0
      %p134 = por %p132, %p133
      %p135 = scmp.ne.s32.totalorder %s127, %s129
      %p136 = scmp.eq.s32.totalorder %s28, 1
      %p137 = por %p135, %p136
      %p138 = scmp.ne.s32.totalorder %s129, %s130
      %p139 = scmp.eq.s32.totalorder %s28, 0
      %p140 = por %p138, %p139
      %p141 = scmp.ne.s32.totalorder %s129, %s130
      %p142 = scmp.eq.s32.totalorder %s29, 1
      %p143 = por %p141, %p142
      %p145 = scmp.ne.s32.totalorder %s130, %s144
      %p146 = scmp.eq.s32.totalorder %s29, 0
      %p147 = por %p145, %p146
      %s149 = sadd.s32 %s148, 1
      %p152 = scmp.eq.s32.totalorder %s23, 1
      %p153 = scmp.ne.s32.totalorder %s148, %s150
      %p154 = scmp.eq.s32.totalorder %s23, 0
      %p155 = por %p153, %p154
      %p156 = scmp.ne.s32.totalorder %s148, %s150
      %p157 = scmp.eq.s32.totalorder %s28, 1
      %p158 = por %p156, %p157
      %p159 = scmp.ne.s32.totalorder %s150, %s151
      %p160 = scmp.eq.s32.totalorder %s28, 0
      %p161 = por %p159, %p160
      %p162 = scmp.ne.s32.totalorder %s150, %s151
      %p163 = scmp.eq.s32.totalorder %s29, 1
      %p164 = por %p162, %p163
      %p166 = scmp.ne.s32.totalorder %s151, %s165
      %p167 = scmp.eq.s32.totalorder %s29, 0
      %p168 = por %p166, %p167
      %s169 = ssub.s32 %s23, %s30
      %p170 = scmp.eq.s32.totalorder %s169, 0
      %s172 = sadd.s32 %s171, 1
      %s173 = scalar_select %p170, %s171, %s172
      %p176 = pneg %p170
      %p177 = scmp.eq.s32.totalorder %s23, 1
      %p178 = por %p176, %p177
      %p179 = scmp.ne.s32.totalorder %s171, %s174
      %p180 = scmp.eq.s32.totalorder %s23, 0
      %p181 = por %p179, %p180
      %p182 = scmp.ne.s32.totalorder %s171, %s174
      %p183 = scmp.eq.s32.totalorder %s28, 1
      %p184 = por %p182, %p183
      %p185 = scmp.ne.s32.totalorder %s174, %s175
      %p186 = scmp.eq.s32.totalorder %s28, 0
      %p187 = por %p185, %p186
      %p188 = scmp.ne.s32.totalorder %s174, %s175
      %p189 = scmp.eq.s32.totalorder %s29, 1
      %p190 = por %p188, %p189
      %p192 = scmp.ne.s32.totalorder %s175, %s191
      %p193 = scmp.eq.s32.totalorder %s29, 0
      %p194 = por %p192, %p193
      %p195 = scmp.le.s32.totalorder 1, %s23
      %p196 = scmp.lt.s32.totalorder %s23, 3
      %p197 = pnand %p195, %p196
      %p198 = pneg %p197
      // Predicated region
      $region9: #{pointpillars_forward.5} parent=5 // pred_check
        _
      $region10: #{pointpillars_forward.5} parent=5 // pred_check_branch
        %200 = sbr.rel (%p197) target = $region12
      $region11: #{pointpillars_forward.5} parent=5 // pred_region
        %s201 = ssub.s32 %s23, 1
        // Predicated region
        $region13: #{pointpillars_forward.5} parent=11 // pred_check
          %p202 = pneg %p98
        $region14: #{pointpillars_forward.5} parent=11 // pred_check_branch
          %204 = sbr.rel (%p202) target = $region16
        $region15: #{pointpillars_forward.5} parent=11 // pred_region
          %s206 = ssub.s32 4608, 4608
          %207 = vsyncadd [#allocation6], %s206
          %s208 = sshll.u32 [#allocation7], 4
          %s209 = int_to_ptr.vmem [resolvable:$true] %s208
          %214 = dma.hbm_to_vmem [thread:$0]  %s2, 4608, %s209, [#allocation6], 64, 64, 4
        $region16: #{pointpillars_forward.5} parent=11 // pred_fallthru
          _
        // Predicated region
        $region17: #{pointpillars_forward.5} parent=11 // pred_check
          %p215 = pneg %p119
        $region18: #{pointpillars_forward.5} parent=11 // pred_check_branch
          %217 = sbr.rel (%p215) target = $region20
        $region19: #{pointpillars_forward.5} parent=11 // pred_region
          %s219 = ssub.s32 16, 16
          %220 = vsyncadd [#allocation9], %s219
          %s222 = sshll.u32 [#allocation8], 4
          %s223 = int_to_ptr.vmem [resolvable:$true] %s222
          %225 = dma.hbm_to_vmem [thread:$0]  %s3, 16, %s223, [#allocation9]
        $region20: #{pointpillars_forward.5} parent=11 // pred_fallthru
          _
        // Predicated region
        $region21: #{pointpillars_forward.5} parent=11 // pred_check
          %p226 = pneg %p140
        $region22: #{pointpillars_forward.5} parent=11 // pred_check_branch
          %228 = sbr.rel (%p226) target = $region24
        $region23: #{pointpillars_forward.5} parent=11 // pred_region
          %s230 = ssub.s32 512, 512
          %231 = vsyncadd [#allocation9], %s230
          %s232 = sshll.u32 [#allocation10], 4
          %s233 = int_to_ptr.vmem [resolvable:$true] %s232
          %238 = dma.hbm_to_vmem [thread:$0]  %s4, 512, %s233, [#allocation9], 64, 64, 4
        $region24: #{pointpillars_forward.5} parent=11 // pred_fallthru
          _
        // Predicated region
        $region25: #{pointpillars_forward.5} parent=11 // pred_check
          %p239 = pneg %p161
        $region26: #{pointpillars_forward.5} parent=11 // pred_check_branch
          %241 = sbr.rel (%p239) target = $region28
        $region27: #{pointpillars_forward.5} parent=11 // pred_region
          %s243 = ssub.s32 16, 16
          %244 = vsyncadd [#allocation12], %s243
          %s246 = sshll.u32 [#allocation11], 4
          %s247 = int_to_ptr.vmem [resolvable:$true] %s246
          %249 = dma.hbm_to_vmem [thread:$0]  %s5, 16, %s247, [#allocation12]
        $region28: #{pointpillars_forward.5} parent=11 // pred_fallthru
          _
      $region12: #{pointpillars_forward.5} parent=5 // pred_fallthru
        _
      %p250 = scmp.lt.s32.totalorder %s23, 2
      // Predicated region
      $region29: #{pointpillars_forward.5} parent=5 // pred_check
        %p251 = pneg %p250
      $region30: #{pointpillars_forward.5} parent=5 // pred_check_branch
        %253 = sbr.rel (%p251) target = $region32
      $region31: #{pointpillars_forward.5} parent=5 // pred_region
        // Predicated region
        $region33: #{pointpillars_forward.5} parent=31 // pred_check
          %p254 = pneg %p43
        $region34: #{pointpillars_forward.5} parent=31 // pred_check_branch
          %256 = sbr.rel (%p254) target = $region36
        $region35: #{pointpillars_forward.5} parent=31 // pred_region
          %s257 = sand.u32 %s33, 1
          %s258 = scalar_lea.sflag [#allocation3], %s257
          %s259 = sand.u32 %s33, 1
          %s260 = smul.addr %s259, 192
          %s261 = scalar_lea.vmem [#allocation2], %s260
          %s262 = smul.u32 8, %s23
          %s264 = ssub.s32 3072, 3072
          %265 = vsyncadd %s258, %s264
          %s266 = smul.addr %s262, 3
          %s267 = smul.addr %s266, 128
          %s268 = scalar_lea.hbm %s0, %s267
          %s269 = sshll.u32 %s261, 4
          %s270 = int_to_ptr.vmem [resolvable:$true] %s269
          %275 = dma.hbm_to_vmem [thread:$0]  %s268, 3072, %s270, %s258, 128, 128, 8
        $region36: #{pointpillars_forward.5} parent=31 // pred_fallthru
          _
        // Predicated region
        $region37: #{pointpillars_forward.5} parent=31 // pred_check
          %p276 = pneg %p71
        $region38: #{pointpillars_forward.5} parent=31 // pred_check_branch
          %278 = sbr.rel (%p276) target = $region40
        $region39: #{pointpillars_forward.5} parent=31 // pred_region
          %s279 = sand.u32 %s23, 1
          %s280 = scalar_lea.sflag [#allocation6], %s279
          %s281 = sand.u32 %s61, 1
          %s282 = smul.addr %s281, 192
          %s283 = scalar_lea.vmem [#allocation5], %s282
          %s284 = sadd.s32 %s23, 1
          %s285 = smul.u32 8, %s284
          %s287 = ssub.s32 3072, 3072
          %288 = vsyncadd %s280, %s287
          %s289 = smul.addr %s285, 3
          %s290 = smul.addr %s289, 128
          %s291 = scalar_lea.hbm %s1, %s290
          %s292 = sshll.u32 %s283, 4
          %s293 = int_to_ptr.vmem [resolvable:$true] %s292
          %298 = dma.hbm_to_vmem [thread:$0]  %s291, 3072, %s293, %s280, 128, 128, 8
        $region40: #{pointpillars_forward.5} parent=31 // pred_fallthru
          _
      $region32: #{pointpillars_forward.5} parent=5 // pred_fallthru
        _
      %p299 = scmp.le.s32.totalorder 1, %s23
      %p300 = scmp.lt.s32.totalorder %s23, 3
      %p301 = pnand %p299, %p300
      %p302 = pneg %p301
      // Predicated region
      $region41: #{pointpillars_forward.5} parent=5 // pred_check
        _
      $region42: #{pointpillars_forward.5} parent=5 // pred_check_branch
        %304 = sbr.rel (%p301) target = $region44
      $region43: #{pointpillars_forward.5} parent=5 // pred_region
        %s305 = ssub.s32 %s23, 1
        %s306 = sand.u32 %s36, 1
        %s307 = scalar_lea.sflag [#allocation3], %s306
        %s308 = sand.u32 %s36, 1
        %s309 = smul.addr %s308, 192
        %s310 = scalar_lea.vmem [#allocation2], %s309
        // Predicated region
        $region45: #{pointpillars_forward.5} parent=43 // pred_check
          %p311 = pneg %p49
        $region46: #{pointpillars_forward.5} parent=43 // pred_check_branch
          %313 = sbr.rel (%p311) target = $region48
        $region47: #{pointpillars_forward.5} parent=43 // pred_region
          %314 = dma.done %s307, 3072
        $region48: #{pointpillars_forward.5} parent=43 // pred_fallthru
          _
        %s315 = sand.u32 %s28, 1
        %s316 = scalar_lea.sflag [#allocation6], %s315
        %s317 = sand.u32 %s64, 1
        %s318 = smul.addr %s317, 192
        %s319 = scalar_lea.vmem [#allocation5], %s318
        // Predicated region
        $region49: #{pointpillars_forward.5} parent=43 // pred_check
          %p320 = pneg %p77
        $region50: #{pointpillars_forward.5} parent=43 // pred_check_branch
          %322 = sbr.rel (%p320) target = $region52
        $region51: #{pointpillars_forward.5} parent=43 // pred_region
          %323 = dma.done %s316, 3072
        $region52: #{pointpillars_forward.5} parent=43 // pred_fallthru
          _
        // Predicated region
        $region53: #{pointpillars_forward.5} parent=43 // pred_check
          %p324 = pneg %p98
        $region54: #{pointpillars_forward.5} parent=43 // pred_check_branch
          %326 = sbr.rel (%p324) target = $region56
        $region55: #{pointpillars_forward.5} parent=43 // pred_region
          %327 = dma.done [#allocation6], 4608
        $region56: #{pointpillars_forward.5} parent=43 // pred_fallthru
          _
        // Predicated region
        $region57: #{pointpillars_forward.5} parent=43 // pred_check
          %p328 = pneg %p119
        $region58: #{pointpillars_forward.5} parent=43 // pred_check_branch
          %330 = sbr.rel (%p328) target = $region60
        $region59: #{pointpillars_forward.5} parent=43 // pred_region
          %331 = dma.done [#allocation9], 16
        $region60: #{pointpillars_forward.5} parent=43 // pred_fallthru
          _
        // Predicated region
        $region61: #{pointpillars_forward.5} parent=43 // pred_check
          %p332 = pneg %p140
        $region62: #{pointpillars_forward.5} parent=43 // pred_check_branch
          %334 = sbr.rel (%p332) target = $region64
        $region63: #{pointpillars_forward.5} parent=43 // pred_region
          %335 = dma.done [#allocation9], 512
        $region64: #{pointpillars_forward.5} parent=43 // pred_fallthru
          _
        // Predicated region
        $region65: #{pointpillars_forward.5} parent=43 // pred_check
          %p336 = pneg %p161
        $region66: #{pointpillars_forward.5} parent=43 // pred_check_branch
          %338 = sbr.rel (%p336) target = $region68
        $region67: #{pointpillars_forward.5} parent=43 // pred_region
          %339 = dma.done [#allocation12], 16
        $region68: #{pointpillars_forward.5} parent=43 // pred_fallthru
          _
        %s340 = sand.u32 %s36, 1
        %s341 = scalar_lea.sflag [#allocation3], %s340
        %s342 = sand.u32 %s36, 1
        %s343 = smul.addr %s342, 192
        %s344 = scalar_lea.vmem [#allocation2], %s343
        %p345 = pneg %p49
        %p346 = pneg %p46
        %s347 = sand.u32 %s28, 1
        %s348 = scalar_lea.sflag [#allocation6], %s347
        %s349 = sand.u32 %s64, 1
        %s350 = smul.addr %s349, 192
        %s351 = scalar_lea.vmem [#allocation5], %s350
        %p352 = pneg %p77
        %p353 = pneg %p74
        %p354 = pneg %p98
        %p355 = pneg %p95
        %p356 = pneg %p119
        %p357 = pneg %p116
        %p358 = pneg %p140
        %p359 = pneg %p137
        %p360 = pneg %p161
        %p361 = pneg %p158
        %p362 = pneg %p187
        %p363 = pneg %p184
        %s364 = sand.u32 %s174, 1
        %s365 = scalar_lea.sflag [#allocation4], %s364
        %s366 = sand.u32 %s174, 1
        %s367 = smul.addr %s366, 128
        %s368 = scalar_lea.vmem [#allocation13], %s367
        %s369 = smul.u32 8, %s28
        %s370 = sadd.s32 %s28, 1
        %s371 = smul.u32 8, %s370
        %s372 = smul.u32 16, %s28
        %v374 = vld [vmem:[%s310] sm:$0xff]
        %v375 = vld [vmem:[%s310 + $0x8] sm:$0xff]
        %v376 = vld [vmem:[%s310 + $0x10] sm:$0x3]
        %v377 = vld [vmem:[%s310 + $0x18] sm:$0xff]
        %v378 = vld [vmem:[%s310 + $0x20] sm:$0xff]
        %v379 = vld [vmem:[%s310 + $0x28] sm:$0x3]
        %v380 = vld [vmem:[%s310 + $0x30] sm:$0xff]
        %v381 = vld [vmem:[%s310 + $0x38] sm:$0xff]
        %v382 = vld [vmem:[%s310 + $0x40] sm:$0x3]
        %v383 = vld [vmem:[%s310 + $0x48] sm:$0xff]
        %v384 = vld [vmem:[%s310 + $0x50] sm:$0xff]
        %v385 = vld [vmem:[%s310 + $0x58] sm:$0x3]
        %v386 = vld [vmem:[%s310 + $0x60] sm:$0xff]
        %v387 = vld [vmem:[%s310 + $0x68] sm:$0xff]
        %v388 = vld [vmem:[%s310 + $0x70] sm:$0x3]
        %v389 = vld [vmem:[%s310 + $0x78] sm:$0xff]
        %v390 = vld [vmem:[%s310 + $0x80] sm:$0xff]
        %v391 = vld [vmem:[%s310 + $0x88] sm:$0x3]
        %v392 = vld [vmem:[%s310 + $0x90] sm:$0xff]
        %v393 = vld [vmem:[%s310 + $0x98] sm:$0xff]
        %v394 = vld [vmem:[%s310 + $0xa0] sm:$0x3]
        %v395 = vld [vmem:[%s310 + $0xa8] sm:$0xff]
        %v396 = vld [vmem:[%s310 + $0xb0] sm:$0xff]
        %v397 = vld [vmem:[%s310 + $0xb8] sm:$0x3]
        %v398 = vld [vmem:[%s319] sm:$0xff]
        %v399 = vld [vmem:[%s319 + $0x8] sm:$0xff]
        %v400 = vld [vmem:[%s319 + $0x10] sm:$0x3]
        %v401 = vld [vmem:[%s319 + $0x18] sm:$0xff]
        %v402 = vld [vmem:[%s319 + $0x20] sm:$0xff]
        %v403 = vld [vmem:[%s319 + $0x28] sm:$0x3]
        %v404 = vpack.c.bf16 %v375, %v374
        %v405 = vpack.c.bf16 %v378, %v377
        %v406 = vpack.c.bf16 %v381, %v380
        %v407 = vpack.c.bf16 %v384, %v383
        %v408 = vpack.c.bf16 %v387, %v386
        %v409 = vpack.c.bf16 %v390, %v389
        %v410 = vpack.c.bf16 %v393, %v392
        %v411 = vpack.c.bf16 %v396, %v395
        %v412 = vld [vmem:[#allocation7] sm:$0xf]
        %v413 = vld [vmem:[#allocation7 + $0x4] sm:$0xf]
        %v414 = vld [vmem:[#allocation7 + $0x8] sm:$0xf]
        %v415 = vld [vmem:[#allocation7 + $0xc] sm:$0xf]
        %v416 = vld [vmem:[#allocation7 + $0x10] sm:$0xf]
        %v417 = vld [vmem:[#allocation7 + $0x14] sm:$0xf]
        %v418 = vld [vmem:[#allocation7 + $0x18] sm:$0xf]
        %v419 = vld [vmem:[#allocation7 + $0x1c] sm:$0xf]
        %vm444 = vcmask 1046528
        %v445 = vrot.slane %v374, 1
        %v446 = vrot.slane %v375, 1
        %v447 = vsel %vm444, %v445, %v446
        %v448 = vrot.slane %v376, 1
        %v449 = vsel %vm444, %v446, %v448
        %v450 = vrot.slane %v377, 1
        %v451 = vrot.slane %v378, 1
        %v452 = vsel %vm444, %v450, %v451
        %v453 = vrot.slane %v379, 1
        %v454 = vsel %vm444, %v451, %v453
        %v455 = vrot.slane %v380, 1
        %v456 = vrot.slane %v381, 1
        %v457 = vsel %vm444, %v455, %v456
        %v458 = vrot.slane %v382, 1
        %v459 = vsel %vm444, %v456, %v458
        %v460 = vrot.slane %v383, 1
        %v461 = vrot.slane %v384, 1
        %v462 = vsel %vm444, %v460, %v461
        %v463 = vrot.slane %v385, 1
        %v464 = vsel %vm444, %v461, %v463
        %v465 = vrot.slane %v386, 1
        %v466 = vrot.slane %v387, 1
        %v467 = vsel %vm444, %v465, %v466
        %v468 = vrot.slane %v388, 1
        %v469 = vsel %vm444, %v466, %v468
        %v470 = vrot.slane %v389, 1
        %v471 = vrot.slane %v390, 1
        %v472 = vsel %vm444, %v470, %v471
        %v473 = vrot.slane %v391, 1
        %v474 = vsel %vm444, %v471, %v473
        %v475 = vrot.slane %v392, 1
        %v476 = vrot.slane %v393, 1
        %v477 = vsel %vm444, %v475, %v476
        %v478 = vrot.slane %v394, 1
        %v479 = vsel %vm444, %v476, %v478
        %v480 = vrot.slane %v395, 1
        %v481 = vrot.slane %v396, 1
        %v482 = vsel %vm444, %v480, %v481
        %v483 = vrot.slane %v397, 1
        %v484 = vsel %vm444, %v481, %v483
        %v501 = vpack.c.bf16 %v449, %v447
        %v502 = vpack.c.bf16 %v454, %v452
        %v503 = vpack.c.bf16 %v459, %v457
        %v504 = vpack.c.bf16 %v464, %v462
        %v505 = vpack.c.bf16 %v469, %v467
        %v506 = vpack.c.bf16 %v474, %v472
        %v507 = vpack.c.bf16 %v479, %v477
        %v508 = vpack.c.bf16 %v484, %v482
        %s509 = scalar_lea.vmem [#allocation7], 32
        %v510 = vld [vmem:[%s509] sm:$0xf]
        %v511 = vld [vmem:[%s509 + $0x4] sm:$0xf]
        %v512 = vld [vmem:[%s509 + $0x8] sm:$0xf]
        %v513 = vld [vmem:[%s509 + $0xc] sm:$0xf]
        %v514 = vld [vmem:[%s509 + $0x10] sm:$0xf]
        %v515 = vld [vmem:[%s509 + $0x14] sm:$0xf]
        %v516 = vld [vmem:[%s509 + $0x18] sm:$0xf]
        %v517 = vld [vmem:[%s509 + $0x1c] sm:$0xf]
        %v526 = vunpack.c.l.b16 %v510
        %v527 = vunpack.c.l.b16 %v511
        %v528 = vunpack.c.l.b16 %v512
        %v529 = vunpack.c.l.b16 %v513
        %v530 = vunpack.c.l.b16 %v514
        %v531 = vunpack.c.l.b16 %v515
        %v532 = vunpack.c.l.b16 %v516
        %v533 = vunpack.c.l.b16 %v517
        %v534 = vpack.c.b16 %v527, %v526
        %v535 = vpack.c.b16 %v529, %v528
        %v536 = vpack.c.b16 %v531, %v530
        %v537 = vpack.c.b16 %v533, %v532
        %vm542 = vcmask 523264
        %v544 = vsel %vm542, %v501, 0
        %v547 = vsel %vm542, %v502, 0
        %v550 = vsel %vm542, %v503, 0
        %v553 = vsel %vm542, %v504, 0
        %v556 = vsel %vm542, %v505, 0
        %v559 = vsel %vm542, %v506, 0
        %v562 = vsel %vm542, %v507, 0
        %v565 = vsel %vm542, %v508, 0
        %567 = vmatprep.subr.bf16.mxu0 0
        %568 = vmatpush1.bf16.msra.mxu0 %v534
        %569 = vmatprep.subr.bf16.mxu0 0
        %570 = vmatpush1.bf16.msra.mxu0 %v535
        %571 = vmatprep.subr.bf16.mxu0 0
        %572 = vmatpush1.bf16.msra.mxu0 %v536
        %573 = vmatprep.subr.bf16.mxu0 0
        %574 = vmatpush1.bf16.msra.mxu0 %v537
        %575 = vmatprep.subr.bf16.mxu0 0
        %576 = vmatpush1.bf16.msra.mxu0 0
        %577 = vmatprep.subr.bf16.mxu0 0
        %578 = vmatpush1.bf16.msra.mxu0 0
        %579 = vmatprep.subr.bf16.mxu0 0
        %580 = vmatpush1.bf16.msra.mxu0 0
        %581 = vmatprep.subr.bf16.mxu0 0
        %582 = vmatpush1.bf16.msra.mxu0 0
        %583 = vmatprep.subr.bf16.mxu0 0
        %584 = vmatpush1.bf16.msra.mxu0 0
        %585 = vmatprep.subr.bf16.mxu0 0
        %586 = vmatpush1.bf16.msra.mxu0 0
        %587 = vmatprep.subr.bf16.mxu0 0
        %588 = vmatpush1.bf16.msra.mxu0 0
        %589 = vmatprep.subr.bf16.mxu0 0
        %590 = vmatpush1.bf16.msra.mxu0 0
        %591 = vmatprep.subr.bf16.mxu0 0
        %592 = vmatpush1.bf16.msra.mxu0 0
        %593 = vmatprep.subr.bf16.mxu0 0
        %594 = vmatpush1.bf16.msra.mxu0 0
        %595 = vmatprep.subr.bf16.mxu0 0
        %596 = vmatpush1.bf16.msra.mxu0 0
        %597 = vmatprep.subr.bf16.mxu0 0
        %598 = vmatpush1.bf16.msra.mxu0 0
        %599 = vmatprep.mubr.bf16.mxu0 0
        %600 = vmatmul.mubr.bf16.gmra.mrb[0].mxu0 %v544
        %v601 = vpop.f32.mrb[0].mxu0
        %v602 = vadd.f32 0.0, %v601
        %v603 = vpop.f32.mrb[0].mxu0
        %v604 = vpop.f32.mrb[0].mxu0
        %v605 = vadd.f32 0.0, %v604
        %v606 = vpop.f32.mrb[0].mxu0
        %607 = vmatprep.mubr.bf16.mxu0 0
        %608 = vmatmul.mubr.bf16.gmra.mrb[0].mxu0 %v547
        %v609 = vpop.f32.mrb[0].mxu0
        %v610 = vadd.f32 0.0, %v609
        %v611 = vpop.f32.mrb[0].mxu0
        %v612 = vpop.f32.mrb[0].mxu0
        %v613 = vadd.f32 0.0, %v612
        %v614 = vpop.f32.mrb[0].mxu0
        %615 = vmatprep.mubr.bf16.mxu0 0
        %616 = vmatmul.mubr.bf16.gmra.mrb[0].mxu0 %v550
        %v617 = vpop.f32.mrb[0].mxu0
        %v618 = vadd.f32 0.0, %v617
        %v619 = vpop.f32.mrb[0].mxu0
        %v620 = vpop.f32.mrb[0].mxu0
        %v621 = vadd.f32 0.0, %v620
        %v622 = vpop.f32.mrb[0].mxu0
        %623 = vmatprep.mubr.bf16.mxu0 0
        %624 = vmatmul.mubr.bf16.gmra.mrb[0].mxu0 %v553
        %v625 = vpop.f32.mrb[0].mxu0
        %v626 = vadd.f32 0.0, %v625
        %v627 = vpop.f32.mrb[0].mxu0
        %v628 = vpop.f32.mrb[0].mxu0
        %v629 = vadd.f32 0.0, %v628
        %v630 = vpop.f32.mrb[0].mxu0
        %631 = vmatprep.mubr.bf16.mxu0 0
        %632 = vmatmul.mubr.bf16.gmra.mrb[0].mxu0 %v556
        %v633 = vpop.f32.mrb[0].mxu0
        %v634 = vadd.f32 0.0, %v633
        %v635 = vpop.f32.mrb[0].mxu0
        %v636 = vpop.f32.mrb[0].mxu0
        %v637 = vadd.f32 0.0, %v636
        %v638 = vpop.f32.mrb[0].mxu0
        %639 = vmatprep.mubr.bf16.mxu0 0
        %640 = vmatmul.mubr.bf16.gmra.mrb[0].mxu0 %v559
        %v641 = vpop.f32.mrb[0].mxu0
        %v642 = vadd.f32 0.0, %v641
        %v643 = vpop.f32.mrb[0].mxu0
        %v644 = vpop.f32.mrb[0].mxu0
        %v645 = vadd.f32 0.0, %v644
        %v646 = vpop.f32.mrb[0].mxu0
        %647 = vmatprep.mubr.bf16.mxu0 0
        %648 = vmatmul.mubr.bf16.gmra.mrb[0].mxu0 %v562
        %v649 = vpop.f32.mrb[0].mxu0
        %v650 = vadd.f32 0.0, %v649
        %v651 = vpop.f32.mrb[0].mxu0
        %v652 = vpop.f32.mrb[0].mxu0
        %v653 = vadd.f32 0.0, %v652
        %v654 = vpop.f32.mrb[0].mxu0
        %655 = vmatprep.mubr.bf16.mxu0 0
        %656 = vmatmul.mubr.bf16.gmra.mrb[0].mxu0 %v565
        %v657 = vpop.f32.mrb[0].mxu0
        %v658 = vadd.f32 0.0, %v657
        %v659 = vpop.f32.mrb[0].mxu0
        %v660 = vpop.f32.mrb[0].mxu0
        %v661 = vadd.f32 0.0, %v660
        %v662 = vpop.f32.mrb[0].mxu0
        %663 = vdwg.mxu0
        %v672 = vunpack.c.l.b16 %v412
        %v673 = vunpack.c.l.b16 %v413
        %v674 = vunpack.c.l.b16 %v414
        %v675 = vunpack.c.l.b16 %v415
        %v676 = vunpack.c.l.b16 %v416
        %v677 = vunpack.c.l.b16 %v417
        %v678 = vunpack.c.l.b16 %v418
        %v679 = vunpack.c.l.b16 %v419
        %v680 = vpack.c.b16 %v673, %v672
        %v681 = vpack.c.b16 %v675, %v674
        %v682 = vpack.c.b16 %v677, %v676
        %v683 = vpack.c.b16 %v679, %v678
        %v689 = vsel %vm542, %v404, 0
        %v692 = vsel %vm542, %v405, 0
        %v695 = vsel %vm542, %v406, 0
        %v698 = vsel %vm542, %v407, 0
        %v701 = vsel %vm542, %v408, 0
        %v704 = vsel %vm542, %v409, 0
        %v707 = vsel %vm542, %v410, 0
        %v710 = vsel %vm542, %v411, 0
        %712 = vmatprep.subr.bf16.mxu0 0
        %713 = vmatpush1.bf16.msra.mxu0 %v680
        %714 = vmatprep.subr.bf16.mxu0 0
        %715 = vmatpush1.bf16.msra.mxu0 %v681
        %716 = vmatprep.subr.bf16.mxu0 0
        %717 = vmatpush1.bf16.msra.mxu0 %v682
        %718 = vmatprep.subr.bf16.mxu0 0
        %719 = vmatpush1.bf16.msra.mxu0 %v683
        %720 = vmatprep.subr.bf16.mxu0 0
        %721 = vmatpush1.bf16.msra.mxu0 0
        %722 = vmatprep.subr.bf16.mxu0 0
        %723 = vmatpush1.bf16.msra.mxu0 0
        %724 = vmatprep.subr.bf16.mxu0 0
        %725 = vmatpush1.bf16.msra.mxu0 0
        %726 = vmatprep.subr.bf16.mxu0 0
        %727 = vmatpush1.bf16.msra.mxu0 0
        %728 = vmatprep.subr.bf16.mxu0 0
        %729 = vmatpush1.bf16.msra.mxu0 0
        %730 = vmatprep.subr.bf16.mxu0 0
        %731 = vmatpush1.bf16.msra.mxu0 0
        %732 = vmatprep.subr.bf16.mxu0 0
        %733 = vmatpush1.bf16.msra.mxu0 0
        %734 = vmatprep.subr.bf16.mxu0 0
        %735 = vmatpush1.bf16.msra.mxu0 0
        %736 = vmatprep.subr.bf16.mxu0 0
        %737 = vmatpush1.bf16.msra.mxu0 0
        %738 = vmatprep.subr.bf16.mxu0 0
        %739 = vmatpush1.bf16.msra.mxu0 0
        %740 = vmatprep.subr.bf16.mxu0 0
        %741 = vmatpush1.bf16.msra.mxu0 0
        %742 = vmatprep.subr.bf16.mxu0 0
        %743 = vmatpush1.bf16.msra.mxu0 0
        %744 = vmatprep.mubr.bf16.mxu0 0
        %745 = vmatmul.mubr.bf16.gmra.mrb[0].mxu0 %v689
        %v746 = vpop.f32.mrb[0].mxu0
        %v747 = vadd.f32 %v602, %v746
        %v748 = vpop.f32.mrb[0].mxu0
        %v749 = vpop.f32.mrb[0].mxu0
        %v750 = vadd.f32 %v605, %v749
        %v751 = vpop.f32.mrb[0].mxu0
        %752 = vmatprep.mubr.bf16.mxu0 0
        %753 = vmatmul.mubr.bf16.gmra.mrb[0].mxu0 %v692
        %v754 = vpop.f32.mrb[0].mxu0
        %v755 = vadd.f32 %v610, %v754
        %v756 = vpop.f32.mrb[0].mxu0
        %v757 = vpop.f32.mrb[0].mxu0
        %v758 = vadd.f32 %v613, %v757
        %v759 = vpop.f32.mrb[0].mxu0
        %760 = vmatprep.mubr.bf16.mxu0 0
        %761 = vmatmul.mubr.bf16.gmra.mrb[0].mxu0 %v695
        %v762 = vpop.f32.mrb[0].mxu0
        %v763 = vadd.f32 %v618, %v762
        %v764 = vpop.f32.mrb[0].mxu0
        %v765 = vpop.f32.mrb[0].mxu0
        %v766 = vadd.f32 %v621, %v765
        %v767 = vpop.f32.mrb[0].mxu0
        %768 = vmatprep.mubr.bf16.mxu0 0
        %769 = vmatmul.mubr.bf16.gmra.mrb[0].mxu0 %v698
        %v770 = vpop.f32.mrb[0].mxu0
        %v771 = vadd.f32 %v626, %v770
        %v772 = vpop.f32.mrb[0].mxu0
        %v773 = vpop.f32.mrb[0].mxu0
        %v774 = vadd.f32 %v629, %v773
        %v775 = vpop.f32.mrb[0].mxu0
        %776 = vmatprep.mubr.bf16.mxu0 0
        %777 = vmatmul.mubr.bf16.gmra.mrb[0].mxu0 %v701
        %v778 = vpop.f32.mrb[0].mxu0
        %v779 = vadd.f32 %v634, %v778
        %v780 = vpop.f32.mrb[0].mxu0
        %v781 = vpop.f32.mrb[0].mxu0
        %v782 = vadd.f32 %v637, %v781
        %v783 = vpop.f32.mrb[0].mxu0
        %784 = vmatprep.mubr.bf16.mxu0 0
        %785 = vmatmul.mubr.bf16.gmra.mrb[0].mxu0 %v704
        %v786 = vpop.f32.mrb[0].mxu0
        %v787 = vadd.f32 %v642, %v786
        %v788 = vpop.f32.mrb[0].mxu0
        %v789 = vpop.f32.mrb[0].mxu0
        %v790 = vadd.f32 %v645, %v789
        %v791 = vpop.f32.mrb[0].mxu0
        %792 = vmatprep.mubr.bf16.mxu0 0
        %793 = vmatmul.mubr.bf16.gmra.mrb[0].mxu0 %v707
        %v794 = vpop.f32.mrb[0].mxu0
        %v795 = vadd.f32 %v650, %v794
        %v796 = vpop.f32.mrb[0].mxu0
        %v797 = vpop.f32.mrb[0].mxu0
        %v798 = vadd.f32 %v653, %v797
        %v799 = vpop.f32.mrb[0].mxu0
        %800 = vmatprep.mubr.bf16.mxu0 0
        %801 = vmatmul.mubr.bf16.gmra.mrb[0].mxu0 %v710
        %v802 = vpop.f32.mrb[0].mxu0
        %v803 = vadd.f32 %v658, %v802
        %v804 = vpop.f32.mrb[0].mxu0
        %v805 = vpop.f32.mrb[0].mxu0
        %v806 = vadd.f32 %v661, %v805
        %v807 = vpop.f32.mrb[0].mxu0
        %808 = vdwg.mxu0
        %vm809 = vcmask 1045504
        %v810 = vrot.slane %v374, 2
        %v811 = vrot.slane %v375, 2
        %v812 = vsel %vm809, %v810, %v811
        %v813 = vrot.slane %v376, 2
        %v814 = vsel %vm809, %v811, %v813
        %v815 = vrot.slane %v377, 2
        %v816 = vrot.slane %v378, 2
        %v817 = vsel %vm809, %v815, %v816
        %v818 = vrot.slane %v379, 2
        %v819 = vsel %vm809, %v816, %v818
        %v820 = vrot.slane %v380, 2
        %v821 = vrot.slane %v381, 2
        %v822 = vsel %vm809, %v820, %v821
        %v823 = vrot.slane %v382, 2
        %v824 = vsel %vm809, %v821, %v823
        %v825 = vrot.slane %v383, 2
        %v826 = vrot.slane %v384, 2
        %v827 = vsel %vm809, %v825, %v826
        %v828 = vrot.slane %v385, 2
        %v829 = vsel %vm809, %v826, %v828
        %v830 = vrot.slane %v386, 2
        %v831 = vrot.slane %v387, 2
        %v832 = vsel %vm809, %v830, %v831
        %v833 = vrot.slane %v388, 2
        %v834 = vsel %vm809, %v831, %v833
        %v835 = vrot.slane %v389, 2
        %v836 = vrot.slane %v390, 2
        %v837 = vsel %vm809, %v835, %v836
        %v838 = vrot.slane %v391, 2
        %v839 = vsel %vm809, %v836, %v838
        %v840 = vrot.slane %v392, 2
        %v841 = vrot.slane %v393, 2
        %v842 = vsel %vm809, %v840, %v841
        %v843 = vrot.slane %v394, 2
        %v844 = vsel %vm809, %v841, %v843
        %v845 = vrot.slane %v395, 2
        %v846 = vrot.slane %v396, 2
        %v847 = vsel %vm809, %v845, %v846
        %v848 = vrot.slane %v397, 2
        %v849 = vsel %vm809, %v846, %v848
        %v866 = vpack.c.bf16 %v814, %v812
        %v867 = vpack.c.bf16 %v819, %v817
        %v868 = vpack.c.bf16 %v824, %v822
        %v869 = vpack.c.bf16 %v829, %v827
        %v870 = vpack.c.bf16 %v834, %v832
        %v871 = vpack.c.bf16 %v839, %v837
        %v872 = vpack.c.bf16 %v844, %v842
        %v873 = vpack.c.bf16 %v849, %v847
        %s874 = scalar_lea.vmem [#allocation7], 64
        %v875 = vld [vmem:[%s874] sm:$0xf]
        %v876 = vld [vmem:[%s874 + $0x4] sm:$0xf]
        %v877 = vld [vmem:[%s874 + $0x8] sm:$0xf]
        %v878 = vld [vmem:[%s874 + $0xc] sm:$0xf]
        %v879 = vld [vmem:[%s874 + $0x10] sm:$0xf]
        %v880 = vld [vmem:[%s874 + $0x14] sm:$0xf]
        %v881 = vld [vmem:[%s874 + $0x18] sm:$0xf]
        %v882 = vld [vmem:[%s874 + $0x1c] sm:$0xf]
        %v891 = vunpack.c.l.b16 %v875
        %v892 = vunpack.c.l.b16 %v876
        %v893 = vunpack.c.l.b16 %v877
        %v894 = vunpack.c.l.b16 %v878
        %v895 = vunpack.c.l.b16 %v879
        %v896 = vunpack.c.l.b16 %v880
        %v897 = vunpack.c.l.b16 %v881
        %v898 = vunpack.c.l.b16 %v882
        %v899 = vpack.c.b16 %v892, %v891
        %v900 = vpack.c.b16 %v894, %v893
        %v901 = vpack.c.b16 %v896, %v895
        %v902 = vpack.c.b16 %v898, %v897
        %v908 = vsel %vm542, %v866, 0
        %v911 = vsel %vm542, %v867, 0
        %v914 = vsel %vm542, %v868, 0
        %v917 = vsel %vm542, %v869, 0
        %v920 = vsel %vm542, %v870, 0
        %v923 = vsel %vm542, %v871, 0
        %v926 = vsel %vm542, %v872, 0
        %v929 = vsel %vm542, %v873, 0
        %931 = vmatprep.subr.bf16.mxu0 0
        %932 = vmatpush1.bf16.msra.mxu0 %v899
        %933 = vmatprep.subr.bf16.mxu0 0
        %934 = vmatpush1.bf16.msra.mxu0 %v900
        %935 = vmatprep.subr.bf16.mxu0 0
        %936 = vmatpush1.bf16.msra.mxu0 %v901
        %937 = vmatprep.subr.bf16.mxu0 0
        %938 = vmatpush1.bf16.msra.mxu0 %v902
        %939 = vmatprep.subr.bf16.mxu0 0
        %940 = vmatpush1.bf16.msra.mxu0 0
        %941 = vmatprep.subr.bf16.mxu0 0
        %942 = vmatpush1.bf16.msra.mxu0 0
        %943 = vmatprep.subr.bf16.mxu0 0
        %944 = vmatpush1.bf16.msra.mxu0 0
        %945 = vmatprep.subr.bf16.mxu0 0
        %946 = vmatpush1.bf16.msra.mxu0 0
        %947 = vmatprep.subr.bf16.mxu0 0
        %948 = vmatpush1.bf16.msra.mxu0 0
        %949 = vmatprep.subr.bf16.mxu0 0
        %950 = vmatpush1.bf16.msra.mxu0 0
        %951 = vmatprep.subr.bf16.mxu0 0
        %952 = vmatpush1.bf16.msra.mxu0 0
        %953 = vmatprep.subr.bf16.mxu0 0
        %954 = vmatpush1.bf16.msra.mxu0 0
        %955 = vmatprep.subr.bf16.mxu0 0
        %956 = vmatpush1.bf16.msra.mxu0 0
        %957 = vmatprep.subr.bf16.mxu0 0
        %958 = vmatpush1.bf16.msra.mxu0 0
        %959 = vmatprep.subr.bf16.mxu0 0
        %960 = vmatpush1.bf16.msra.mxu0 0
        %961 = vmatprep.subr.bf16.mxu0 0
        %962 = vmatpush1.bf16.msra.mxu0 0
        %963 = vmatprep.mubr.bf16.mxu0 0
        %964 = vmatmul.mubr.bf16.gmra.mrb[0].mxu0 %v908
        %v965 = vpop.f32.mrb[0].mxu0
        %v966 = vadd.f32 0.0, %v965
        %v967 = vpop.f32.mrb[0].mxu0
        %v968 = vpop.f32.mrb[0].mxu0
        %v969 = vadd.f32 0.0, %v968
        %v970 = vpop.f32.mrb[0].mxu0
        %971 = vmatprep.mubr.bf16.mxu0 0
        %972 = vmatmul.mubr.bf16.gmra.mrb[0].mxu0 %v911
        %v973 = vpop.f32.mrb[0].mxu0
        %v974 = vadd.f32 0.0, %v973
        %v975 = vpop.f32.mrb[0].mxu0
        %v976 = vpop.f32.mrb[0].mxu0
        %v977 = vadd.f32 0.0, %v976
        %v978 = vpop.f32.mrb[0].mxu0
        %979 = vmatprep.mubr.bf16.mxu0 0
        %980 = vmatmul.mubr.bf16.gmra.mrb[0].mxu0 %v914
        %v981 = vpop.f32.mrb[0].mxu0
        %v982 = vadd.f32 0.0, %v981
        %v983 = vpop.f32.mrb[0].mxu0
        %v984 = vpop.f32.mrb[0].mxu0
        %v985 = vadd.f32 0.0, %v984
        %v986 = vpop.f32.mrb[0].mxu0
        %987 = vmatprep.mubr.bf16.mxu0 0
        %988 = vmatmul.mubr.bf16.gmra.mrb[0].mxu0 %v917
        %v989 = vpop.f32.mrb[0].mxu0
        %v990 = vadd.f32 0.0, %v989
        %v991 = vpop.f32.mrb[0].mxu0
        %v992 = vpop.f32.mrb[0].mxu0
        %v993 = vadd.f32 0.0, %v992
        %v994 = vpop.f32.mrb[0].mxu0
        %995 = vmatprep.mubr.bf16.mxu0 0
        %996 = vmatmul.mubr.bf16.gmra.mrb[0].mxu0 %v920
        %v997 = vpop.f32.mrb[0].mxu0
        %v998 = vadd.f32 0.0, %v997
        %v999 = vpop.f32.mrb[0].mxu0
        %v1000 = vpop.f32.mrb[0].mxu0
        %v1001 = vadd.f32 0.0, %v1000
        %v1002 = vpop.f32.mrb[0].mxu0
        %1003 = vmatprep.mubr.bf16.mxu0 0
        %1004 = vmatmul.mubr.bf16.gmra.mrb[0].mxu0 %v923
        %v1005 = vpop.f32.mrb[0].mxu0
        %v1006 = vadd.f32 0.0, %v1005
        %v1007 = vpop.f32.mrb[0].mxu0
        %v1008 = vpop.f32.mrb[0].mxu0
        %v1009 = vadd.f32 0.0, %v1008
        %v1010 = vpop.f32.mrb[0].mxu0
        %1011 = vmatprep.mubr.bf16.mxu0 0
        %1012 = vmatmul.mubr.bf16.gmra.mrb[0].mxu0 %v926
        %v1013 = vpop.f32.mrb[0].mxu0
        %v1014 = vadd.f32 0.0, %v1013
        %v1015 = vpop.f32.mrb[0].mxu0
        %v1016 = vpop.f32.mrb[0].mxu0
        %v1017 = vadd.f32 0.0, %v1016
        %v1018 = vpop.f32.mrb[0].mxu0
        %1019 = vmatprep.mubr.bf16.mxu0 0
        %1020 = vmatmul.mubr.bf16.gmra.mrb[0].mxu0 %v929
        %v1021 = vpop.f32.mrb[0].mxu0
        %v1022 = vadd.f32 0.0, %v1021
        %v1023 = vpop.f32.mrb[0].mxu0
        %v1024 = vpop.f32.mrb[0].mxu0
        %v1025 = vadd.f32 0.0, %v1024
        %v1026 = vpop.f32.mrb[0].mxu0
        %1027 = vdwg.mxu0
        %v1028 = vadd.f32 %v747, %v966
        %v1029 = vadd.f32 %v750, %v969
        %v1030 = vadd.f32 %v755, %v974
        %v1031 = vadd.f32 %v758, %v977
        %v1032 = vadd.f32 %v763, %v982
        %v1033 = vadd.f32 %v766, %v985
        %v1034 = vadd.f32 %v771, %v990
        %v1035 = vadd.f32 %v774, %v993
        %v1036 = vadd.f32 %v779, %v998
        %v1037 = vadd.f32 %v782, %v1001
        %v1038 = vadd.f32 %v787, %v1006
        %v1039 = vadd.f32 %v790, %v1009
        %v1040 = vadd.f32 %v795, %v1014
        %v1041 = vadd.f32 %v798, %v1017
        %v1042 = vadd.f32 %v803, %v1022
        %v1043 = vadd.f32 %v806, %v1025
        %v1044 = vpack.c.bf16 %v399, %v398
        %s1045 = scalar_lea.vmem [#allocation7], 96
        %v1046 = vld [vmem:[%s1045] sm:$0xf]
        %v1047 = vld [vmem:[%s1045 + $0x4] sm:$0xf]
        %v1048 = vld [vmem:[%s1045 + $0x8] sm:$0xf]
        %v1049 = vld [vmem:[%s1045 + $0xc] sm:$0xf]
        %v1050 = vld [vmem:[%s1045 + $0x10] sm:$0xf]
        %v1051 = vld [vmem:[%s1045 + $0x14] sm:$0xf]
        %v1052 = vld [vmem:[%s1045 + $0x18] sm:$0xf]
        %v1053 = vld [vmem:[%s1045 + $0x1c] sm:$0xf]
        %v1062 = vunpack.c.l.b16 %v1046
        %v1063 = vunpack.c.l.b16 %v1047
        %v1064 = vunpack.c.l.b16 %v1048
        %v1065 = vunpack.c.l.b16 %v1049
        %v1066 = vunpack.c.l.b16 %v1050
        %v1067 = vunpack.c.l.b16 %v1051
        %v1068 = vunpack.c.l.b16 %v1052
        %v1069 = vunpack.c.l.b16 %v1053
        %v1070 = vpack.c.b16 %v1063, %v1062
        %v1071 = vpack.c.b16 %v1065, %v1064
        %v1072 = vpack.c.b16 %v1067, %v1066
        %v1073 = vpack.c.b16 %v1069, %v1068
        %v1079 = vsel %vm542, %v1044, 0
        %1081 = vmatprep.subr.bf16.mxu0 0
        %1082 = vmatpush1.bf16.msra.mxu0 %v1070
        %1083 = vmatprep.subr.bf16.mxu0 0
        %1084 = vmatpush1.bf16.msra.mxu0 %v1071
        %1085 = vmatprep.subr.bf16.mxu0 0
        %1086 = vmatpush1.bf16.msra.mxu0 %v1072
        %1087 = vmatprep.subr.bf16.mxu0 0
        %1088 = vmatpush1.bf16.msra.mxu0 %v1073
        %1089 = vmatprep.subr.bf16.mxu0 0
        %1090 = vmatpush1.bf16.msra.mxu0 0
        %1091 = vmatprep.subr.bf16.mxu0 0
        %1092 = vmatpush1.bf16.msra.mxu0 0
        %1093 = vmatprep.subr.bf16.mxu0 0
        %1094 = vmatpush1.bf16.msra.mxu0 0
        %1095 = vmatprep.subr.bf16.mxu0 0
        %1096 = vmatpush1.bf16.msra.mxu0 0
        %1097 = vmatprep.subr.bf16.mxu0 0
        %1098 = vmatpush1.bf16.msra.mxu0 0
        %1099 = vmatprep.subr.bf16.mxu0 0
        %1100 = vmatpush1.bf16.msra.mxu0 0
        %1101 = vmatprep.subr.bf16.mxu0 0
        %1102 = vmatpush1.bf16.msra.mxu0 0
        %1103 = vmatprep.subr.bf16.mxu0 0
        %1104 = vmatpush1.bf16.msra.mxu0 0
        %1105 = vmatprep.subr.bf16.mxu0 0
        %1106 = vmatpush1.bf16.msra.mxu0 0
        %1107 = vmatprep.subr.bf16.mxu0 0
        %1108 = vmatpush1.bf16.msra.mxu0 0
        %1109 = vmatprep.subr.bf16.mxu0 0
        %1110 = vmatpush1.bf16.msra.mxu0 0
        %1111 = vmatprep.subr.bf16.mxu0 0
        %1112 = vmatpush1.bf16.msra.mxu0 0
        %1113 = vmatprep.mubr.bf16.mxu0 0
        %1114 = vmatmul.mubr.bf16.gmra.mrb[0].mxu0 %v692
        %v1115 = vpop.f32.mrb[0].mxu0
        %v1116 = vadd.f32 0.0, %v1115
        %v1117 = vpop.f32.mrb[0].mxu0
        %v1118 = vpop.f32.mrb[0].mxu0
        %v1119 = vadd.f32 0.0, %v1118
        %v1120 = vpop.f32.mrb[0].mxu0
        %1121 = vmatprep.mubr.bf16.mxu0 0
        %1122 = vmatmul.mubr.bf16.gmra.mrb[0].mxu0 %v695
        %v1123 = vpop.f32.mrb[0].mxu0
        %v1124 = vadd.f32 0.0, %v1123
        %v1125 = vpop.f32.mrb[0].mxu0
        %v1126 = vpop.f32.mrb[0].mxu0
        %v1127 = vadd.f32 0.0, %v1126
        %v1128 = vpop.f32.mrb[0].mxu0
        %1129 = vmatprep.mubr.bf16.mxu0 0
        %1130 = vmatmul.mubr.bf16.gmra.mrb[0].mxu0 %v698
        %v1131 = vpop.f32.mrb[0].mxu0
        %v1132 = vadd.f32 0.0, %v1131
        %v1133 = vpop.f32.mrb[0].mxu0
        %v1134 = vpop.f32.mrb[0].mxu0
        %v1135 = vadd.f32 0.0, %v1134
        %v1136 = vpop.f32.mrb[0].mxu0
        %1137 = vmatprep.mubr.bf16.mxu0 0
        %1138 = vmatmul.mubr.bf16.gmra.mrb[0].mxu0 %v701
        %v1139 = vpop.f32.mrb[0].mxu0
        %v1140 = vadd.f32 0.0, %v1139
        %v1141 = vpop.f32.mrb[0].mxu0
        %v1142 = vpop.f32.mrb[0].mxu0
        %v1143 = vadd.f32 0.0, %v1142
        %v1144 = vpop.f32.mrb[0].mxu0
        %1145 = vmatprep.mubr.bf16.mxu0 0
        %1146 = vmatmul.mubr.bf16.gmra.mrb[0].mxu0 %v704
        %v1147 = vpop.f32.mrb[0].mxu0
        %v1148 = vadd.f32 0.0, %v1147
        %v1149 = vpop.f32.mrb[0].mxu0
        %v1150 = vpop.f32.mrb[0].mxu0
        %v1151 = vadd.f32 0.0, %v1150
        %v1152 = vpop.f32.mrb[0].mxu0
        %1153 = vmatprep.mubr.bf16.mxu0 0
        %1154 = vmatmul.mubr.bf16.gmra.mrb[0].mxu0 %v707
        %v1155 = vpop.f32.mrb[0].mxu0
        %v1156 = vadd.f32 0.0, %v1155
        %v1157 = vpop.f32.mrb[0].mxu0
        %v1158 = vpop.f32.mrb[0].mxu0
        %v1159 = vadd.f32 0.0, %v1158
        %v1160 = vpop.f32.mrb[0].mxu0
        %1161 = vmatprep.mubr.bf16.mxu0 0
        %1162 = vmatmul.mubr.bf16.gmra.mrb[0].mxu0 %v710
        %v1163 = vpop.f32.mrb[0].mxu0
        %v1164 = vadd.f32 0.0, %v1163
        %v1165 = vpop.f32.mrb[0].mxu0
        %v1166 = vpop.f32.mrb[0].mxu0
        %v1167 = vadd.f32 0.0, %v1166
        %v1168 = vpop.f32.mrb[0].mxu0
        %1169 = vmatprep.mubr.bf16.mxu0 0
        %1170 = vmatmul.mubr.bf16.gmra.mrb[0].mxu0 %v1079
        %v1171 = vpop.f32.mrb[0].mxu0
        %v1172 = vadd.f32 0.0, %v1171
        %v1173 = vpop.f32.mrb[0].mxu0
        %v1174 = vpop.f32.mrb[0].mxu0
        %v1175 = vadd.f32 0.0, %v1174
        %v1176 = vpop.f32.mrb[0].mxu0
        %1177 = vdwg.mxu0
        %v1178 = vadd.f32 %v1028, %v1116
        %v1179 = vadd.f32 %v1029, %v1119
        %v1180 = vadd.f32 %v1030, %v1124
        %v1181 = vadd.f32 %v1031, %v1127
        %v1182 = vadd.f32 %v1032, %v1132
        %v1183 = vadd.f32 %v1033, %v1135
        %v1184 = vadd.f32 %v1034, %v1140
        %v1185 = vadd.f32 %v1035, %v1143
        %v1186 = vadd.f32 %v1036, %v1148
        %v1187 = vadd.f32 %v1037, %v1151
        %v1188 = vadd.f32 %v1038, %v1156
        %v1189 = vadd.f32 %v1039, %v1159
        %v1190 = vadd.f32 %v1040, %v1164
        %v1191 = vadd.f32 %v1041, %v1167
        %v1192 = vadd.f32 %v1042, %v1172
        %v1193 = vadd.f32 %v1043, %v1175
        %v1197 = vrot.slane %v398, 1
        %v1198 = vrot.slane %v399, 1
        %v1199 = vsel %vm444, %v1197, %v1198
        %v1200 = vrot.slane %v400, 1
        %v1201 = vsel %vm444, %v1198, %v1200
        %v1204 = vpack.c.bf16 %v1201, %v1199
        %s1205 = scalar_lea.vmem [#allocation7], 128
        %v1206 = vld [vmem:[%s1205] sm:$0xf]
        %v1207 = vld [vmem:[%s1205 + $0x4] sm:$0xf]
        %v1208 = vld [vmem:[%s1205 + $0x8] sm:$0xf]
        %v1209 = vld [vmem:[%s1205 + $0xc] sm:$0xf]
        %v1210 = vld [vmem:[%s1205 + $0x10] sm:$0xf]
        %v1211 = vld [vmem:[%s1205 + $0x14] sm:$0xf]
        %v1212 = vld [vmem:[%s1205 + $0x18] sm:$0xf]
        %v1213 = vld [vmem:[%s1205 + $0x1c] sm:$0xf]
        %v1222 = vunpack.c.l.b16 %v1206
        %v1223 = vunpack.c.l.b16 %v1207
        %v1224 = vunpack.c.l.b16 %v1208
        %v1225 = vunpack.c.l.b16 %v1209
        %v1226 = vunpack.c.l.b16 %v1210
        %v1227 = vunpack.c.l.b16 %v1211
        %v1228 = vunpack.c.l.b16 %v1212
        %v1229 = vunpack.c.l.b16 %v1213
        %v1230 = vpack.c.b16 %v1223, %v1222
        %v1231 = vpack.c.b16 %v1225, %v1224
        %v1232 = vpack.c.b16 %v1227, %v1226
        %v1233 = vpack.c.b16 %v1229, %v1228
        %v1239 = vsel %vm542, %v1204, 0
        %1241 = vmatprep.subr.bf16.mxu0 0
        %1242 = vmatpush1.bf16.msra.mxu0 %v1230
        %1243 = vmatprep.subr.bf16.mxu0 0
        %1244 = vmatpush1.bf16.msra.mxu0 %v1231
        %1245 = vmatprep.subr.bf16.mxu0 0
        %1246 = vmatpush1.bf16.msra.mxu0 %v1232
        %1247 = vmatprep.subr.bf16.mxu0 0
        %1248 = vmatpush1.bf16.msra.mxu0 %v1233
        %1249 = vmatprep.subr.bf16.mxu0 0
        %1250 = vmatpush1.bf16.msra.mxu0 0
        %1251 = vmatprep.subr.bf16.mxu0 0
        %1252 = vmatpush1.bf16.msra.mxu0 0
        %1253 = vmatprep.subr.bf16.mxu0 0
        %1254 = vmatpush1.bf16.msra.mxu0 0
        %1255 = vmatprep.subr.bf16.mxu0 0
        %1256 = vmatpush1.bf16.msra.mxu0 0
        %1257 = vmatprep.subr.bf16.mxu0 0
        %1258 = vmatpush1.bf16.msra.mxu0 0
        %1259 = vmatprep.subr.bf16.mxu0 0
        %1260 = vmatpush1.bf16.msra.mxu0 0
        %1261 = vmatprep.subr.bf16.mxu0 0
        %1262 = vmatpush1.bf16.msra.mxu0 0
        %1263 = vmatprep.subr.bf16.mxu0 0
        %1264 = vmatpush1.bf16.msra.mxu0 0
        %1265 = vmatprep.subr.bf16.mxu0 0
        %1266 = vmatpush1.bf16.msra.mxu0 0
        %1267 = vmatprep.subr.bf16.mxu0 0
        %1268 = vmatpush1.bf16.msra.mxu0 0
        %1269 = vmatprep.subr.bf16.mxu0 0
        %1270 = vmatpush1.bf16.msra.mxu0 0
        %1271 = vmatprep.subr.bf16.mxu0 0
        %1272 = vmatpush1.bf16.msra.mxu0 0
        %1273 = vmatprep.mubr.bf16.mxu0 0
        %1274 = vmatmul.mubr.bf16.gmra.mrb[0].mxu0 %v547
        %v1275 = vpop.f32.mrb[0].mxu0
        %v1276 = vadd.f32 0.0, %v1275
        %v1277 = vpop.f32.mrb[0].mxu0
        %v1278 = vpop.f32.mrb[0].mxu0
        %v1279 = vadd.f32 0.0, %v1278
        %v1280 = vpop.f32.mrb[0].mxu0
        %1281 = vmatprep.mubr.bf16.mxu0 0
        %1282 = vmatmul.mubr.bf16.gmra.mrb[0].mxu0 %v550
        %v1283 = vpop.f32.mrb[0].mxu0
        %v1284 = vadd.f32 0.0, %v1283
        %v1285 = vpop.f32.mrb[0].mxu0
        %v1286 = vpop.f32.mrb[0].mxu0
        %v1287 = vadd.f32 0.0, %v1286
        %v1288 = vpop.f32.mrb[0].mxu0
        %1289 = vmatprep.mubr.bf16.mxu0 0
        %1290 = vmatmul.mubr.bf16.gmra.mrb[0].mxu0 %v553
        %v1291 = vpop.f32.mrb[0].mxu0
        %v1292 = vadd.f32 0.0, %v1291
        %v1293 = vpop.f32.mrb[0].mxu0
        %v1294 = vpop.f32.mrb[0].mxu0
        %v1295 = vadd.f32 0.0, %v1294
        %v1296 = vpop.f32.mrb[0].mxu0
        %1297 = vmatprep.mubr.bf16.mxu0 0
        %1298 = vmatmul.mubr.bf16.gmra.mrb[0].mxu0 %v556
        %v1299 = vpop.f32.mrb[0].mxu0
        %v1300 = vadd.f32 0.0, %v1299
        %v1301 = vpop.f32.mrb[0].mxu0
        %v1302 = vpop.f32.mrb[0].mxu0
        %v1303 = vadd.f32 0.0, %v1302
        %v1304 = vpop.f32.mrb[0].mxu0
        %1305 = vmatprep.mubr.bf16.mxu0 0
        %1306 = vmatmul.mubr.bf16.gmra.mrb[0].mxu0 %v559
        %v1307 = vpop.f32.mrb[0].mxu0
        %v1308 = vadd.f32 0.0, %v1307
        %v1309 = vpop.f32.mrb[0].mxu0
        %v1310 = vpop.f32.mrb[0].mxu0
        %v1311 = vadd.f32 0.0, %v1310
        %v1312 = vpop.f32.mrb[0].mxu0
        %1313 = vmatprep.mubr.bf16.mxu0 0
        %1314 = vmatmul.mubr.bf16.gmra.mrb[0].mxu0 %v562
        %v1315 = vpop.f32.mrb[0].mxu0
        %v1316 = vadd.f32 0.0, %v1315
        %v1317 = vpop.f32.mrb[0].mxu0
        %v1318 = vpop.f32.mrb[0].mxu0
        %v1319 = vadd.f32 0.0, %v1318
        %v1320 = vpop.f32.mrb[0].mxu0
        %1321 = vmatprep.mubr.bf16.mxu0 0
        %1322 = vmatmul.mubr.bf16.gmra.mrb[0].mxu0 %v565
        %v1323 = vpop.f32.mrb[0].mxu0
        %v1324 = vadd.f32 0.0, %v1323
        %v1325 = vpop.f32.mrb[0].mxu0
        %v1326 = vpop.f32.mrb[0].mxu0
        %v1327 = vadd.f32 0.0, %v1326
        %v1328 = vpop.f32.mrb[0].mxu0
        %1329 = vmatprep.mubr.bf16.mxu0 0
        %1330 = vmatmul.mubr.bf16.gmra.mrb[0].mxu0 %v1239
        %v1331 = vpop.f32.mrb[0].mxu0
        %v1332 = vadd.f32 0.0, %v1331
        %v1333 = vpop.f32.mrb[0].mxu0
        %v1334 = vpop.f32.mrb[0].mxu0
        %v1335 = vadd.f32 0.0, %v1334
        %v1336 = vpop.f32.mrb[0].mxu0
        %1337 = vdwg.mxu0
        %v1338 = vadd.f32 %v1178, %v1276
        %v1339 = vadd.f32 %v1179, %v1279
        %v1340 = vadd.f32 %v1180, %v1284
        %v1341 = vadd.f32 %v1181, %v1287
        %v1342 = vadd.f32 %v1182, %v1292
        %v1343 = vadd.f32 %v1183, %v1295
        %v1344 = vadd.f32 %v1184, %v1300
        %v1345 = vadd.f32 %v1185, %v1303
        %v1346 = vadd.f32 %v1186, %v1308
        %v1347 = vadd.f32 %v1187, %v1311
        %v1348 = vadd.f32 %v1188, %v1316
        %v1349 = vadd.f32 %v1189, %v1319
        %v1350 = vadd.f32 %v1190, %v1324
        %v1351 = vadd.f32 %v1191, %v1327
        %v1352 = vadd.f32 %v1192, %v1332
        %v1353 = vadd.f32 %v1193, %v1335
        %v1354 = vrot.slane %v398, 2
        %v1355 = vrot.slane %v399, 2
        %v1356 = vsel %vm809, %v1354, %v1355
        %v1357 = vrot.slane %v400, 2
        %v1358 = vsel %vm809, %v1355, %v1357
        %v1361 = vpack.c.bf16 %v1358, %v1356
        %s1362 = scalar_lea.vmem [#allocation7], 160
        %v1363 = vld [vmem:[%s1362] sm:$0xf]
        %v1364 = vld [vmem:[%s1362 + $0x4] sm:$0xf]
        %v1365 = vld [vmem:[%s1362 + $0x8] sm:$0xf]
        %v1366 = vld [vmem:[%s1362 + $0xc] sm:$0xf]
        %v1367 = vld [vmem:[%s1362 + $0x10] sm:$0xf]
        %v1368 = vld [vmem:[%s1362 + $0x14] sm:$0xf]
        %v1369 = vld [vmem:[%s1362 + $0x18] sm:$0xf]
        %v1370 = vld [vmem:[%s1362 + $0x1c] sm:$0xf]
        %v1379 = vunpack.c.l.b16 %v1363
        %v1380 = vunpack.c.l.b16 %v1364
        %v1381 = vunpack.c.l.b16 %v1365
        %v1382 = vunpack.c.l.b16 %v1366
        %v1383 = vunpack.c.l.b16 %v1367
        %v1384 = vunpack.c.l.b16 %v1368
        %v1385 = vunpack.c.l.b16 %v1369
        %v1386 = vunpack.c.l.b16 %v1370
        %v1387 = vpack.c.b16 %v1380, %v1379
        %v1388 = vpack.c.b16 %v1382, %v1381
        %v1389 = vpack.c.b16 %v1384, %v1383
        %v1390 = vpack.c.b16 %v1386, %v1385
        %v1396 = vsel %vm542, %v1361, 0
        %1398 = vmatprep.subr.bf16.mxu0 0
        %1399 = vmatpush1.bf16.msra.mxu0 %v1387
        %1400 = vmatprep.subr.bf16.mxu0 0
        %1401 = vmatpush1.bf16.msra.mxu0 %v1388
        %1402 = vmatprep.subr.bf16.mxu0 0
        %1403 = vmatpush1.bf16.msra.mxu0 %v1389
        %1404 = vmatprep.subr.bf16.mxu0 0
        %1405 = vmatpush1.bf16.msra.mxu0 %v1390
        %1406 = vmatprep.subr.bf16.mxu0 0
        %1407 = vmatpush1.bf16.msra.mxu0 0
        %1408 = vmatprep.subr.bf16.mxu0 0
        %1409 = vmatpush1.bf16.msra.mxu0 0
        %1410 = vmatprep.subr.bf16.mxu0 0
        %1411 = vmatpush1.bf16.msra.mxu0 0
        %1412 = vmatprep.subr.bf16.mxu0 0
        %1413 = vmatpush1.bf16.msra.mxu0 0
        %1414 = vmatprep.subr.bf16.mxu0 0
        %1415 = vmatpush1.bf16.msra.mxu0 0
        %1416 = vmatprep.subr.bf16.mxu0 0
        %1417 = vmatpush1.bf16.msra.mxu0 0
        %1418 = vmatprep.subr.bf16.mxu0 0
        %1419 = vmatpush1.bf16.msra.mxu0 0
        %1420 = vmatprep.subr.bf16.mxu0 0
        %1421 = vmatpush1.bf16.msra.mxu0 0
        %1422 = vmatprep.subr.bf16.mxu0 0
        %1423 = vmatpush1.bf16.msra.mxu0 0
        %1424 = vmatprep.subr.bf16.mxu0 0
        %1425 = vmatpush1.bf16.msra.mxu0 0
        %1426 = vmatprep.subr.bf16.mxu0 0
        %1427 = vmatpush1.bf16.msra.mxu0 0
        %1428 = vmatprep.subr.bf16.mxu0 0
        %1429 = vmatpush1.bf16.msra.mxu0 0
        %1430 = vmatprep.mubr.bf16.mxu0 0
        %1431 = vmatmul.mubr.bf16.gmra.mrb[0].mxu0 %v911
        %v1432 = vpop.f32.mrb[0].mxu0
        %v1433 = vadd.f32 0.0, %v1432
        %v1434 = vpop.f32.mrb[0].mxu0
        %v1435 = vpop.f32.mrb[0].mxu0
        %v1436 = vadd.f32 0.0, %v1435
        %v1437 = vpop.f32.mrb[0].mxu0
        %1438 = vmatprep.mubr.bf16.mxu0 0
        %1439 = vmatmul.mubr.bf16.gmra.mrb[0].mxu0 %v914
        %v1440 = vpop.f32.mrb[0].mxu0
        %v1441 = vadd.f32 0.0, %v1440
        %v1442 = vpop.f32.mrb[0].mxu0
        %v1443 = vpop.f32.mrb[0].mxu0
        %v1444 = vadd.f32 0.0, %v1443
        %v1445 = vpop.f32.mrb[0].mxu0
        %1446 = vmatprep.mubr.bf16.mxu0 0
        %1447 = vmatmul.mubr.bf16.gmra.mrb[0].mxu0 %v917
        %v1448 = vpop.f32.mrb[0].mxu0
        %v1449 = vadd.f32 0.0, %v1448
        %v1450 = vpop.f32.mrb[0].mxu0
        %v1451 = vpop.f32.mrb[0].mxu0
        %v1452 = vadd.f32 0.0, %v1451
        %v1453 = vpop.f32.mrb[0].mxu0
        %1454 = vmatprep.mubr.bf16.mxu0 0
        %1455 = vmatmul.mubr.bf16.gmra.mrb[0].mxu0 %v920
        %v1456 = vpop.f32.mrb[0].mxu0
        %v1457 = vadd.f32 0.0, %v1456
        %v1458 = vpop.f32.mrb[0].mxu0
        %v1459 = vpop.f32.mrb[0].mxu0
        %v1460 = vadd.f32 0.0, %v1459
        %v1461 = vpop.f32.mrb[0].mxu0
        %1462 = vmatprep.mubr.bf16.mxu0 0
        %1463 = vmatmul.mubr.bf16.gmra.mrb[0].mxu0 %v923
        %v1464 = vpop.f32.mrb[0].mxu0
        %v1465 = vadd.f32 0.0, %v1464
        %v1466 = vpop.f32.mrb[0].mxu0
        %v1467 = vpop.f32.mrb[0].mxu0
        %v1468 = vadd.f32 0.0, %v1467
        %v1469 = vpop.f32.mrb[0].mxu0
        %1470 = vmatprep.mubr.bf16.mxu0 0
        %1471 = vmatmul.mubr.bf16.gmra.mrb[0].mxu0 %v926
        %v1472 = vpop.f32.mrb[0].mxu0
        %v1473 = vadd.f32 0.0, %v1472
        %v1474 = vpop.f32.mrb[0].mxu0
        %v1475 = vpop.f32.mrb[0].mxu0
        %v1476 = vadd.f32 0.0, %v1475
        %v1477 = vpop.f32.mrb[0].mxu0
        %1478 = vmatprep.mubr.bf16.mxu0 0
        %1479 = vmatmul.mubr.bf16.gmra.mrb[0].mxu0 %v929
        %v1480 = vpop.f32.mrb[0].mxu0
        %v1481 = vadd.f32 0.0, %v1480
        %v1482 = vpop.f32.mrb[0].mxu0
        %v1483 = vpop.f32.mrb[0].mxu0
        %v1484 = vadd.f32 0.0, %v1483
        %v1485 = vpop.f32.mrb[0].mxu0
        %1486 = vmatprep.mubr.bf16.mxu0 0
        %1487 = vmatmul.mubr.bf16.gmra.mrb[0].mxu0 %v1396
        %v1488 = vpop.f32.mrb[0].mxu0
        %v1489 = vadd.f32 0.0, %v1488
        %v1490 = vpop.f32.mrb[0].mxu0
        %v1491 = vpop.f32.mrb[0].mxu0
        %v1492 = vadd.f32 0.0, %v1491
        %v1493 = vpop.f32.mrb[0].mxu0
        %1494 = vdwg.mxu0
        %v1495 = vadd.f32 %v1338, %v1433
        %v1496 = vadd.f32 %v1339, %v1436
        %v1497 = vadd.f32 %v1340, %v1441
        %v1498 = vadd.f32 %v1341, %v1444
        %v1499 = vadd.f32 %v1342, %v1449
        %v1500 = vadd.f32 %v1343, %v1452
        %v1501 = vadd.f32 %v1344, %v1457
        %v1502 = vadd.f32 %v1345, %v1460
        %v1503 = vadd.f32 %v1346, %v1465
        %v1504 = vadd.f32 %v1347, %v1468
        %v1505 = vadd.f32 %v1348, %v1473
        %v1506 = vadd.f32 %v1349, %v1476
        %v1507 = vadd.f32 %v1350, %v1481
        %v1508 = vadd.f32 %v1351, %v1484
        %v1509 = vadd.f32 %v1352, %v1489
        %v1510 = vadd.f32 %v1353, %v1492
        %v1511 = vpack.c.bf16 %v402, %v401
        %s1512 = scalar_lea.vmem [#allocation7], 192
        %v1513 = vld [vmem:[%s1512] sm:$0xf]
        %v1514 = vld [vmem:[%s1512 + $0x4] sm:$0xf]
        %v1515 = vld [vmem:[%s1512 + $0x8] sm:$0xf]
        %v1516 = vld [vmem:[%s1512 + $0xc] sm:$0xf]
        %v1517 = vld [vmem:[%s1512 + $0x10] sm:$0xf]
        %v1518 = vld [vmem:[%s1512 + $0x14] sm:$0xf]
        %v1519 = vld [vmem:[%s1512 + $0x18] sm:$0xf]
        %v1520 = vld [vmem:[%s1512 + $0x1c] sm:$0xf]
        %v1529 = vunpack.c.l.b16 %v1513
        %v1530 = vunpack.c.l.b16 %v1514
        %v1531 = vunpack.c.l.b16 %v1515
        %v1532 = vunpack.c.l.b16 %v1516
        %v1533 = vunpack.c.l.b16 %v1517
        %v1534 = vunpack.c.l.b16 %v1518
        %v1535 = vunpack.c.l.b16 %v1519
        %v1536 = vunpack.c.l.b16 %v1520
        %v1537 = vpack.c.b16 %v1530, %v1529
        %v1538 = vpack.c.b16 %v1532, %v1531
        %v1539 = vpack.c.b16 %v1534, %v1533
        %v1540 = vpack.c.b16 %v1536, %v1535
        %v1546 = vsel %vm542, %v1511, 0
        %1548 = vmatprep.subr.bf16.mxu0 0
        %1549 = vmatpush1.bf16.msra.mxu0 %v1537
        %1550 = vmatprep.subr.bf16.mxu0 0
        %1551 = vmatpush1.bf16.msra.mxu0 %v1538
        %1552 = vmatprep.subr.bf16.mxu0 0
        %1553 = vmatpush1.bf16.msra.mxu0 %v1539
        %1554 = vmatprep.subr.bf16.mxu0 0
        %1555 = vmatpush1.bf16.msra.mxu0 %v1540
        %1556 = vmatprep.subr.bf16.mxu0 0
        %1557 = vmatpush1.bf16.msra.mxu0 0
        %1558 = vmatprep.subr.bf16.mxu0 0
        %1559 = vmatpush1.bf16.msra.mxu0 0
        %1560 = vmatprep.subr.bf16.mxu0 0
        %1561 = vmatpush1.bf16.msra.mxu0 0
        %1562 = vmatprep.subr.bf16.mxu0 0
        %1563 = vmatpush1.bf16.msra.mxu0 0
        %1564 = vmatprep.subr.bf16.mxu0 0
        %1565 = vmatpush1.bf16.msra.mxu0 0
        %1566 = vmatprep.subr.bf16.mxu0 0
        %1567 = vmatpush1.bf16.msra.mxu0 0
        %1568 = vmatprep.subr.bf16.mxu0 0
        %1569 = vmatpush1.bf16.msra.mxu0 0
        %1570 = vmatprep.subr.bf16.mxu0 0
        %1571 = vmatpush1.bf16.msra.mxu0 0
        %1572 = vmatprep.subr.bf16.mxu0 0
        %1573 = vmatpush1.bf16.msra.mxu0 0
        %1574 = vmatprep.subr.bf16.mxu0 0
        %1575 = vmatpush1.bf16.msra.mxu0 0
        %1576 = vmatprep.subr.bf16.mxu0 0
        %1577 = vmatpush1.bf16.msra.mxu0 0
        %1578 = vmatprep.subr.bf16.mxu0 0
        %1579 = vmatpush1.bf16.msra.mxu0 0
        %1580 = vmatprep.mubr.bf16.mxu0 0
        %1581 = vmatmul.mubr.bf16.gmra.mrb[0].mxu0 %v695
        %v1582 = vpop.f32.mrb[0].mxu0
        %v1583 = vadd.f32 0.0, %v1582
        %v1584 = vpop.f32.mrb[0].mxu0
        %v1585 = vpop.f32.mrb[0].mxu0
        %v1586 = vadd.f32 0.0, %v1585
        %v1587 = vpop.f32.mrb[0].mxu0
        %1588 = vmatprep.mubr.bf16.mxu0 0
        %1589 = vmatmul.mubr.bf16.gmra.mrb[0].mxu0 %v698
        %v1590 = vpop.f32.mrb[0].mxu0
        %v1591 = vadd.f32 0.0, %v1590
        %v1592 = vpop.f32.mrb[0].mxu0
        %v1593 = vpop.f32.mrb[0].mxu0
        %v1594 = vadd.f32 0.0, %v1593
        %v1595 = vpop.f32.mrb[0].mxu0
        %1596 = vmatprep.mubr.bf16.mxu0 0
        %1597 = vmatmul.mubr.bf16.gmra.mrb[0].mxu0 %v701
        %v1598 = vpop.f32.mrb[0].mxu0
        %v1599 = vadd.f32 0.0, %v1598
        %v1600 = vpop.f32.mrb[0].mxu0
        %v1601 = vpop.f32.mrb[0].mxu0
        %v1602 = vadd.f32 0.0, %v1601
        %v1603 = vpop.f32.mrb[0].mxu0
        %1604 = vmatprep.mubr.bf16.mxu0 0
        %1605 = vmatmul.mubr.bf16.gmra.mrb[0].mxu0 %v704
        %v1606 = vpop.f32.mrb[0].mxu0
        %v1607 = vadd.f32 0.0, %v1606
        %v1608 = vpop.f32.mrb[0].mxu0
        %v1609 = vpop.f32.mrb[0].mxu0
        %v1610 = vadd.f32 0.0, %v1609
        %v1611 = vpop.f32.mrb[0].mxu0
        %1612 = vmatprep.mubr.bf16.mxu0 0
        %1613 = vmatmul.mubr.bf16.gmra.mrb[0].mxu0 %v707
        %v1614 = vpop.f32.mrb[0].mxu0
        %v1615 = vadd.f32 0.0, %v1614
        %v1616 = vpop.f32.mrb[0].mxu0
        %v1617 = vpop.f32.mrb[0].mxu0
        %v1618 = vadd.f32 0.0, %v1617
        %v1619 = vpop.f32.mrb[0].mxu0
        %1620 = vmatprep.mubr.bf16.mxu0 0
        %1621 = vmatmul.mubr.bf16.gmra.mrb[0].mxu0 %v710
        %v1622 = vpop.f32.mrb[0].mxu0
        %v1623 = vadd.f32 0.0, %v1622
        %v1624 = vpop.f32.mrb[0].mxu0
        %v1625 = vpop.f32.mrb[0].mxu0
        %v1626 = vadd.f32 0.0, %v1625
        %v1627 = vpop.f32.mrb[0].mxu0
        %1628 = vmatprep.mubr.bf16.mxu0 0
        %1629 = vmatmul.mubr.bf16.gmra.mrb[0].mxu0 %v1079
        %v1630 = vpop.f32.mrb[0].mxu0
        %v1631 = vadd.f32 0.0, %v1630
        %v1632 = vpop.f32.mrb[0].mxu0
        %v1633 = vpop.f32.mrb[0].mxu0
        %v1634 = vadd.f32 0.0, %v1633
        %v1635 = vpop.f32.mrb[0].mxu0
        %1636 = vmatprep.mubr.bf16.mxu0 0
        %1637 = vmatmul.mubr.bf16.gmra.mrb[0].mxu0 %v1546
        %v1638 = vpop.f32.mrb[0].mxu0
        %v1639 = vadd.f32 0.0, %v1638
        %v1640 = vpop.f32.mrb[0].mxu0
        %v1641 = vpop.f32.mrb[0].mxu0
        %v1642 = vadd.f32 0.0, %v1641
        %v1643 = vpop.f32.mrb[0].mxu0
        %1644 = vdwg.mxu0
        %v1645 = vadd.f32 %v1495, %v1583
        %v1646 = vadd.f32 %v1496, %v1586
        %v1647 = vadd.f32 %v1497, %v1591
        %v1648 = vadd.f32 %v1498, %v1594
        %v1649 = vadd.f32 %v1499, %v1599
        %v1650 = vadd.f32 %v1500, %v1602
        %v1651 = vadd.f32 %v1501, %v1607
        %v1652 = vadd.f32 %v1502, %v1610
        %v1653 = vadd.f32 %v1503, %v1615
        %v1654 = vadd.f32 %v1504, %v1618
        %v1655 = vadd.f32 %v1505, %v1623
        %v1656 = vadd.f32 %v1506, %v1626
        %v1657 = vadd.f32 %v1507, %v1631
        %v1658 = vadd.f32 %v1508, %v1634
        %v1659 = vadd.f32 %v1509, %v1639
        %v1660 = vadd.f32 %v1510, %v1642
        %v1664 = vrot.slane %v401, 1
        %v1665 = vrot.slane %v402, 1
        %v1666 = vsel %vm444, %v1664, %v1665
        %v1667 = vrot.slane %v403, 1
        %v1668 = vsel %vm444, %v1665, %v1667
        %v1671 = vpack.c.bf16 %v1668, %v1666
        %s1672 = scalar_lea.vmem [#allocation7], 224
        %v1673 = vld [vmem:[%s1672] sm:$0xf]
        %v1674 = vld [vmem:[%s1672 + $0x4] sm:$0xf]
        %v1675 = vld [vmem:[%s1672 + $0x8] sm:$0xf]
        %v1676 = vld [vmem:[%s1672 + $0xc] sm:$0xf]
        %v1677 = vld [vmem:[%s1672 + $0x10] sm:$0xf]
        %v1678 = vld [vmem:[%s1672 + $0x14] sm:$0xf]
        %v1679 = vld [vmem:[%s1672 + $0x18] sm:$0xf]
        %v1680 = vld [vmem:[%s1672 + $0x1c] sm:$0xf]
        %v1689 = vunpack.c.l.b16 %v1673
        %v1690 = vunpack.c.l.b16 %v1674
        %v1691 = vunpack.c.l.b16 %v1675
        %v1692 = vunpack.c.l.b16 %v1676
        %v1693 = vunpack.c.l.b16 %v1677
        %v1694 = vunpack.c.l.b16 %v1678
        %v1695 = vunpack.c.l.b16 %v1679
        %v1696 = vunpack.c.l.b16 %v1680
        %v1697 = vpack.c.b16 %v1690, %v1689
        %v1698 = vpack.c.b16 %v1692, %v1691
        %v1699 = vpack.c.b16 %v1694, %v1693
        %v1700 = vpack.c.b16 %v1696, %v1695
        %v1706 = vsel %vm542, %v1671, 0
        %1708 = vmatprep.subr.bf16.mxu0 0
        %1709 = vmatpush1.bf16.msra.mxu0 %v1697
        %1710 = vmatprep.subr.bf16.mxu0 0
        %1711 = vmatpush1.bf16.msra.mxu0 %v1698
        %1712 = vmatprep.subr.bf16.mxu0 0
        %1713 = vmatpush1.bf16.msra.mxu0 %v1699
        %1714 = vmatprep.subr.bf16.mxu0 0
        %1715 = vmatpush1.bf16.msra.mxu0 %v1700
        %1716 = vmatprep.subr.bf16.mxu0 0
        %1717 = vmatpush1.bf16.msra.mxu0 0
        %1718 = vmatprep.subr.bf16.mxu0 0
        %1719 = vmatpush1.bf16.msra.mxu0 0
        %1720 = vmatprep.subr.bf16.mxu0 0
        %1721 = vmatpush1.bf16.msra.mxu0 0
        %1722 = vmatprep.subr.bf16.mxu0 0
        %1723 = vmatpush1.bf16.msra.mxu0 0
        %1724 = vmatprep.subr.bf16.mxu0 0
        %1725 = vmatpush1.bf16.msra.mxu0 0
        %1726 = vmatprep.subr.bf16.mxu0 0
        %1727 = vmatpush1.bf16.msra.mxu0 0
        %1728 = vmatprep.subr.bf16.mxu0 0
        %1729 = vmatpush1.bf16.msra.mxu0 0
        %1730 = vmatprep.subr.bf16.mxu0 0
        %1731 = vmatpush1.bf16.msra.mxu0 0
        %1732 = vmatprep.subr.bf16.mxu0 0
        %1733 = vmatpush1.bf16.msra.mxu0 0
        %1734 = vmatprep.subr.bf16.mxu0 0
        %1735 = vmatpush1.bf16.msra.mxu0 0
        %1736 = vmatprep.subr.bf16.mxu0 0
        %1737 = vmatpush1.bf16.msra.mxu0 0
        %1738 = vmatprep.subr.bf16.mxu0 0
        %1739 = vmatpush1.bf16.msra.mxu0 0
        %1740 = vmatprep.mubr.bf16.mxu0 0
        %1741 = vmatmul.mubr.bf16.gmra.mrb[0].mxu0 %v550
        %v1742 = vpop.f32.mrb[0].mxu0
        %v1743 = vadd.f32 0.0, %v1742
        %v1744 = vpop.f32.mrb[0].mxu0
        %v1745 = vpop.f32.mrb[0].mxu0
        %v1746 = vadd.f32 0.0, %v1745
        %v1747 = vpop.f32.mrb[0].mxu0
        %1748 = vmatprep.mubr.bf16.mxu0 0
        %1749 = vmatmul.mubr.bf16.gmra.mrb[0].mxu0 %v553
        %v1750 = vpop.f32.mrb[0].mxu0
        %v1751 = vadd.f32 0.0, %v1750
        %v1752 = vpop.f32.mrb[0].mxu0
        %v1753 = vpop.f32.mrb[0].mxu0
        %v1754 = vadd.f32 0.0, %v1753
        %v1755 = vpop.f32.mrb[0].mxu0
        %1756 = vmatprep.mubr.bf16.mxu0 0
        %1757 = vmatmul.mubr.bf16.gmra.mrb[0].mxu0 %v556
        %v1758 = vpop.f32.mrb[0].mxu0
        %v1759 = vadd.f32 0.0, %v1758
        %v1760 = vpop.f32.mrb[0].mxu0
        %v1761 = vpop.f32.mrb[0].mxu0
        %v1762 = vadd.f32 0.0, %v1761
        %v1763 = vpop.f32.mrb[0].mxu0
        %1764 = vmatprep.mubr.bf16.mxu0 0
        %1765 = vmatmul.mubr.bf16.gmra.mrb[0].mxu0 %v559
        %v1766 = vpop.f32.mrb[0].mxu0
        %v1767 = vadd.f32 0.0, %v1766
        %v1768 = vpop.f32.mrb[0].mxu0
        %v1769 = vpop.f32.mrb[0].mxu0
        %v1770 = vadd.f32 0.0, %v1769
        %v1771 = vpop.f32.mrb[0].mxu0
        %1772 = vmatprep.mubr.bf16.mxu0 0
        %1773 = vmatmul.mubr.bf16.gmra.mrb[0].mxu0 %v562
        %v1774 = vpop.f32.mrb[0].mxu0
        %v1775 = vadd.f32 0.0, %v1774
        %v1776 = vpop.f32.mrb[0].mxu0
        %v1777 = vpop.f32.mrb[0].mxu0
        %v1778 = vadd.f32 0.0, %v1777
        %v1779 = vpop.f32.mrb[0].mxu0
        %1780 = vmatprep.mubr.bf16.mxu0 0
        %1781 = vmatmul.mubr.bf16.gmra.mrb[0].mxu0 %v565
        %v1782 = vpop.f32.mrb[0].mxu0
        %v1783 = vadd.f32 0.0, %v1782
        %v1784 = vpop.f32.mrb[0].mxu0
        %v1785 = vpop.f32.mrb[0].mxu0
        %v1786 = vadd.f32 0.0, %v1785
        %v1787 = vpop.f32.mrb[0].mxu0
        %1788 = vmatprep.mubr.bf16.mxu0 0
        %1789 = vmatmul.mubr.bf16.gmra.mrb[0].mxu0 %v1239
        %v1790 = vpop.f32.mrb[0].mxu0
        %v1791 = vadd.f32 0.0, %v1790
        %v1792 = vpop.f32.mrb[0].mxu0
        %v1793 = vpop.f32.mrb[0].mxu0
        %v1794 = vadd.f32 0.0, %v1793
        %v1795 = vpop.f32.mrb[0].mxu0
        %1796 = vmatprep.mubr.bf16.mxu0 0
        %1797 = vmatmul.mubr.bf16.gmra.mrb[0].mxu0 %v1706
        %v1798 = vpop.f32.mrb[0].mxu0
        %v1799 = vadd.f32 0.0, %v1798
        %v1800 = vpop.f32.mrb[0].mxu0
        %v1801 = vpop.f32.mrb[0].mxu0
        %v1802 = vadd.f32 0.0, %v1801
        %v1803 = vpop.f32.mrb[0].mxu0
        %1804 = vdwg.mxu0
        %v1805 = vadd.f32 %v1645, %v1743
        %v1806 = vadd.f32 %v1646, %v1746
        %v1807 = vadd.f32 %v1647, %v1751
        %v1808 = vadd.f32 %v1648, %v1754
        %v1809 = vadd.f32 %v1649, %v1759
        %v1810 = vadd.f32 %v1650, %v1762
        %v1811 = vadd.f32 %v1651, %v1767
        %v1812 = vadd.f32 %v1652, %v1770
        %v1813 = vadd.f32 %v1653, %v1775
        %v1814 = vadd.f32 %v1654, %v1778
        %v1815 = vadd.f32 %v1655, %v1783
        %v1816 = vadd.f32 %v1656, %v1786
        %v1817 = vadd.f32 %v1657, %v1791
        %v1818 = vadd.f32 %v1658, %v1794
        %v1819 = vadd.f32 %v1659, %v1799
        %v1820 = vadd.f32 %v1660, %v1802
        %v1821 = vrot.slane %v401, 2
        %v1822 = vrot.slane %v402, 2
        %v1823 = vsel %vm809, %v1821, %v1822
        %v1824 = vrot.slane %v403, 2
        %v1825 = vsel %vm809, %v1822, %v1824
        %v1828 = vpack.c.bf16 %v1825, %v1823
        %s1829 = scalar_lea.vmem [#allocation7], 256
        %v1830 = vld [vmem:[%s1829] sm:$0xf]
        %v1831 = vld [vmem:[%s1829 + $0x4] sm:$0xf]
        %v1832 = vld [vmem:[%s1829 + $0x8] sm:$0xf]
        %v1833 = vld [vmem:[%s1829 + $0xc] sm:$0xf]
        %v1834 = vld [vmem:[%s1829 + $0x10] sm:$0xf]
        %v1835 = vld [vmem:[%s1829 + $0x14] sm:$0xf]
        %v1836 = vld [vmem:[%s1829 + $0x18] sm:$0xf]
        %v1837 = vld [vmem:[%s1829 + $0x1c] sm:$0xf]
        %v1846 = vunpack.c.l.b16 %v1830
        %v1847 = vunpack.c.l.b16 %v1831
        %v1848 = vunpack.c.l.b16 %v1832
        %v1849 = vunpack.c.l.b16 %v1833
        %v1850 = vunpack.c.l.b16 %v1834
        %v1851 = vunpack.c.l.b16 %v1835
        %v1852 = vunpack.c.l.b16 %v1836
        %v1853 = vunpack.c.l.b16 %v1837
        %v1854 = vpack.c.b16 %v1847, %v1846
        %v1855 = vpack.c.b16 %v1849, %v1848
        %v1856 = vpack.c.b16 %v1851, %v1850
        %v1857 = vpack.c.b16 %v1853, %v1852
        %v1863 = vsel %vm542, %v1828, 0
        %1865 = vmatprep.subr.bf16.mxu0 0
        %1866 = vmatpush1.bf16.msra.mxu0 %v1854
        %1867 = vmatprep.subr.bf16.mxu0 0
        %1868 = vmatpush1.bf16.msra.mxu0 %v1855
        %1869 = vmatprep.subr.bf16.mxu0 0
        %1870 = vmatpush1.bf16.msra.mxu0 %v1856
        %1871 = vmatprep.subr.bf16.mxu0 0
        %1872 = vmatpush1.bf16.msra.mxu0 %v1857
        %1873 = vmatprep.subr.bf16.mxu0 0
        %1874 = vmatpush1.bf16.msra.mxu0 0
        %1875 = vmatprep.subr.bf16.mxu0 0
        %1876 = vmatpush1.bf16.msra.mxu0 0
        %1877 = vmatprep.subr.bf16.mxu0 0
        %1878 = vmatpush1.bf16.msra.mxu0 0
        %1879 = vmatprep.subr.bf16.mxu0 0
        %1880 = vmatpush1.bf16.msra.mxu0 0
        %1881 = vmatprep.subr.bf16.mxu0 0
        %1882 = vmatpush1.bf16.msra.mxu0 0
        %1883 = vmatprep.subr.bf16.mxu0 0
        %1884 = vmatpush1.bf16.msra.mxu0 0
        %1885 = vmatprep.subr.bf16.mxu0 0
        %1886 = vmatpush1.bf16.msra.mxu0 0
        %1887 = vmatprep.subr.bf16.mxu0 0
        %1888 = vmatpush1.bf16.msra.mxu0 0
        %1889 = vmatprep.subr.bf16.mxu0 0
        %1890 = vmatpush1.bf16.msra.mxu0 0
        %1891 = vmatprep.subr.bf16.mxu0 0
        %1892 = vmatpush1.bf16.msra.mxu0 0
        %1893 = vmatprep.subr.bf16.mxu0 0
        %1894 = vmatpush1.bf16.msra.mxu0 0
        %1895 = vmatprep.subr.bf16.mxu0 0
        %1896 = vmatpush1.bf16.msra.mxu0 0
        %1897 = vmatprep.mubr.bf16.mxu0 0
        %1898 = vmatmul.mubr.bf16.gmra.mrb[0].mxu0 %v914
        %v1899 = vpop.f32.mrb[0].mxu0
        %v1900 = vadd.f32 0.0, %v1899
        %v1901 = vpop.f32.mrb[0].mxu0
        %v1902 = vpop.f32.mrb[0].mxu0
        %v1903 = vadd.f32 0.0, %v1902
        %v1904 = vpop.f32.mrb[0].mxu0
        %1905 = vmatprep.mubr.bf16.mxu0 0
        %1906 = vmatmul.mubr.bf16.gmra.mrb[0].mxu0 %v917
        %v1907 = vpop.f32.mrb[0].mxu0
        %v1908 = vadd.f32 0.0, %v1907
        %v1909 = vpop.f32.mrb[0].mxu0
        %v1910 = vpop.f32.mrb[0].mxu0
        %v1911 = vadd.f32 0.0, %v1910
        %v1912 = vpop.f32.mrb[0].mxu0
        %1913 = vmatprep.mubr.bf16.mxu0 0
        %1914 = vmatmul.mubr.bf16.gmra.mrb[0].mxu0 %v920
        %v1915 = vpop.f32.mrb[0].mxu0
        %v1916 = vadd.f32 0.0, %v1915
        %v1917 = vpop.f32.mrb[0].mxu0
        %v1918 = vpop.f32.mrb[0].mxu0
        %v1919 = vadd.f32 0.0, %v1918
        %v1920 = vpop.f32.mrb[0].mxu0
        %1921 = vmatprep.mubr.bf16.mxu0 0
        %1922 = vmatmul.mubr.bf16.gmra.mrb[0].mxu0 %v923
        %v1923 = vpop.f32.mrb[0].mxu0
        %v1924 = vadd.f32 0.0, %v1923
        %v1925 = vpop.f32.mrb[0].mxu0
        %v1926 = vpop.f32.mrb[0].mxu0
        %v1927 = vadd.f32 0.0, %v1926
        %v1928 = vpop.f32.mrb[0].mxu0
        %1929 = vmatprep.mubr.bf16.mxu0 0
        %1930 = vmatmul.mubr.bf16.gmra.mrb[0].mxu0 %v926
        %v1931 = vpop.f32.mrb[0].mxu0
        %v1932 = vadd.f32 0.0, %v1931
        %v1933 = vpop.f32.mrb[0].mxu0
        %v1934 = vpop.f32.mrb[0].mxu0
        %v1935 = vadd.f32 0.0, %v1934
        %v1936 = vpop.f32.mrb[0].mxu0
        %1937 = vmatprep.mubr.bf16.mxu0 0
        %1938 = vmatmul.mubr.bf16.gmra.mrb[0].mxu0 %v929
        %v1939 = vpop.f32.mrb[0].mxu0
        %v1940 = vadd.f32 0.0, %v1939
        %v1941 = vpop.f32.mrb[0].mxu0
        %v1942 = vpop.f32.mrb[0].mxu0
        %v1943 = vadd.f32 0.0, %v1942
        %v1944 = vpop.f32.mrb[0].mxu0
        %1945 = vmatprep.mubr.bf16.mxu0 0
        %1946 = vmatmul.mubr.bf16.gmra.mrb[0].mxu0 %v1396
        %v1947 = vpop.f32.mrb[0].mxu0
        %v1948 = vadd.f32 0.0, %v1947
        %v1949 = vpop.f32.mrb[0].mxu0
        %v1950 = vpop.f32.mrb[0].mxu0
        %v1951 = vadd.f32 0.0, %v1950
        %v1952 = vpop.f32.mrb[0].mxu0
        %1953 = vmatprep.mubr.bf16.mxu0 0
        %1954 = vmatmul.mubr.bf16.gmra.mrb[0].mxu0 %v1863
        %v1955 = vpop.f32.mrb[0].mxu0
        %v1956 = vadd.f32 0.0, %v1955
        %v1957 = vpop.f32.mrb[0].mxu0
        %v1958 = vpop.f32.mrb[0].mxu0
        %v1959 = vadd.f32 0.0, %v1958
        %v1960 = vpop.f32.mrb[0].mxu0
        %1961 = vdwg.mxu0
        %v1962 = vadd.f32 %v1805, %v1900
        %v1963 = vadd.f32 %v1806, %v1903
        %v1964 = vadd.f32 %v1807, %v1908
        %v1965 = vadd.f32 %v1808, %v1911
        %v1966 = vadd.f32 %v1809, %v1916
        %v1967 = vadd.f32 %v1810, %v1919
        %v1968 = vadd.f32 %v1811, %v1924
        %v1969 = vadd.f32 %v1812, %v1927
        %v1970 = vadd.f32 %v1813, %v1932
        %v1971 = vadd.f32 %v1814, %v1935
        %v1972 = vadd.f32 %v1815, %v1940
        %v1973 = vadd.f32 %v1816, %v1943
        %v1974 = vadd.f32 %v1817, %v1948
        %v1975 = vadd.f32 %v1818, %v1951
        %v1976 = vadd.f32 %v1819, %v1956
        %v1977 = vadd.f32 %v1820, %v1959
        %v1978 = vld [vmem:[#allocation8] sm:$0x1]
        %v1980 = vlaneseq
        %v1981 = vshrl.u32 %v1980, 7
        %v1982 = vsub.s32 0, %v1981
        %v1983 = vrot.slane %v1978, %v1982
        %v1985 = vadd.f32 %v1962, %v1983
        %v1986 = vadd.f32 %v1963, %v1983
        %v1987 = vadd.f32 %v1964, %v1983
        %v1988 = vadd.f32 %v1965, %v1983
        %v1989 = vadd.f32 %v1966, %v1983
        %v1990 = vadd.f32 %v1967, %v1983
        %v1991 = vadd.f32 %v1968, %v1983
        %v1992 = vadd.f32 %v1969, %v1983
        %v1993 = vadd.f32 %v1970, %v1983
        %v1994 = vadd.f32 %v1971, %v1983
        %v1995 = vadd.f32 %v1972, %v1983
        %v1996 = vadd.f32 %v1973, %v1983
        %v1997 = vadd.f32 %v1974, %v1983
        %v1998 = vadd.f32 %v1975, %v1983
        %v1999 = vadd.f32 %v1976, %v1983
        %v2000 = vadd.f32 %v1977, %v1983
        %v2001 = vmax.f32 %v1985, 0.0
        %v2002 = vmax.f32 %v1986, 0.0
        %v2003 = vmax.f32 %v1987, 0.0
        %v2004 = vmax.f32 %v1988, 0.0
        %v2005 = vmax.f32 %v1989, 0.0
        %v2006 = vmax.f32 %v1990, 0.0
        %v2007 = vmax.f32 %v1991, 0.0
        %v2008 = vmax.f32 %v1992, 0.0
        %v2009 = vmax.f32 %v1993, 0.0
        %v2010 = vmax.f32 %v1994, 0.0
        %v2011 = vmax.f32 %v1995, 0.0
        %v2012 = vmax.f32 %v1996, 0.0
        %v2013 = vmax.f32 %v1997, 0.0
        %v2014 = vmax.f32 %v1998, 0.0
        %v2015 = vmax.f32 %v1999, 0.0
        %v2016 = vmax.f32 %v2000, 0.0
        %v2017 = vpack.c.bf16 %v2002, %v2001
        %v2018 = vpack.c.bf16 %v2004, %v2003
        %v2019 = vpack.c.bf16 %v2006, %v2005
        %v2020 = vpack.c.bf16 %v2008, %v2007
        %v2021 = vpack.c.bf16 %v2010, %v2009
        %v2022 = vpack.c.bf16 %v2012, %v2011
        %v2023 = vpack.c.bf16 %v2014, %v2013
        %v2024 = vpack.c.bf16 %v2016, %v2015
        %v2025 = vld [vmem:[#allocation10] sm:$0xf]
        %v2026 = vld [vmem:[#allocation10 + $0x4] sm:$0xf]
        %v2027 = vld [vmem:[#allocation10 + $0x8] sm:$0xf]
        %v2028 = vld [vmem:[#allocation10 + $0xc] sm:$0xf]
        %v2029 = vld [vmem:[#allocation10 + $0x10] sm:$0xf]
        %v2030 = vld [vmem:[#allocation10 + $0x14] sm:$0xf]
        %v2031 = vld [vmem:[#allocation10 + $0x18] sm:$0xf]
        %v2032 = vld [vmem:[#allocation10 + $0x1c] sm:$0xf]
        %v2033 = vld [vmem:[#allocation11] sm:$0x1]
        %v2035 = vlaneseq
        %v2036 = vshrl.u32 %v2035, 7
        %v2037 = vsub.s32 0, %v2036
        %v2038 = vrot.slane %v2033, %v2037
        %v2048 = vunpack.c.l.b16 %v2025
        %v2049 = vunpack.c.l.b16 %v2026
        %v2050 = vunpack.c.l.b16 %v2027
        %v2051 = vunpack.c.l.b16 %v2028
        %v2052 = vunpack.c.l.b16 %v2029
        %v2053 = vunpack.c.l.b16 %v2030
        %v2054 = vunpack.c.l.b16 %v2031
        %v2055 = vunpack.c.l.b16 %v2032
        %v2056 = vpack.c.b16 %v2049, %v2048
        %v2057 = vpack.c.b16 %v2051, %v2050
        %v2058 = vpack.c.b16 %v2053, %v2052
        %v2059 = vpack.c.b16 %v2055, %v2054
        %v2065 = vsel %vm542, %v2017, 0
        %v2068 = vsel %vm542, %v2018, 0
        %v2071 = vsel %vm542, %v2019, 0
        %v2074 = vsel %vm542, %v2020, 0
        %v2077 = vsel %vm542, %v2021, 0
        %v2080 = vsel %vm542, %v2022, 0
        %v2083 = vsel %vm542, %v2023, 0
        %v2086 = vsel %vm542, %v2024, 0
        %2088 = vmatprep.subr.bf16.mxu0 0
        %2089 = vmatpush1.bf16.msra.mxu0 %v2056
        %2090 = vmatprep.subr.bf16.mxu0 0
        %2091 = vmatpush1.bf16.msra.mxu0 %v2057
        %2092 = vmatprep.subr.bf16.mxu0 0
        %2093 = vmatpush1.bf16.msra.mxu0 %v2058
        %2094 = vmatprep.subr.bf16.mxu0 0
        %2095 = vmatpush1.bf16.msra.mxu0 %v2059
        %2096 = vmatprep.subr.bf16.mxu0 0
        %2097 = vmatpush1.bf16.msra.mxu0 0
        %2098 = vmatprep.subr.bf16.mxu0 0
        %2099 = vmatpush1.bf16.msra.mxu0 0
        %2100 = vmatprep.subr.bf16.mxu0 0
        %2101 = vmatpush1.bf16.msra.mxu0 0
        %2102 = vmatprep.subr.bf16.mxu0 0
        %2103 = vmatpush1.bf16.msra.mxu0 0
        %2104 = vmatprep.subr.bf16.mxu0 0
        %2105 = vmatpush1.bf16.msra.mxu0 0
        %2106 = vmatprep.subr.bf16.mxu0 0
        %2107 = vmatpush1.bf16.msra.mxu0 0
        %2108 = vmatprep.subr.bf16.mxu0 0
        %2109 = vmatpush1.bf16.msra.mxu0 0
        %2110 = vmatprep.subr.bf16.mxu0 0
        %2111 = vmatpush1.bf16.msra.mxu0 0
        %2112 = vmatprep.subr.bf16.mxu0 0
        %2113 = vmatpush1.bf16.msra.mxu0 0
        %2114 = vmatprep.subr.bf16.mxu0 0
        %2115 = vmatpush1.bf16.msra.mxu0 0
        %2116 = vmatprep.subr.bf16.mxu0 0
        %2117 = vmatpush1.bf16.msra.mxu0 0
        %2118 = vmatprep.subr.bf16.mxu0 0
        %2119 = vmatpush1.bf16.msra.mxu0 0
        %2120 = vmatprep.mubr.bf16.mxu0 0
        %2121 = vmatmul.mubr.bf16.gmra.mrb[0].mxu0 %v2065
        %v2122 = vpop.f32.mrb[0].mxu0
        %v2123 = vadd.f32 %v2038, %v2122
        %v2124 = vpop.f32.mrb[0].mxu0
        %v2125 = vpop.f32.mrb[0].mxu0
        %v2126 = vadd.f32 %v2038, %v2125
        %v2127 = vpop.f32.mrb[0].mxu0
        %2128 = vmatprep.mubr.bf16.mxu0 0
        %2129 = vmatmul.mubr.bf16.gmra.mrb[0].mxu0 %v2068
        %v2130 = vpop.f32.mrb[0].mxu0
        %v2131 = vadd.f32 %v2038, %v2130
        %v2132 = vpop.f32.mrb[0].mxu0
        %v2133 = vpop.f32.mrb[0].mxu0
        %v2134 = vadd.f32 %v2038, %v2133
        %v2135 = vpop.f32.mrb[0].mxu0
        %2136 = vmatprep.mubr.bf16.mxu0 0
        %2137 = vmatmul.mubr.bf16.gmra.mrb[0].mxu0 %v2071
        %v2138 = vpop.f32.mrb[0].mxu0
        %v2139 = vadd.f32 %v2038, %v2138
        %v2140 = vpop.f32.mrb[0].mxu0
        %v2141 = vpop.f32.mrb[0].mxu0
        %v2142 = vadd.f32 %v2038, %v2141
        %v2143 = vpop.f32.mrb[0].mxu0
        %2144 = vmatprep.mubr.bf16.mxu0 0
        %2145 = vmatmul.mubr.bf16.gmra.mrb[0].mxu0 %v2074
        %v2146 = vpop.f32.mrb[0].mxu0
        %v2147 = vadd.f32 %v2038, %v2146
        %v2148 = vpop.f32.mrb[0].mxu0
        %v2149 = vpop.f32.mrb[0].mxu0
        %v2150 = vadd.f32 %v2038, %v2149
        %v2151 = vpop.f32.mrb[0].mxu0
        %2152 = vmatprep.mubr.bf16.mxu0 0
        %2153 = vmatmul.mubr.bf16.gmra.mrb[0].mxu0 %v2077
        %v2154 = vpop.f32.mrb[0].mxu0
        %v2155 = vadd.f32 %v2038, %v2154
        %v2156 = vpop.f32.mrb[0].mxu0
        %v2157 = vpop.f32.mrb[0].mxu0
        %v2158 = vadd.f32 %v2038, %v2157
        %v2159 = vpop.f32.mrb[0].mxu0
        %2160 = vmatprep.mubr.bf16.mxu0 0
        %2161 = vmatmul.mubr.bf16.gmra.mrb[0].mxu0 %v2080
        %v2162 = vpop.f32.mrb[0].mxu0
        %v2163 = vadd.f32 %v2038, %v2162
        %v2164 = vpop.f32.mrb[0].mxu0
        %v2165 = vpop.f32.mrb[0].mxu0
        %v2166 = vadd.f32 %v2038, %v2165
        %v2167 = vpop.f32.mrb[0].mxu0
        %2168 = vmatprep.mubr.bf16.mxu0 0
        %2169 = vmatmul.mubr.bf16.gmra.mrb[0].mxu0 %v2083
        %v2170 = vpop.f32.mrb[0].mxu0
        %v2171 = vadd.f32 %v2038, %v2170
        %v2172 = vpop.f32.mrb[0].mxu0
        %v2173 = vpop.f32.mrb[0].mxu0
        %v2174 = vadd.f32 %v2038, %v2173
        %v2175 = vpop.f32.mrb[0].mxu0
        %2176 = vmatprep.mubr.bf16.mxu0 0
        %2177 = vmatmul.mubr.bf16.gmra.mrb[0].mxu0 %v2086
        %v2178 = vpop.f32.mrb[0].mxu0
        %v2179 = vadd.f32 %v2038, %v2178
        %v2180 = vpop.f32.mrb[0].mxu0
        %v2181 = vpop.f32.mrb[0].mxu0
        %v2182 = vadd.f32 %v2038, %v2181
        %v2183 = vpop.f32.mrb[0].mxu0
        %2184 = vdwg.mxu0
        %vm2185 = vcmask 162816
        %2186 = vst.msk [vmem:[%s368] sm:$0xff] %vm2185, %v2123
        %2187 = vst.msk [vmem:[%s368 + $0x8] sm:$0xff] %vm2185, %v2126
        %2188 = vst.msk [vmem:[%s368 + $0x10] sm:$0xff] %vm2185, %v2131
        %2189 = vst.msk [vmem:[%s368 + $0x18] sm:$0xff] %vm2185, %v2134
        %2190 = vst.msk [vmem:[%s368 + $0x20] sm:$0xff] %vm2185, %v2139
        %2191 = vst.msk [vmem:[%s368 + $0x28] sm:$0xff] %vm2185, %v2142
        %2192 = vst.msk [vmem:[%s368 + $0x30] sm:$0xff] %vm2185, %v2147
        %2193 = vst.msk [vmem:[%s368 + $0x38] sm:$0xff] %vm2185, %v2150
        %2194 = vst.msk [vmem:[%s368 + $0x40] sm:$0xff] %vm2185, %v2155
        %2195 = vst.msk [vmem:[%s368 + $0x48] sm:$0xff] %vm2185, %v2158
        %2196 = vst.msk [vmem:[%s368 + $0x50] sm:$0xff] %vm2185, %v2163
        %2197 = vst.msk [vmem:[%s368 + $0x58] sm:$0xff] %vm2185, %v2166
        %2198 = vst.msk [vmem:[%s368 + $0x60] sm:$0xff] %vm2185, %v2171
        %2199 = vst.msk [vmem:[%s368 + $0x68] sm:$0xff] %vm2185, %v2174
        %2200 = vst.msk [vmem:[%s368 + $0x70] sm:$0xff] %vm2185, %v2179
        %2201 = vst.msk [vmem:[%s368 + $0x78] sm:$0xff] %vm2185, %v2182
        %s2202 = sand.u32 %s174, 1
        %s2203 = scalar_lea.sflag [#allocation4], %s2202
        %s2204 = sand.u32 %s174, 1
        %s2205 = smul.addr %s2204, 128
        %s2206 = scalar_lea.vmem [#allocation13], %s2205
        // Predicated region
        $region69: #{pointpillars_forward.5} parent=43 // pred_check
          %p2207 = pneg %p184
        $region70: #{pointpillars_forward.5} parent=43 // pred_check_branch
          %2209 = sbr.rel (%p2207) target = $region72
        $region71: #{pointpillars_forward.5} parent=43 // pred_region
          %s2210 = smul.u32 16, %s28
          %s2212 = ssub.s32 2048, 2048
          %2213 = vsyncadd %s2203, %s2212
          %s2214 = smul.addr %s2210, 128
          %s2215 = scalar_lea.hbm %s6, %s2214
          %s2216 = sshll.u32 %s2206, 4
          %s2217 = int_to_ptr.vmem [resolvable:$true] %s2216
          %2222 = dma.vmem_to_hbm [thread:$0]  %s2217, 2048, %s2215, %s2203, 128, 128, 8
        $region72: #{pointpillars_forward.5} parent=43 // pred_fallthru
          _
      $region44: #{pointpillars_forward.5} parent=5 // pred_fallthru
        _
      %p2223 = scmp.le.s32.totalorder 2, %s23
      // Predicated region
      $region73: #{pointpillars_forward.5} parent=5 // pred_check
        %p2224 = pneg %p2223
      $region74: #{pointpillars_forward.5} parent=5 // pred_check_branch
        %2226 = sbr.rel (%p2224) target = $region76
      $region75: #{pointpillars_forward.5} parent=5 // pred_region
        %s2227 = ssub.s32 %s23, 2
        // Predicated region
        $region77: #{pointpillars_forward.5} parent=75 // pred_check
          %p2228 = pneg %p190
        $region78: #{pointpillars_forward.5} parent=75 // pred_check_branch
          %2230 = sbr.rel (%p2228) target = $region80
        $region79: #{pointpillars_forward.5} parent=75 // pred_region
          %s2231 = sand.u32 %s175, 1
          %s2232 = scalar_lea.sflag [#allocation4], %s2231
          %s2233 = sand.u32 %s175, 1
          %s2234 = smul.addr %s2233, 128
          %s2235 = scalar_lea.vmem [#allocation13], %s2234
          %2236 = dma.done %s2232, 2048
        $region80: #{pointpillars_forward.5} parent=75 // pred_fallthru
          _
      $region76: #{pointpillars_forward.5} parent=5 // pred_fallthru
        _
    $region6: #{pointpillars_forward.5} parent=1 // loop_footer
      %s27 = sadd.s32 1, %s23
    $region7: #{pointpillars_forward.5} parent=1 // loop_footer_branch
      %22 = sbr.rel target = $region3
    $region8: #{pointpillars_forward.5} parent=1 // loop_exit
      _
    %2237 = vsyncpa [#allocation3], 1
    %s2238 = scalar_lea.sflag [#allocation3], 1
    %2239 = vsyncpa %s2238, 1
    %2240 = vsyncpa [#allocation6], 1
    %s2241 = scalar_lea.sflag [#allocation6], 1
    %2242 = vsyncpa %s2241, 1
    %2243 = vsyncpa [#allocation9], 1
    %2244 = vsyncpa [#allocation12], 1
    %2245 = vsyncpa [#allocation4], 1
    %s2246 = scalar_lea.sflag [#allocation4], 1
    %2247 = vsyncpa %s2246, 1

</llo_original>
